<compile_context>
chip_gen: v6e
topology: v6e:2x2x1
jax: 0.10.0
libtpu: 0.0.40
codegen_flags: <defaults>
</compile_context>

<pallas_src>
import jax
import jax.numpy as jnp
from jax.experimental import pallas as pl
from jax.experimental.pallas import tpu as pltpu


# ---------------------------------------------------------------------------
# Single fused kernel: conv -> maxpool -> batchnorm -> linear, all in VMEM
# ---------------------------------------------------------------------------
def fused_testnet_kernel(xwin_ref, wlane_ref, gamma_ref, beta_ref,
                         mred_ref, mexp_ref, wp_ref, lb_ref, o_ref):
    """Whole TestNet forward, entirely in VMEM, lane-dense layouts.

    xwin_ref:  (16, B, 14, 224)  window rh*4+rw: xpad[b, 2i+rh, 2j+rw] replicated over
                                 the 16 channels on lanes (lane = j*16 + c)
    wlane_ref: (9, 1, 1, 224)    conv tap weights, w[c, tap] replicated over the 14 j's
    gamma_ref: (1, 16)           BN gamma
    beta_ref:  (1, 16)           BN beta
    mred_ref:  (224, 16)         per-(j,c) lane -> per-channel reduction matrix
    mexp_ref:  (16, 224)         per-channel -> per-(j,c) lane broadcast matrix
    wp_ref:    (14, 224, 10)     linear weight permuted to [h, w*16+c, out]
    lb_ref:    (1, 10)           linear bias
    o_ref:     (B, 10)           output logits
    """
    B = xwin_ref.shape[1]

    # ---- Conv2d(1,16,3,s=1,p=1) fused with MaxPool2d(2,2): shifted VPU FMAs -------
    # Pooled output (i,j), pool parity (a,b), conv tap (dy,dx) reads window
    # rh=a+dy, rw=b+dx at offset 0 -- no in-kernel shifted slices at all.
    pooled = None
    for a in (0, 1):                       # row parity inside the 2x2 pooling window
        for b in (0, 1):                   # col parity inside the 2x2 pooling window
            acc = None
            for dy in range(3):
                for dx in range(3):
                    idx = (a + dy) * 4 + (b + dx)
                    term = xwin_ref[idx] * wlane_ref[dy * 3 + dx]   # (B,14,224)
                    acc = term if acc is None else acc + term
            pooled = acc if pooled is None else jnp.maximum(pooled, acc)
    # Conv bias intentionally omitted: it cancels in training-mode BatchNorm.

    # ---- BatchNorm2d(16): training-mode batch statistics over (N, H, W) -----------
    cnt = float(B * 14 * 14)
    s1 = jnp.sum(jnp.sum(pooled, axis=1, keepdims=True),
                 axis=0, keepdims=True)[0]                         # (1,224) per-(j,c) sum
    s2 = jnp.sum(jnp.sum(pooled * pooled, axis=1, keepdims=True),
                 axis=0, keepdims=True)[0]                         # (1,224) per-(j,c) sumsq
    ch_sum = jnp.dot(s1, mred_ref[...], preferred_element_type=jnp.float32)   # (1,16)
    ch_sq = jnp.dot(s2, mred_ref[...], preferred_element_type=jnp.float32)    # (1,16)
    mean_c = ch_sum * (1.0 / cnt)
    var_c = ch_sq * (1.0 / cnt) - mean_c * mean_c
    scale_c = gamma_ref[...] * jax.lax.rsqrt(var_c + 1e-5)                    # (1,16)
    shift_c = beta_ref[...] - mean_c * scale_c                                # (1,16)
    scale_l = jnp.dot(scale_c, mexp_ref[...], preferred_element_type=jnp.float32)  # (1,224)
    shift_l = jnp.dot(shift_c, mexp_ref[...], preferred_element_type=jnp.float32)  # (1,224)
    y = pooled * scale_l[None] + shift_l[None]                     # (B,14,224)

    # ---- MyLinear on the MXU: out[b,n] = sum_i y[b,i,:] @ wp[i,:,n] + lb[n] --------
    out = jnp.zeros((B, 10), jnp.float32) + lb_ref[...]
    for i in range(14):
        out = out + jnp.dot(y[:, i, :], wp_ref[i],
                            preferred_element_type=jnp.float32)    # (B,10)
    o_ref[...] = out


# ---------------------------------------------------------------------------
# Wrapper: small host-side layout prep (input windows + weight permutations)
# ---------------------------------------------------------------------------
@jax.jit
def testnet_forward(x, conv_w, conv_b, bn_gamma, bn_beta, lin_w, lin_b):
    del conv_b  # cancels exactly in training-mode BatchNorm (shift-invariant stats)
    B = x.shape[0]

    # 16 pooling windows of the zero-padded image: win[rh*4+rw, b, i, j] = xpad[b, 2i+rh, 2j+rw]
    xpad = jnp.pad(x[:, 0], ((0, 0), (1, 1), (1, 1)))                          # (B,30,30)
    wins = [xpad[:, rh:rh + 27:2, rw:rw + 27:2]
            for rh in range(4) for rw in range(4)]                             # (B,14,14) each
    xwin = jnp.stack(wins, axis=0)                                             # (16,B,14,14)
    xwin = jnp.broadcast_to(xwin[..., None],
                            (16, B, 14, 14, 16)).reshape(16, B, 14, 224)       # lane = j*16+c

    # Conv weights: tap-major, replicated over the 14 j-positions on lanes.
    w9c = conv_w.reshape(16, 9).T                                              # (9,16) [tap,c]
    wlane = jnp.broadcast_to(w9c[:, None, :], (9, 14, 16)).reshape(9, 1, 1, 224)

    gamma = bn_gamma.reshape(1, 16)
    beta = bn_beta.reshape(1, 16)

    # Constant reduce / broadcast matrices for per-channel BN stats in the 224-lane layout.
    eye = jnp.eye(16, dtype=jnp.float32)
    mred = jnp.tile(eye, (14, 1))                                              # (224,16)
    mexp = jnp.tile(eye, (1, 14))                                              # (16,224)

    # Linear weight permuted from PyTorch flatten order (c*196 + h*14 + w) to [h, w*16+c, n].
    wp = jnp.transpose(lin_w.reshape(10, 16, 14, 14), (2, 3, 1, 0)).reshape(14, 224, 10)
    lb = lin_b.reshape(1, 10)

    vmem = pl.BlockSpec(memory_space=pltpu.MemorySpace.VMEM)
    out = pl.pallas_call(
        fused_testnet_kernel,
        out_shape=jax.ShapeDtypeStruct((B, 10), jnp.float32),
        in_specs=[vmem] * 8,
        out_specs=vmem,
    )(xwin, wlane, gamma, beta, mred, mexp, wp, lb)
    return out


# ---------------------------------------------------------------------------
# Pure-JAX reference for validation
# ---------------------------------------------------------------------------
def reference(x, conv_w, conv_b, bn_gamma, bn_beta, lin_w, lin_b):
    y = jax.lax.conv_general_dilated(
        x, conv_w, window_strides=(1, 1), padding=((1, 1), (1, 1)),
        dimension_numbers=("NCHW", "OIHW", "NCHW")) + conv_b.reshape(1, -1, 1, 1)
    y = jax.lax.reduce_window(y, -jnp.inf, jax.lax.max,
                              (1, 1, 2, 2), (1, 1, 2, 2), "VALID")
    mean = y.mean(axis=(0, 2, 3), keepdims=True)
    var = jnp.square(y - mean).mean(axis=(0, 2, 3), keepdims=True)
    y = (y - mean) * jax.lax.rsqrt(var + 1e-5) * bn_gamma.reshape(1, -1, 1, 1) \
        + bn_beta.reshape(1, -1, 1, 1)
    y = y.reshape(y.shape[0], -1)
    return y @ lin_w.T + lin_b


if __name__ == "__main__":
    key = jax.random.PRNGKey(0)
    k_x, k_cw, k_cb, k_lw, k_lb = jax.random.split(key, 5)

    B = 2
    x = jax.random.normal(k_x, (B, 1, 28, 28), dtype=jnp.float32)

    # Deterministic synthetic parameters (shapes match the PyTorch module).
    conv_w = jax.random.normal(k_cw, (16, 1, 3, 3), dtype=jnp.float32) * 0.1
    conv_b = jax.random.normal(k_cb, (16,), dtype=jnp.float32) * 0.1
    bn_gamma = jnp.ones((16,), dtype=jnp.float32)     # BatchNorm2d default init
    bn_beta = jnp.zeros((16,), dtype=jnp.float32)
    lin_w = jax.random.normal(k_lw, (10, 16 * 14 * 14), dtype=jnp.float32) * 0.02
    lin_b = jax.random.normal(k_lb, (10,), dtype=jnp.float32)

    out = testnet_forward(x, conv_w, conv_b, bn_gamma, bn_beta, lin_w, lin_b)
    out = jax.block_until_ready(out)
    assert out.shape == (B, 10) and out.dtype == jnp.float32

    ref = reference(x, conv_w, conv_b, bn_gamma, bn_beta, lin_w, lin_b)
    assert jnp.allclose(out, ref, rtol=2e-3, atol=2e-3), \
        f"max abs diff {jnp.max(jnp.abs(out - ref))}"

    print("KERNEL_OK")
</pallas_src>

<mosaic_0001>
module attributes {stable_mosaic.version = 11 : i64} {
  func.func @fused_testnet_kernel(%arg0: memref<16x2x14x224xf32, #tpu.memory_space<vmem>>, %arg1: memref<9x1x1x224xf32, #tpu.memory_space<vmem>>, %arg2: memref<1x16xf32, #tpu.memory_space<vmem>>, %arg3: memref<1x16xf32, #tpu.memory_space<vmem>>, %arg4: memref<224x16xf32, #tpu.memory_space<vmem>>, %arg5: memref<16x224xf32, #tpu.memory_space<vmem>>, %arg6: memref<14x224x10xf32, #tpu.memory_space<vmem>>, %arg7: memref<1x10xf32, #tpu.memory_space<vmem>>, %arg8: memref<2x10xf32, #tpu.memory_space<vmem>>) attributes {dimension_semantics = [], scalar_prefetch = 0 : i64, scratch_operands = 0 : i64, tpu.core_type = #tpu.core_type<tc>} {
    %c0 = arith.constant 0 : index
    %c0_0 = arith.constant 0 : index
    %c0_1 = arith.constant 0 : index
    %c0_2 = arith.constant 0 : index
    %0 = vector.load %arg0[%c0, %c0_0, %c0_1, %c0_2] : memref<16x2x14x224xf32, #tpu.memory_space<vmem>>, vector<1x2x14x224xf32>
    %1 = vector.shape_cast %0 : vector<1x2x14x224xf32> to vector<2x14x224xf32>
    %c0_3 = arith.constant 0 : index
    %c0_4 = arith.constant 0 : index
    %c0_5 = arith.constant 0 : index
    %c0_6 = arith.constant 0 : index
    %2 = vector.load %arg1[%c0_3, %c0_4, %c0_5, %c0_6] : memref<9x1x1x224xf32, #tpu.memory_space<vmem>>, vector<1x1x1x224xf32>
    %3 = vector.shape_cast %2 : vector<1x1x1x224xf32> to vector<1x1x224xf32>
    %4 = vector.broadcast %3 : vector<1x1x224xf32> to vector<2x14x224xf32>
    %5 = arith.mulf %1, %4 : vector<2x14x224xf32>
    %c1 = arith.constant 1 : index
    %c0_7 = arith.constant 0 : index
    %c0_8 = arith.constant 0 : index
    %c0_9 = arith.constant 0 : index
    %6 = vector.load %arg0[%c1, %c0_7, %c0_8, %c0_9] : memref<16x2x14x224xf32, #tpu.memory_space<vmem>>, vector<1x2x14x224xf32>
    %7 = vector.shape_cast %6 : vector<1x2x14x224xf32> to vector<2x14x224xf32>
    %c1_10 = arith.constant 1 : index
    %c0_11 = arith.constant 0 : index
    %c0_12 = arith.constant 0 : index
    %c0_13 = arith.constant 0 : index
    %8 = vector.load %arg1[%c1_10, %c0_11, %c0_12, %c0_13] : memref<9x1x1x224xf32, #tpu.memory_space<vmem>>, vector<1x1x1x224xf32>
    %9 = vector.shape_cast %8 : vector<1x1x1x224xf32> to vector<1x1x224xf32>
    %10 = vector.broadcast %9 : vector<1x1x224xf32> to vector<2x14x224xf32>
    %11 = arith.mulf %7, %10 : vector<2x14x224xf32>
    %12 = arith.addf %5, %11 : vector<2x14x224xf32>
    %c2 = arith.constant 2 : index
    %c0_14 = arith.constant 0 : index
    %c0_15 = arith.constant 0 : index
    %c0_16 = arith.constant 0 : index
    %13 = vector.load %arg0[%c2, %c0_14, %c0_15, %c0_16] : memref<16x2x14x224xf32, #tpu.memory_space<vmem>>, vector<1x2x14x224xf32>
    %14 = vector.shape_cast %13 : vector<1x2x14x224xf32> to vector<2x14x224xf32>
    %c2_17 = arith.constant 2 : index
    %c0_18 = arith.constant 0 : index
    %c0_19 = arith.constant 0 : index
    %c0_20 = arith.constant 0 : index
    %15 = vector.load %arg1[%c2_17, %c0_18, %c0_19, %c0_20] : memref<9x1x1x224xf32, #tpu.memory_space<vmem>>, vector<1x1x1x224xf32>
    %16 = vector.shape_cast %15 : vector<1x1x1x224xf32> to vector<1x1x224xf32>
    %17 = vector.broadcast %16 : vector<1x1x224xf32> to vector<2x14x224xf32>
    %18 = arith.mulf %14, %17 : vector<2x14x224xf32>
    %19 = arith.addf %12, %18 : vector<2x14x224xf32>
    %c4 = arith.constant 4 : index
    %c0_21 = arith.constant 0 : index
    %c0_22 = arith.constant 0 : index
    %c0_23 = arith.constant 0 : index
    %20 = vector.load %arg0[%c4, %c0_21, %c0_22, %c0_23] : memref<16x2x14x224xf32, #tpu.memory_space<vmem>>, vector<1x2x14x224xf32>
    %21 = vector.shape_cast %20 : vector<1x2x14x224xf32> to vector<2x14x224xf32>
    %c3 = arith.constant 3 : index
    %c0_24 = arith.constant 0 : index
    %c0_25 = arith.constant 0 : index
    %c0_26 = arith.constant 0 : index
    %22 = vector.load %arg1[%c3, %c0_24, %c0_25, %c0_26] : memref<9x1x1x224xf32, #tpu.memory_space<vmem>>, vector<1x1x1x224xf32>
    %23 = vector.shape_cast %22 : vector<1x1x1x224xf32> to vector<1x1x224xf32>
    %24 = vector.broadcast %23 : vector<1x1x224xf32> to vector<2x14x224xf32>
    %25 = arith.mulf %21, %24 : vector<2x14x224xf32>
    %26 = arith.addf %19, %25 : vector<2x14x224xf32>
    %c5 = arith.constant 5 : index
    %c0_27 = arith.constant 0 : index
    %c0_28 = arith.constant 0 : index
    %c0_29 = arith.constant 0 : index
    %27 = vector.load %arg0[%c5, %c0_27, %c0_28, %c0_29] : memref<16x2x14x224xf32, #tpu.memory_space<vmem>>, vector<1x2x14x224xf32>
    %28 = vector.shape_cast %27 : vector<1x2x14x224xf32> to vector<2x14x224xf32>
    %c4_30 = arith.constant 4 : index
    %c0_31 = arith.constant 0 : index
    %c0_32 = arith.constant 0 : index
    %c0_33 = arith.constant 0 : index
    %29 = vector.load %arg1[%c4_30, %c0_31, %c0_32, %c0_33] : memref<9x1x1x224xf32, #tpu.memory_space<vmem>>, vector<1x1x1x224xf32>
    %30 = vector.shape_cast %29 : vector<1x1x1x224xf32> to vector<1x1x224xf32>
    %31 = vector.broadcast %30 : vector<1x1x224xf32> to vector<2x14x224xf32>
    %32 = arith.mulf %28, %31 : vector<2x14x224xf32>
    %33 = arith.addf %26, %32 : vector<2x14x224xf32>
    %c6 = arith.constant 6 : index
    %c0_34 = arith.constant 0 : index
    %c0_35 = arith.constant 0 : index
    %c0_36 = arith.constant 0 : index
    %34 = vector.load %arg0[%c6, %c0_34, %c0_35, %c0_36] : memref<16x2x14x224xf32, #tpu.memory_space<vmem>>, vector<1x2x14x224xf32>
    %35 = vector.shape_cast %34 : vector<1x2x14x224xf32> to vector<2x14x224xf32>
    %c5_37 = arith.constant 5 : index
    %c0_38 = arith.constant 0 : index
    %c0_39 = arith.constant 0 : index
    %c0_40 = arith.constant 0 : index
    %36 = vector.load %arg1[%c5_37, %c0_38, %c0_39, %c0_40] : memref<9x1x1x224xf32, #tpu.memory_space<vmem>>, vector<1x1x1x224xf32>
    %37 = vector.shape_cast %36 : vector<1x1x1x224xf32> to vector<1x1x224xf32>
    %38 = vector.broadcast %37 : vector<1x1x224xf32> to vector<2x14x224xf32>
    %39 = arith.mulf %35, %38 : vector<2x14x224xf32>
    %40 = arith.addf %33, %39 : vector<2x14x224xf32>
    %c8 = arith.constant 8 : index
    %c0_41 = arith.constant 0 : index
    %c0_42 = arith.constant 0 : index
    %c0_43 = arith.constant 0 : index
    %41 = vector.load %arg0[%c8, %c0_41, %c0_42, %c0_43] : memref<16x2x14x224xf32, #tpu.memory_space<vmem>>, vector<1x2x14x224xf32>
    %42 = vector.shape_cast %41 : vector<1x2x14x224xf32> to vector<2x14x224xf32>
    %c6_44 = arith.constant 6 : index
    %c0_45 = arith.constant 0 : index
    %c0_46 = arith.constant 0 : index
    %c0_47 = arith.constant 0 : index
    %43 = vector.load %arg1[%c6_44, %c0_45, %c0_46, %c0_47] : memref<9x1x1x224xf32, #tpu.memory_space<vmem>>, vector<1x1x1x224xf32>
    %44 = vector.shape_cast %43 : vector<1x1x1x224xf32> to vector<1x1x224xf32>
    %45 = vector.broadcast %44 : vector<1x1x224xf32> to vector<2x14x224xf32>
    %46 = arith.mulf %42, %45 : vector<2x14x224xf32>
    %47 = arith.addf %40, %46 : vector<2x14x224xf32>
    %c9 = arith.constant 9 : index
    %c0_48 = arith.constant 0 : index
    %c0_49 = arith.constant 0 : index
    %c0_50 = arith.constant 0 : index
    %48 = vector.load %arg0[%c9, %c0_48, %c0_49, %c0_50] : memref<16x2x14x224xf32, #tpu.memory_space<vmem>>, vector<1x2x14x224xf32>
    %49 = vector.shape_cast %48 : vector<1x2x14x224xf32> to vector<2x14x224xf32>
    %c7 = arith.constant 7 : index
    %c0_51 = arith.constant 0 : index
    %c0_52 = arith.constant 0 : index
    %c0_53 = arith.constant 0 : index
    %50 = vector.load %arg1[%c7, %c0_51, %c0_52, %c0_53] : memref<9x1x1x224xf32, #tpu.memory_space<vmem>>, vector<1x1x1x224xf32>
    %51 = vector.shape_cast %50 : vector<1x1x1x224xf32> to vector<1x1x224xf32>
    %52 = vector.broadcast %51 : vector<1x1x224xf32> to vector<2x14x224xf32>
    %53 = arith.mulf %49, %52 : vector<2x14x224xf32>
    %54 = arith.addf %47, %53 : vector<2x14x224xf32>
    %c10 = arith.constant 10 : index
    %c0_54 = arith.constant 0 : index
    %c0_55 = arith.constant 0 : index
    %c0_56 = arith.constant 0 : index
    %55 = vector.load %arg0[%c10, %c0_54, %c0_55, %c0_56] : memref<16x2x14x224xf32, #tpu.memory_space<vmem>>, vector<1x2x14x224xf32>
    %56 = vector.shape_cast %55 : vector<1x2x14x224xf32> to vector<2x14x224xf32>
    %c8_57 = arith.constant 8 : index
    %c0_58 = arith.constant 0 : index
    %c0_59 = arith.constant 0 : index
    %c0_60 = arith.constant 0 : index
    %57 = vector.load %arg1[%c8_57, %c0_58, %c0_59, %c0_60] : memref<9x1x1x224xf32, #tpu.memory_space<vmem>>, vector<1x1x1x224xf32>
    %58 = vector.shape_cast %57 : vector<1x1x1x224xf32> to vector<1x1x224xf32>
    %59 = vector.broadcast %58 : vector<1x1x224xf32> to vector<2x14x224xf32>
    %60 = arith.mulf %56, %59 : vector<2x14x224xf32>
    %61 = arith.addf %54, %60 : vector<2x14x224xf32>
    %c1_61 = arith.constant 1 : index
    %c0_62 = arith.constant 0 : index
    %c0_63 = arith.constant 0 : index
    %c0_64 = arith.constant 0 : index
    %62 = vector.load %arg0[%c1_61, %c0_62, %c0_63, %c0_64] : memref<16x2x14x224xf32, #tpu.memory_space<vmem>>, vector<1x2x14x224xf32>
    %63 = vector.shape_cast %62 : vector<1x2x14x224xf32> to vector<2x14x224xf32>
    %c0_65 = arith.constant 0 : index
    %c0_66 = arith.constant 0 : index
    %c0_67 = arith.constant 0 : index
    %c0_68 = arith.constant 0 : index
    %64 = vector.load %arg1[%c0_65, %c0_66, %c0_67, %c0_68] : memref<9x1x1x224xf32, #tpu.memory_space<vmem>>, vector<1x1x1x224xf32>
    %65 = vector.shape_cast %64 : vector<1x1x1x224xf32> to vector<1x1x224xf32>
    %66 = vector.broadcast %65 : vector<1x1x224xf32> to vector<2x14x224xf32>
    %67 = arith.mulf %63, %66 : vector<2x14x224xf32>
    %c2_69 = arith.constant 2 : index
    %c0_70 = arith.constant 0 : index
    %c0_71 = arith.constant 0 : index
    %c0_72 = arith.constant 0 : index
    %68 = vector.load %arg0[%c2_69, %c0_70, %c0_71, %c0_72] : memref<16x2x14x224xf32, #tpu.memory_space<vmem>>, vector<1x2x14x224xf32>
    %69 = vector.shape_cast %68 : vector<1x2x14x224xf32> to vector<2x14x224xf32>
    %c1_73 = arith.constant 1 : index
    %c0_74 = arith.constant 0 : index
    %c0_75 = arith.constant 0 : index
    %c0_76 = arith.constant 0 : index
    %70 = vector.load %arg1[%c1_73, %c0_74, %c0_75, %c0_76] : memref<9x1x1x224xf32, #tpu.memory_space<vmem>>, vector<1x1x1x224xf32>
    %71 = vector.shape_cast %70 : vector<1x1x1x224xf32> to vector<1x1x224xf32>
    %72 = vector.broadcast %71 : vector<1x1x224xf32> to vector<2x14x224xf32>
    %73 = arith.mulf %69, %72 : vector<2x14x224xf32>
    %74 = arith.addf %67, %73 : vector<2x14x224xf32>
    %c3_77 = arith.constant 3 : index
    %c0_78 = arith.constant 0 : index
    %c0_79 = arith.constant 0 : index
    %c0_80 = arith.constant 0 : index
    %75 = vector.load %arg0[%c3_77, %c0_78, %c0_79, %c0_80] : memref<16x2x14x224xf32, #tpu.memory_space<vmem>>, vector<1x2x14x224xf32>
    %76 = vector.shape_cast %75 : vector<1x2x14x224xf32> to vector<2x14x224xf32>
    %c2_81 = arith.constant 2 : index
    %c0_82 = arith.constant 0 : index
    %c0_83 = arith.constant 0 : index
    %c0_84 = arith.constant 0 : index
    %77 = vector.load %arg1[%c2_81, %c0_82, %c0_83, %c0_84] : memref<9x1x1x224xf32, #tpu.memory_space<vmem>>, vector<1x1x1x224xf32>
    %78 = vector.shape_cast %77 : vector<1x1x1x224xf32> to vector<1x1x224xf32>
    %79 = vector.broadcast %78 : vector<1x1x224xf32> to vector<2x14x224xf32>
    %80 = arith.mulf %76, %79 : vector<2x14x224xf32>
    %81 = arith.addf %74, %80 : vector<2x14x224xf32>
    %c5_85 = arith.constant 5 : index
    %c0_86 = arith.constant 0 : index
    %c0_87 = arith.constant 0 : index
    %c0_88 = arith.constant 0 : index
    %82 = vector.load %arg0[%c5_85, %c0_86, %c0_87, %c0_88] : memref<16x2x14x224xf32, #tpu.memory_space<vmem>>, vector<1x2x14x224xf32>
    %83 = vector.shape_cast %82 : vector<1x2x14x224xf32> to vector<2x14x224xf32>
    %c3_89 = arith.constant 3 : index
    %c0_90 = arith.constant 0 : index
    %c0_91 = arith.constant 0 : index
    %c0_92 = arith.constant 0 : index
    %84 = vector.load %arg1[%c3_89, %c0_90, %c0_91, %c0_92] : memref<9x1x1x224xf32, #tpu.memory_space<vmem>>, vector<1x1x1x224xf32>
    %85 = vector.shape_cast %84 : vector<1x1x1x224xf32> to vector<1x1x224xf32>
    %86 = vector.broadcast %85 : vector<1x1x224xf32> to vector<2x14x224xf32>
    %87 = arith.mulf %83, %86 : vector<2x14x224xf32>
    %88 = arith.addf %81, %87 : vector<2x14x224xf32>
    %c6_93 = arith.constant 6 : index
    %c0_94 = arith.constant 0 : index
    %c0_95 = arith.constant 0 : index
    %c0_96 = arith.constant 0 : index
    %89 = vector.load %arg0[%c6_93, %c0_94, %c0_95, %c0_96] : memref<16x2x14x224xf32, #tpu.memory_space<vmem>>, vector<1x2x14x224xf32>
    %90 = vector.shape_cast %89 : vector<1x2x14x224xf32> to vector<2x14x224xf32>
    %c4_97 = arith.constant 4 : index
    %c0_98 = arith.constant 0 : index
    %c0_99 = arith.constant 0 : index
    %c0_100 = arith.constant 0 : index
    %91 = vector.load %arg1[%c4_97, %c0_98, %c0_99, %c0_100] : memref<9x1x1x224xf32, #tpu.memory_space<vmem>>, vector<1x1x1x224xf32>
    %92 = vector.shape_cast %91 : vector<1x1x1x224xf32> to vector<1x1x224xf32>
    %93 = vector.broadcast %92 : vector<1x1x224xf32> to vector<2x14x224xf32>
    %94 = arith.mulf %90, %93 : vector<2x14x224xf32>
    %95 = arith.addf %88, %94 : vector<2x14x224xf32>
    %c7_101 = arith.constant 7 : index
    %c0_102 = arith.constant 0 : index
    %c0_103 = arith.constant 0 : index
    %c0_104 = arith.constant 0 : index
    %96 = vector.load %arg0[%c7_101, %c0_102, %c0_103, %c0_104] : memref<16x2x14x224xf32, #tpu.memory_space<vmem>>, vector<1x2x14x224xf32>
    %97 = vector.shape_cast %96 : vector<1x2x14x224xf32> to vector<2x14x224xf32>
    %c5_105 = arith.constant 5 : index
    %c0_106 = arith.constant 0 : index
    %c0_107 = arith.constant 0 : index
    %c0_108 = arith.constant 0 : index
    %98 = vector.load %arg1[%c5_105, %c0_106, %c0_107, %c0_108] : memref<9x1x1x224xf32, #tpu.memory_space<vmem>>, vector<1x1x1x224xf32>
    %99 = vector.shape_cast %98 : vector<1x1x1x224xf32> to vector<1x1x224xf32>
    %100 = vector.broadcast %99 : vector<1x1x224xf32> to vector<2x14x224xf32>
    %101 = arith.mulf %97, %100 : vector<2x14x224xf32>
    %102 = arith.addf %95, %101 : vector<2x14x224xf32>
    %c9_109 = arith.constant 9 : index
    %c0_110 = arith.constant 0 : index
    %c0_111 = arith.constant 0 : index
    %c0_112 = arith.constant 0 : index
    %103 = vector.load %arg0[%c9_109, %c0_110, %c0_111, %c0_112] : memref<16x2x14x224xf32, #tpu.memory_space<vmem>>, vector<1x2x14x224xf32>
    %104 = vector.shape_cast %103 : vector<1x2x14x224xf32> to vector<2x14x224xf32>
    %c6_113 = arith.constant 6 : index
    %c0_114 = arith.constant 0 : index
    %c0_115 = arith.constant 0 : index
    %c0_116 = arith.constant 0 : index
    %105 = vector.load %arg1[%c6_113, %c0_114, %c0_115, %c0_116] : memref<9x1x1x224xf32, #tpu.memory_space<vmem>>, vector<1x1x1x224xf32>
    %106 = vector.shape_cast %105 : vector<1x1x1x224xf32> to vector<1x1x224xf32>
    %107 = vector.broadcast %106 : vector<1x1x224xf32> to vector<2x14x224xf32>
    %108 = arith.mulf %104, %107 : vector<2x14x224xf32>
    %109 = arith.addf %102, %108 : vector<2x14x224xf32>
    %c10_117 = arith.constant 10 : index
    %c0_118 = arith.constant 0 : index
    %c0_119 = arith.constant 0 : index
    %c0_120 = arith.constant 0 : index
    %110 = vector.load %arg0[%c10_117, %c0_118, %c0_119, %c0_120] : memref<16x2x14x224xf32, #tpu.memory_space<vmem>>, vector<1x2x14x224xf32>
    %111 = vector.shape_cast %110 : vector<1x2x14x224xf32> to vector<2x14x224xf32>
    %c7_121 = arith.constant 7 : index
    %c0_122 = arith.constant 0 : index
    %c0_123 = arith.constant 0 : index
    %c0_124 = arith.constant 0 : index
    %112 = vector.load %arg1[%c7_121, %c0_122, %c0_123, %c0_124] : memref<9x1x1x224xf32, #tpu.memory_space<vmem>>, vector<1x1x1x224xf32>
    %113 = vector.shape_cast %112 : vector<1x1x1x224xf32> to vector<1x1x224xf32>
    %114 = vector.broadcast %113 : vector<1x1x224xf32> to vector<2x14x224xf32>
    %115 = arith.mulf %111, %114 : vector<2x14x224xf32>
    %116 = arith.addf %109, %115 : vector<2x14x224xf32>
    %c11 = arith.constant 11 : index
    %c0_125 = arith.constant 0 : index
    %c0_126 = arith.constant 0 : index
    %c0_127 = arith.constant 0 : index
    %117 = vector.load %arg0[%c11, %c0_125, %c0_126, %c0_127] : memref<16x2x14x224xf32, #tpu.memory_space<vmem>>, vector<1x2x14x224xf32>
    %118 = vector.shape_cast %117 : vector<1x2x14x224xf32> to vector<2x14x224xf32>
    %c8_128 = arith.constant 8 : index
    %c0_129 = arith.constant 0 : index
    %c0_130 = arith.constant 0 : index
    %c0_131 = arith.constant 0 : index
    %119 = vector.load %arg1[%c8_128, %c0_129, %c0_130, %c0_131] : memref<9x1x1x224xf32, #tpu.memory_space<vmem>>, vector<1x1x1x224xf32>
    %120 = vector.shape_cast %119 : vector<1x1x1x224xf32> to vector<1x1x224xf32>
    %121 = vector.broadcast %120 : vector<1x1x224xf32> to vector<2x14x224xf32>
    %122 = arith.mulf %118, %121 : vector<2x14x224xf32>
    %123 = arith.addf %116, %122 : vector<2x14x224xf32>
    %124 = arith.maximumf %61, %123 : vector<2x14x224xf32>
    %c4_132 = arith.constant 4 : index
    %c0_133 = arith.constant 0 : index
    %c0_134 = arith.constant 0 : index
    %c0_135 = arith.constant 0 : index
    %125 = vector.load %arg0[%c4_132, %c0_133, %c0_134, %c0_135] : memref<16x2x14x224xf32, #tpu.memory_space<vmem>>, vector<1x2x14x224xf32>
    %126 = vector.shape_cast %125 : vector<1x2x14x224xf32> to vector<2x14x224xf32>
    %c0_136 = arith.constant 0 : index
    %c0_137 = arith.constant 0 : index
    %c0_138 = arith.constant 0 : index
    %c0_139 = arith.constant 0 : index
    %127 = vector.load %arg1[%c0_136, %c0_137, %c0_138, %c0_139] : memref<9x1x1x224xf32, #tpu.memory_space<vmem>>, vector<1x1x1x224xf32>
    %128 = vector.shape_cast %127 : vector<1x1x1x224xf32> to vector<1x1x224xf32>
    %129 = vector.broadcast %128 : vector<1x1x224xf32> to vector<2x14x224xf32>
    %130 = arith.mulf %126, %129 : vector<2x14x224xf32>
    %c5_140 = arith.constant 5 : index
    %c0_141 = arith.constant 0 : index
    %c0_142 = arith.constant 0 : index
    %c0_143 = arith.constant 0 : index
    %131 = vector.load %arg0[%c5_140, %c0_141, %c0_142, %c0_143] : memref<16x2x14x224xf32, #tpu.memory_space<vmem>>, vector<1x2x14x224xf32>
    %132 = vector.shape_cast %131 : vector<1x2x14x224xf32> to vector<2x14x224xf32>
    %c1_144 = arith.constant 1 : index
    %c0_145 = arith.constant 0 : index
    %c0_146 = arith.constant 0 : index
    %c0_147 = arith.constant 0 : index
    %133 = vector.load %arg1[%c1_144, %c0_145, %c0_146, %c0_147] : memref<9x1x1x224xf32, #tpu.memory_space<vmem>>, vector<1x1x1x224xf32>
    %134 = vector.shape_cast %133 : vector<1x1x1x224xf32> to vector<1x1x224xf32>
    %135 = vector.broadcast %134 : vector<1x1x224xf32> to vector<2x14x224xf32>
    %136 = arith.mulf %132, %135 : vector<2x14x224xf32>
    %137 = arith.addf %130, %136 : vector<2x14x224xf32>
    %c6_148 = arith.constant 6 : index
    %c0_149 = arith.constant 0 : index
    %c0_150 = arith.constant 0 : index
    %c0_151 = arith.constant 0 : index
    %138 = vector.load %arg0[%c6_148, %c0_149, %c0_150, %c0_151] : memref<16x2x14x224xf32, #tpu.memory_space<vmem>>, vector<1x2x14x224xf32>
    %139 = vector.shape_cast %138 : vector<1x2x14x224xf32> to vector<2x14x224xf32>
    %c2_152 = arith.constant 2 : index
    %c0_153 = arith.constant 0 : index
    %c0_154 = arith.constant 0 : index
    %c0_155 = arith.constant 0 : index
    %140 = vector.load %arg1[%c2_152, %c0_153, %c0_154, %c0_155] : memref<9x1x1x224xf32, #tpu.memory_space<vmem>>, vector<1x1x1x224xf32>
    %141 = vector.shape_cast %140 : vector<1x1x1x224xf32> to vector<1x1x224xf32>
    %142 = vector.broadcast %141 : vector<1x1x224xf32> to vector<2x14x224xf32>
    %143 = arith.mulf %139, %142 : vector<2x14x224xf32>
    %144 = arith.addf %137, %143 : vector<2x14x224xf32>
    %c8_156 = arith.constant 8 : index
    %c0_157 = arith.constant 0 : index
    %c0_158 = arith.constant 0 : index
    %c0_159 = arith.constant 0 : index
    %145 = vector.load %arg0[%c8_156, %c0_157, %c0_158, %c0_159] : memref<16x2x14x224xf32, #tpu.memory_space<vmem>>, vector<1x2x14x224xf32>
    %146 = vector.shape_cast %145 : vector<1x2x14x224xf32> to vector<2x14x224xf32>
    %c3_160 = arith.constant 3 : index
    %c0_161 = arith.constant 0 : index
    %c0_162 = arith.constant 0 : index
    %c0_163 = arith.constant 0 : index
    %147 = vector.load %arg1[%c3_160, %c0_161, %c0_162, %c0_163] : memref<9x1x1x224xf32, #tpu.memory_space<vmem>>, vector<1x1x1x224xf32>
    %148 = vector.shape_cast %147 : vector<1x1x1x224xf32> to vector<1x1x224xf32>
    %149 = vector.broadcast %148 : vector<1x1x224xf32> to vector<2x14x224xf32>
    %150 = arith.mulf %146, %149 : vector<2x14x224xf32>
    %151 = arith.addf %144, %150 : vector<2x14x224xf32>
    %c9_164 = arith.constant 9 : index
    %c0_165 = arith.constant 0 : index
    %c0_166 = arith.constant 0 : index
    %c0_167 = arith.constant 0 : index
    %152 = vector.load %arg0[%c9_164, %c0_165, %c0_166, %c0_167] : memref<16x2x14x224xf32, #tpu.memory_space<vmem>>, vector<1x2x14x224xf32>
    %153 = vector.shape_cast %152 : vector<1x2x14x224xf32> to vector<2x14x224xf32>
    %c4_168 = arith.constant 4 : index
    %c0_169 = arith.constant 0 : index
    %c0_170 = arith.constant 0 : index
    %c0_171 = arith.constant 0 : index
    %154 = vector.load %arg1[%c4_168, %c0_169, %c0_170, %c0_171] : memref<9x1x1x224xf32, #tpu.memory_space<vmem>>, vector<1x1x1x224xf32>
    %155 = vector.shape_cast %154 : vector<1x1x1x224xf32> to vector<1x1x224xf32>
    %156 = vector.broadcast %155 : vector<1x1x224xf32> to vector<2x14x224xf32>
    %157 = arith.mulf %153, %156 : vector<2x14x224xf32>
    %158 = arith.addf %151, %157 : vector<2x14x224xf32>
    %c10_172 = arith.constant 10 : index
    %c0_173 = arith.constant 0 : index
    %c0_174 = arith.constant 0 : index
    %c0_175 = arith.constant 0 : index
    %159 = vector.load %arg0[%c10_172, %c0_173, %c0_174, %c0_175] : memref<16x2x14x224xf32, #tpu.memory_space<vmem>>, vector<1x2x14x224xf32>
    %160 = vector.shape_cast %159 : vector<1x2x14x224xf32> to vector<2x14x224xf32>
    %c5_176 = arith.constant 5 : index
    %c0_177 = arith.constant 0 : index
    %c0_178 = arith.constant 0 : index
    %c0_179 = arith.constant 0 : index
    %161 = vector.load %arg1[%c5_176, %c0_177, %c0_178, %c0_179] : memref<9x1x1x224xf32, #tpu.memory_space<vmem>>, vector<1x1x1x224xf32>
    %162 = vector.shape_cast %161 : vector<1x1x1x224xf32> to vector<1x1x224xf32>
    %163 = vector.broadcast %162 : vector<1x1x224xf32> to vector<2x14x224xf32>
    %164 = arith.mulf %160, %163 : vector<2x14x224xf32>
    %165 = arith.addf %158, %164 : vector<2x14x224xf32>
    %c12 = arith.constant 12 : index
    %c0_180 = arith.constant 0 : index
    %c0_181 = arith.constant 0 : index
    %c0_182 = arith.constant 0 : index
    %166 = vector.load %arg0[%c12, %c0_180, %c0_181, %c0_182] : memref<16x2x14x224xf32, #tpu.memory_space<vmem>>, vector<1x2x14x224xf32>
    %167 = vector.shape_cast %166 : vector<1x2x14x224xf32> to vector<2x14x224xf32>
    %c6_183 = arith.constant 6 : index
    %c0_184 = arith.constant 0 : index
    %c0_185 = arith.constant 0 : index
    %c0_186 = arith.constant 0 : index
    %168 = vector.load %arg1[%c6_183, %c0_184, %c0_185, %c0_186] : memref<9x1x1x224xf32, #tpu.memory_space<vmem>>, vector<1x1x1x224xf32>
    %169 = vector.shape_cast %168 : vector<1x1x1x224xf32> to vector<1x1x224xf32>
    %170 = vector.broadcast %169 : vector<1x1x224xf32> to vector<2x14x224xf32>
    %171 = arith.mulf %167, %170 : vector<2x14x224xf32>
    %172 = arith.addf %165, %171 : vector<2x14x224xf32>
    %c13 = arith.constant 13 : index
    %c0_187 = arith.constant 0 : index
    %c0_188 = arith.constant 0 : index
    %c0_189 = arith.constant 0 : index
    %173 = vector.load %arg0[%c13, %c0_187, %c0_188, %c0_189] : memref<16x2x14x224xf32, #tpu.memory_space<vmem>>, vector<1x2x14x224xf32>
    %174 = vector.shape_cast %173 : vector<1x2x14x224xf32> to vector<2x14x224xf32>
    %c7_190 = arith.constant 7 : index
    %c0_191 = arith.constant 0 : index
    %c0_192 = arith.constant 0 : index
    %c0_193 = arith.constant 0 : index
    %175 = vector.load %arg1[%c7_190, %c0_191, %c0_192, %c0_193] : memref<9x1x1x224xf32, #tpu.memory_space<vmem>>, vector<1x1x1x224xf32>
    %176 = vector.shape_cast %175 : vector<1x1x1x224xf32> to vector<1x1x224xf32>
    %177 = vector.broadcast %176 : vector<1x1x224xf32> to vector<2x14x224xf32>
    %178 = arith.mulf %174, %177 : vector<2x14x224xf32>
    %179 = arith.addf %172, %178 : vector<2x14x224xf32>
    %c14 = arith.constant 14 : index
    %c0_194 = arith.constant 0 : index
    %c0_195 = arith.constant 0 : index
    %c0_196 = arith.constant 0 : index
    %180 = vector.load %arg0[%c14, %c0_194, %c0_195, %c0_196] : memref<16x2x14x224xf32, #tpu.memory_space<vmem>>, vector<1x2x14x224xf32>
    %181 = vector.shape_cast %180 : vector<1x2x14x224xf32> to vector<2x14x224xf32>
    %c8_197 = arith.constant 8 : index
    %c0_198 = arith.constant 0 : index
    %c0_199 = arith.constant 0 : index
    %c0_200 = arith.constant 0 : index
    %182 = vector.load %arg1[%c8_197, %c0_198, %c0_199, %c0_200] : memref<9x1x1x224xf32, #tpu.memory_space<vmem>>, vector<1x1x1x224xf32>
    %183 = vector.shape_cast %182 : vector<1x1x1x224xf32> to vector<1x1x224xf32>
    %184 = vector.broadcast %183 : vector<1x1x224xf32> to vector<2x14x224xf32>
    %185 = arith.mulf %181, %184 : vector<2x14x224xf32>
    %186 = arith.addf %179, %185 : vector<2x14x224xf32>
    %187 = arith.maximumf %124, %186 : vector<2x14x224xf32>
    %c5_201 = arith.constant 5 : index
    %c0_202 = arith.constant 0 : index
    %c0_203 = arith.constant 0 : index
    %c0_204 = arith.constant 0 : index
    %188 = vector.load %arg0[%c5_201, %c0_202, %c0_203, %c0_204] : memref<16x2x14x224xf32, #tpu.memory_space<vmem>>, vector<1x2x14x224xf32>
    %189 = vector.shape_cast %188 : vector<1x2x14x224xf32> to vector<2x14x224xf32>
    %c0_205 = arith.constant 0 : index
    %c0_206 = arith.constant 0 : index
    %c0_207 = arith.constant 0 : index
    %c0_208 = arith.constant 0 : index
    %190 = vector.load %arg1[%c0_205, %c0_206, %c0_207, %c0_208] : memref<9x1x1x224xf32, #tpu.memory_space<vmem>>, vector<1x1x1x224xf32>
    %191 = vector.shape_cast %190 : vector<1x1x1x224xf32> to vector<1x1x224xf32>
    %192 = vector.broadcast %191 : vector<1x1x224xf32> to vector<2x14x224xf32>
    %193 = arith.mulf %189, %192 : vector<2x14x224xf32>
    %c6_209 = arith.constant 6 : index
    %c0_210 = arith.constant 0 : index
    %c0_211 = arith.constant 0 : index
    %c0_212 = arith.constant 0 : index
    %194 = vector.load %arg0[%c6_209, %c0_210, %c0_211, %c0_212] : memref<16x2x14x224xf32, #tpu.memory_space<vmem>>, vector<1x2x14x224xf32>
    %195 = vector.shape_cast %194 : vector<1x2x14x224xf32> to vector<2x14x224xf32>
    %c1_213 = arith.constant 1 : index
    %c0_214 = arith.constant 0 : index
    %c0_215 = arith.constant 0 : index
    %c0_216 = arith.constant 0 : index
    %196 = vector.load %arg1[%c1_213, %c0_214, %c0_215, %c0_216] : memref<9x1x1x224xf32, #tpu.memory_space<vmem>>, vector<1x1x1x224xf32>
    %197 = vector.shape_cast %196 : vector<1x1x1x224xf32> to vector<1x1x224xf32>
    %198 = vector.broadcast %197 : vector<1x1x224xf32> to vector<2x14x224xf32>
    %199 = arith.mulf %195, %198 : vector<2x14x224xf32>
    %200 = arith.addf %193, %199 : vector<2x14x224xf32>
    %c7_217 = arith.constant 7 : index
    %c0_218 = arith.constant 0 : index
    %c0_219 = arith.constant 0 : index
    %c0_220 = arith.constant 0 : index
    %201 = vector.load %arg0[%c7_217, %c0_218, %c0_219, %c0_220] : memref<16x2x14x224xf32, #tpu.memory_space<vmem>>, vector<1x2x14x224xf32>
    %202 = vector.shape_cast %201 : vector<1x2x14x224xf32> to vector<2x14x224xf32>
    %c2_221 = arith.constant 2 : index
    %c0_222 = arith.constant 0 : index
    %c0_223 = arith.constant 0 : index
    %c0_224 = arith.constant 0 : index
    %203 = vector.load %arg1[%c2_221, %c0_222, %c0_223, %c0_224] : memref<9x1x1x224xf32, #tpu.memory_space<vmem>>, vector<1x1x1x224xf32>
    %204 = vector.shape_cast %203 : vector<1x1x1x224xf32> to vector<1x1x224xf32>
    %205 = vector.broadcast %204 : vector<1x1x224xf32> to vector<2x14x224xf32>
    %206 = arith.mulf %202, %205 : vector<2x14x224xf32>
    %207 = arith.addf %200, %206 : vector<2x14x224xf32>
    %c9_225 = arith.constant 9 : index
    %c0_226 = arith.constant 0 : index
    %c0_227 = arith.constant 0 : index
    %c0_228 = arith.constant 0 : index
    %208 = vector.load %arg0[%c9_225, %c0_226, %c0_227, %c0_228] : memref<16x2x14x224xf32, #tpu.memory_space<vmem>>, vector<1x2x14x224xf32>
    %209 = vector.shape_cast %208 : vector<1x2x14x224xf32> to vector<2x14x224xf32>
    %c3_229 = arith.constant 3 : index
    %c0_230 = arith.constant 0 : index
    %c0_231 = arith.constant 0 : index
    %c0_232 = arith.constant 0 : index
    %210 = vector.load %arg1[%c3_229, %c0_230, %c0_231, %c0_232] : memref<9x1x1x224xf32, #tpu.memory_space<vmem>>, vector<1x1x1x224xf32>
    %211 = vector.shape_cast %210 : vector<1x1x1x224xf32> to vector<1x1x224xf32>
    %212 = vector.broadcast %211 : vector<1x1x224xf32> to vector<2x14x224xf32>
    %213 = arith.mulf %209, %212 : vector<2x14x224xf32>
    %214 = arith.addf %207, %213 : vector<2x14x224xf32>
    %c10_233 = arith.constant 10 : index
    %c0_234 = arith.constant 0 : index
    %c0_235 = arith.constant 0 : index
    %c0_236 = arith.constant 0 : index
    %215 = vector.load %arg0[%c10_233, %c0_234, %c0_235, %c0_236] : memref<16x2x14x224xf32, #tpu.memory_space<vmem>>, vector<1x2x14x224xf32>
    %216 = vector.shape_cast %215 : vector<1x2x14x224xf32> to vector<2x14x224xf32>
    %c4_237 = arith.constant 4 : index
    %c0_238 = arith.constant 0 : index
    %c0_239 = arith.constant 0 : index
    %c0_240 = arith.constant 0 : index
    %217 = vector.load %arg1[%c4_237, %c0_238, %c0_239, %c0_240] : memref<9x1x1x224xf32, #tpu.memory_space<vmem>>, vector<1x1x1x224xf32>
    %218 = vector.shape_cast %217 : vector<1x1x1x224xf32> to vector<1x1x224xf32>
    %219 = vector.broadcast %218 : vector<1x1x224xf32> to vector<2x14x224xf32>
    %220 = arith.mulf %216, %219 : vector<2x14x224xf32>
    %221 = arith.addf %214, %220 : vector<2x14x224xf32>
    %c11_241 = arith.constant 11 : index
    %c0_242 = arith.constant 0 : index
    %c0_243 = arith.constant 0 : index
    %c0_244 = arith.constant 0 : index
    %222 = vector.load %arg0[%c11_241, %c0_242, %c0_243, %c0_244] : memref<16x2x14x224xf32, #tpu.memory_space<vmem>>, vector<1x2x14x224xf32>
    %223 = vector.shape_cast %222 : vector<1x2x14x224xf32> to vector<2x14x224xf32>
    %c5_245 = arith.constant 5 : index
    %c0_246 = arith.constant 0 : index
    %c0_247 = arith.constant 0 : index
    %c0_248 = arith.constant 0 : index
    %224 = vector.load %arg1[%c5_245, %c0_246, %c0_247, %c0_248] : memref<9x1x1x224xf32, #tpu.memory_space<vmem>>, vector<1x1x1x224xf32>
    %225 = vector.shape_cast %224 : vector<1x1x1x224xf32> to vector<1x1x224xf32>
    %226 = vector.broadcast %225 : vector<1x1x224xf32> to vector<2x14x224xf32>
    %227 = arith.mulf %223, %226 : vector<2x14x224xf32>
    %228 = arith.addf %221, %227 : vector<2x14x224xf32>
    %c13_249 = arith.constant 13 : index
    %c0_250 = arith.constant 0 : index
    %c0_251 = arith.constant 0 : index
    %c0_252 = arith.constant 0 : index
    %229 = vector.load %arg0[%c13_249, %c0_250, %c0_251, %c0_252] : memref<16x2x14x224xf32, #tpu.memory_space<vmem>>, vector<1x2x14x224xf32>
    %230 = vector.shape_cast %229 : vector<1x2x14x224xf32> to vector<2x14x224xf32>
    %c6_253 = arith.constant 6 : index
    %c0_254 = arith.constant 0 : index
    %c0_255 = arith.constant 0 : index
    %c0_256 = arith.constant 0 : index
    %231 = vector.load %arg1[%c6_253, %c0_254, %c0_255, %c0_256] : memref<9x1x1x224xf32, #tpu.memory_space<vmem>>, vector<1x1x1x224xf32>
    %232 = vector.shape_cast %231 : vector<1x1x1x224xf32> to vector<1x1x224xf32>
    %233 = vector.broadcast %232 : vector<1x1x224xf32> to vector<2x14x224xf32>
    %234 = arith.mulf %230, %233 : vector<2x14x224xf32>
    %235 = arith.addf %228, %234 : vector<2x14x224xf32>
    %c14_257 = arith.constant 14 : index
    %c0_258 = arith.constant 0 : index
    %c0_259 = arith.constant 0 : index
    %c0_260 = arith.constant 0 : index
    %236 = vector.load %arg0[%c14_257, %c0_258, %c0_259, %c0_260] : memref<16x2x14x224xf32, #tpu.memory_space<vmem>>, vector<1x2x14x224xf32>
    %237 = vector.shape_cast %236 : vector<1x2x14x224xf32> to vector<2x14x224xf32>
    %c7_261 = arith.constant 7 : index
    %c0_262 = arith.constant 0 : index
    %c0_263 = arith.constant 0 : index
    %c0_264 = arith.constant 0 : index
    %238 = vector.load %arg1[%c7_261, %c0_262, %c0_263, %c0_264] : memref<9x1x1x224xf32, #tpu.memory_space<vmem>>, vector<1x1x1x224xf32>
    %239 = vector.shape_cast %238 : vector<1x1x1x224xf32> to vector<1x1x224xf32>
    %240 = vector.broadcast %239 : vector<1x1x224xf32> to vector<2x14x224xf32>
    %241 = arith.mulf %237, %240 : vector<2x14x224xf32>
    %242 = arith.addf %235, %241 : vector<2x14x224xf32>
    %c15 = arith.constant 15 : index
    %c0_265 = arith.constant 0 : index
    %c0_266 = arith.constant 0 : index
    %c0_267 = arith.constant 0 : index
    %243 = vector.load %arg0[%c15, %c0_265, %c0_266, %c0_267] : memref<16x2x14x224xf32, #tpu.memory_space<vmem>>, vector<1x2x14x224xf32>
    %244 = vector.shape_cast %243 : vector<1x2x14x224xf32> to vector<2x14x224xf32>
    %c8_268 = arith.constant 8 : index
    %c0_269 = arith.constant 0 : index
    %c0_270 = arith.constant 0 : index
    %c0_271 = arith.constant 0 : index
    %245 = vector.load %arg1[%c8_268, %c0_269, %c0_270, %c0_271] : memref<9x1x1x224xf32, #tpu.memory_space<vmem>>, vector<1x1x1x224xf32>
    %246 = vector.shape_cast %245 : vector<1x1x1x224xf32> to vector<1x1x224xf32>
    %247 = vector.broadcast %246 : vector<1x1x224xf32> to vector<2x14x224xf32>
    %248 = arith.mulf %244, %247 : vector<2x14x224xf32>
    %249 = arith.addf %242, %248 : vector<2x14x224xf32>
    %250 = arith.maximumf %187, %249 : vector<2x14x224xf32>
    %cst = arith.constant dense<0.000000e+00> : vector<2x224xf32>
    %251 = vector.multi_reduction <add>, %250, %cst [1] : vector<2x14x224xf32> to vector<2x224xf32>
    %252 = vector.shape_cast %251 : vector<2x224xf32> to vector<2x1x224xf32>
    %cst_272 = arith.constant dense<0.000000e+00> : vector<1x224xf32>
    %253 = vector.multi_reduction <add>, %252, %cst_272 [0] : vector<2x1x224xf32> to vector<1x224xf32>
    %254 = vector.shape_cast %253 : vector<1x224xf32> to vector<1x1x224xf32>
    %255 = vector.shape_cast %254 : vector<1x1x224xf32> to vector<1x224xf32>
    %256 = arith.mulf %250, %250 : vector<2x14x224xf32>
    %cst_273 = arith.constant dense<0.000000e+00> : vector<2x224xf32>
    %257 = vector.multi_reduction <add>, %256, %cst_273 [1] : vector<2x14x224xf32> to vector<2x224xf32>
    %258 = vector.shape_cast %257 : vector<2x224xf32> to vector<2x1x224xf32>
    %cst_274 = arith.constant dense<0.000000e+00> : vector<1x224xf32>
    %259 = vector.multi_reduction <add>, %258, %cst_274 [0] : vector<2x1x224xf32> to vector<1x224xf32>
    %260 = vector.shape_cast %259 : vector<1x224xf32> to vector<1x1x224xf32>
    %261 = vector.shape_cast %260 : vector<1x1x224xf32> to vector<1x224xf32>
    %c0_275 = arith.constant 0 : index
    %c0_276 = arith.constant 0 : index
    %262 = vector.load %arg4[%c0_275, %c0_276] : memref<224x16xf32, #tpu.memory_space<vmem>>, vector<224x16xf32>
    %cst_277 = arith.constant dense<0.000000e+00> : vector<1x16xf32>
    %263 = tpu.matmul %255, %262, %cst_277 {dimension_numbers = #tpu.dot_dimension_numbers<[1], [0], [0], [1], [0, 0, 1, 1], [], []>} : vector<1x224xf32>, vector<224x16xf32>, vector<1x16xf32> -> vector<1x16xf32>
    %c0_278 = arith.constant 0 : index
    %c0_279 = arith.constant 0 : index
    %264 = vector.load %arg4[%c0_278, %c0_279] : memref<224x16xf32, #tpu.memory_space<vmem>>, vector<224x16xf32>
    %cst_280 = arith.constant dense<0.000000e+00> : vector<1x16xf32>
    %265 = tpu.matmul %261, %264, %cst_280 {dimension_numbers = #tpu.dot_dimension_numbers<[1], [0], [0], [1], [0, 0, 1, 1], [], []>} : vector<1x224xf32>, vector<224x16xf32>, vector<1x16xf32> -> vector<1x16xf32>
    %cst_281 = arith.constant 0.00255102036 : f32
    %266 = vector.broadcast %cst_281 : f32 to vector<1x16xf32>
    %267 = arith.mulf %263, %266 : vector<1x16xf32>
    %cst_282 = arith.constant 0.00255102036 : f32
    %268 = vector.broadcast %cst_282 : f32 to vector<1x16xf32>
    %269 = arith.mulf %265, %268 : vector<1x16xf32>
    %270 = arith.mulf %267, %267 : vector<1x16xf32>
    %271 = arith.subf %269, %270 : vector<1x16xf32>
    %c0_283 = arith.constant 0 : index
    %c0_284 = arith.constant 0 : index
    %272 = vector.load %arg2[%c0_283, %c0_284] : memref<1x16xf32, #tpu.memory_space<vmem>>, vector<1x16xf32>
    %cst_285 = arith.constant 9.99999974E-6 : f32
    %273 = vector.broadcast %cst_285 : f32 to vector<1x16xf32>
    %274 = arith.addf %271, %273 : vector<1x16xf32>
    %275 = math.rsqrt %274 : vector<1x16xf32>
    %276 = arith.mulf %272, %275 : vector<1x16xf32>
    %c0_286 = arith.constant 0 : index
    %c0_287 = arith.constant 0 : index
    %277 = vector.load %arg3[%c0_286, %c0_287] : memref<1x16xf32, #tpu.memory_space<vmem>>, vector<1x16xf32>
    %278 = arith.mulf %267, %276 : vector<1x16xf32>
    %279 = arith.subf %277, %278 : vector<1x16xf32>
    %c0_288 = arith.constant 0 : index
    %c0_289 = arith.constant 0 : index
    %280 = vector.load %arg5[%c0_288, %c0_289] : memref<16x224xf32, #tpu.memory_space<vmem>>, vector<16x224xf32>
    %cst_290 = arith.constant dense<0.000000e+00> : vector<1x224xf32>
    %281 = tpu.matmul %276, %280, %cst_290 {dimension_numbers = #tpu.dot_dimension_numbers<[1], [0], [0], [1], [0, 0, 1, 1], [], []>} : vector<1x16xf32>, vector<16x224xf32>, vector<1x224xf32> -> vector<1x224xf32>
    %c0_291 = arith.constant 0 : index
    %c0_292 = arith.constant 0 : index
    %282 = vector.load %arg5[%c0_291, %c0_292] : memref<16x224xf32, #tpu.memory_space<vmem>>, vector<16x224xf32>
    %cst_293 = arith.constant dense<0.000000e+00> : vector<1x224xf32>
    %283 = tpu.matmul %279, %282, %cst_293 {dimension_numbers = #tpu.dot_dimension_numbers<[1], [0], [0], [1], [0, 0, 1, 1], [], []>} : vector<1x16xf32>, vector<16x224xf32>, vector<1x224xf32> -> vector<1x224xf32>
    %284 = vector.shape_cast %281 : vector<1x224xf32> to vector<1x1x224xf32>
    %285 = vector.broadcast %284 : vector<1x1x224xf32> to vector<2x14x224xf32>
    %286 = arith.mulf %250, %285 : vector<2x14x224xf32>
    %287 = vector.shape_cast %283 : vector<1x224xf32> to vector<1x1x224xf32>
    %288 = vector.broadcast %287 : vector<1x1x224xf32> to vector<2x14x224xf32>
    %289 = arith.addf %286, %288 : vector<2x14x224xf32>
    %cst_294 = arith.constant 0.000000e+00 : f32
    %290 = vector.broadcast %cst_294 : f32 to vector<2x10xf32>
    %c0_295 = arith.constant 0 : index
    %c0_296 = arith.constant 0 : index
    %291 = vector.load %arg7[%c0_295, %c0_296] : memref<1x10xf32, #tpu.memory_space<vmem>>, vector<1x10xf32>
    %292 = vector.broadcast %291 : vector<1x10xf32> to vector<2x10xf32>
    %293 = arith.addf %290, %292 : vector<2x10xf32>
    %294 = vector.extract_strided_slice %289 {offsets = [0, 0, 0], sizes = [2, 1, 224], strides = [1, 1, 1]} : vector<2x14x224xf32> to vector<2x1x224xf32>
    %295 = vector.shape_cast %294 : vector<2x1x224xf32> to vector<2x224xf32>
    %c0_297 = arith.constant 0 : index
    %c0_298 = arith.constant 0 : index
    %c0_299 = arith.constant 0 : index
    %296 = vector.load %arg6[%c0_297, %c0_298, %c0_299] : memref<14x224x10xf32, #tpu.memory_space<vmem>>, vector<1x224x10xf32>
    %297 = vector.shape_cast %296 : vector<1x224x10xf32> to vector<224x10xf32>
    %cst_300 = arith.constant dense<0.000000e+00> : vector<2x10xf32>
    %298 = tpu.matmul %295, %297, %cst_300 {dimension_numbers = #tpu.dot_dimension_numbers<[1], [0], [0], [1], [0, 0, 1, 1], [], []>} : vector<2x224xf32>, vector<224x10xf32>, vector<2x10xf32> -> vector<2x10xf32>
    %299 = arith.addf %293, %298 : vector<2x10xf32>
    %300 = vector.extract_strided_slice %289 {offsets = [0, 1, 0], sizes = [2, 1, 224], strides = [1, 1, 1]} : vector<2x14x224xf32> to vector<2x1x224xf32>
    %301 = vector.shape_cast %300 : vector<2x1x224xf32> to vector<2x224xf32>
    %c1_301 = arith.constant 1 : index
    %c0_302 = arith.constant 0 : index
    %c0_303 = arith.constant 0 : index
    %302 = vector.load %arg6[%c1_301, %c0_302, %c0_303] : memref<14x224x10xf32, #tpu.memory_space<vmem>>, vector<1x224x10xf32>
    %303 = vector.shape_cast %302 : vector<1x224x10xf32> to vector<224x10xf32>
    %cst_304 = arith.constant dense<0.000000e+00> : vector<2x10xf32>
    %304 = tpu.matmul %301, %303, %cst_304 {dimension_numbers = #tpu.dot_dimension_numbers<[1], [0], [0], [1], [0, 0, 1, 1], [], []>} : vector<2x224xf32>, vector<224x10xf32>, vector<2x10xf32> -> vector<2x10xf32>
    %305 = arith.addf %299, %304 : vector<2x10xf32>
    %306 = vector.extract_strided_slice %289 {offsets = [0, 2, 0], sizes = [2, 1, 224], strides = [1, 1, 1]} : vector<2x14x224xf32> to vector<2x1x224xf32>
    %307 = vector.shape_cast %306 : vector<2x1x224xf32> to vector<2x224xf32>
    %c2_305 = arith.constant 2 : index
    %c0_306 = arith.constant 0 : index
    %c0_307 = arith.constant 0 : index
    %308 = vector.load %arg6[%c2_305, %c0_306, %c0_307] : memref<14x224x10xf32, #tpu.memory_space<vmem>>, vector<1x224x10xf32>
    %309 = vector.shape_cast %308 : vector<1x224x10xf32> to vector<224x10xf32>
    %cst_308 = arith.constant dense<0.000000e+00> : vector<2x10xf32>
    %310 = tpu.matmul %307, %309, %cst_308 {dimension_numbers = #tpu.dot_dimension_numbers<[1], [0], [0], [1], [0, 0, 1, 1], [], []>} : vector<2x224xf32>, vector<224x10xf32>, vector<2x10xf32> -> vector<2x10xf32>
    %311 = arith.addf %305, %310 : vector<2x10xf32>
    %312 = vector.extract_strided_slice %289 {offsets = [0, 3, 0], sizes = [2, 1, 224], strides = [1, 1, 1]} : vector<2x14x224xf32> to vector<2x1x224xf32>
    %313 = vector.shape_cast %312 : vector<2x1x224xf32> to vector<2x224xf32>
    %c3_309 = arith.constant 3 : index
    %c0_310 = arith.constant 0 : index
    %c0_311 = arith.constant 0 : index
    %314 = vector.load %arg6[%c3_309, %c0_310, %c0_311] : memref<14x224x10xf32, #tpu.memory_space<vmem>>, vector<1x224x10xf32>
    %315 = vector.shape_cast %314 : vector<1x224x10xf32> to vector<224x10xf32>
    %cst_312 = arith.constant dense<0.000000e+00> : vector<2x10xf32>
    %316 = tpu.matmul %313, %315, %cst_312 {dimension_numbers = #tpu.dot_dimension_numbers<[1], [0], [0], [1], [0, 0, 1, 1], [], []>} : vector<2x224xf32>, vector<224x10xf32>, vector<2x10xf32> -> vector<2x10xf32>
    %317 = arith.addf %311, %316 : vector<2x10xf32>
    %318 = vector.extract_strided_slice %289 {offsets = [0, 4, 0], sizes = [2, 1, 224], strides = [1, 1, 1]} : vector<2x14x224xf32> to vector<2x1x224xf32>
    %319 = vector.shape_cast %318 : vector<2x1x224xf32> to vector<2x224xf32>
    %c4_313 = arith.constant 4 : index
    %c0_314 = arith.constant 0 : index
    %c0_315 = arith.constant 0 : index
    %320 = vector.load %arg6[%c4_313, %c0_314, %c0_315] : memref<14x224x10xf32, #tpu.memory_space<vmem>>, vector<1x224x10xf32>
    %321 = vector.shape_cast %320 : vector<1x224x10xf32> to vector<224x10xf32>
    %cst_316 = arith.constant dense<0.000000e+00> : vector<2x10xf32>
    %322 = tpu.matmul %319, %321, %cst_316 {dimension_numbers = #tpu.dot_dimension_numbers<[1], [0], [0], [1], [0, 0, 1, 1], [], []>} : vector<2x224xf32>, vector<224x10xf32>, vector<2x10xf32> -> vector<2x10xf32>
    %323 = arith.addf %317, %322 : vector<2x10xf32>
    %324 = vector.extract_strided_slice %289 {offsets = [0, 5, 0], sizes = [2, 1, 224], strides = [1, 1, 1]} : vector<2x14x224xf32> to vector<2x1x224xf32>
    %325 = vector.shape_cast %324 : vector<2x1x224xf32> to vector<2x224xf32>
    %c5_317 = arith.constant 5 : index
    %c0_318 = arith.constant 0 : index
    %c0_319 = arith.constant 0 : index
    %326 = vector.load %arg6[%c5_317, %c0_318, %c0_319] : memref<14x224x10xf32, #tpu.memory_space<vmem>>, vector<1x224x10xf32>
    %327 = vector.shape_cast %326 : vector<1x224x10xf32> to vector<224x10xf32>
    %cst_320 = arith.constant dense<0.000000e+00> : vector<2x10xf32>
    %328 = tpu.matmul %325, %327, %cst_320 {dimension_numbers = #tpu.dot_dimension_numbers<[1], [0], [0], [1], [0, 0, 1, 1], [], []>} : vector<2x224xf32>, vector<224x10xf32>, vector<2x10xf32> -> vector<2x10xf32>
    %329 = arith.addf %323, %328 : vector<2x10xf32>
    %330 = vector.extract_strided_slice %289 {offsets = [0, 6, 0], sizes = [2, 1, 224], strides = [1, 1, 1]} : vector<2x14x224xf32> to vector<2x1x224xf32>
    %331 = vector.shape_cast %330 : vector<2x1x224xf32> to vector<2x224xf32>
    %c6_321 = arith.constant 6 : index
    %c0_322 = arith.constant 0 : index
    %c0_323 = arith.constant 0 : index
    %332 = vector.load %arg6[%c6_321, %c0_322, %c0_323] : memref<14x224x10xf32, #tpu.memory_space<vmem>>, vector<1x224x10xf32>
    %333 = vector.shape_cast %332 : vector<1x224x10xf32> to vector<224x10xf32>
    %cst_324 = arith.constant dense<0.000000e+00> : vector<2x10xf32>
    %334 = tpu.matmul %331, %333, %cst_324 {dimension_numbers = #tpu.dot_dimension_numbers<[1], [0], [0], [1], [0, 0, 1, 1], [], []>} : vector<2x224xf32>, vector<224x10xf32>, vector<2x10xf32> -> vector<2x10xf32>
    %335 = arith.addf %329, %334 : vector<2x10xf32>
    %336 = vector.extract_strided_slice %289 {offsets = [0, 7, 0], sizes = [2, 1, 224], strides = [1, 1, 1]} : vector<2x14x224xf32> to vector<2x1x224xf32>
    %337 = vector.shape_cast %336 : vector<2x1x224xf32> to vector<2x224xf32>
    %c7_325 = arith.constant 7 : index
    %c0_326 = arith.constant 0 : index
    %c0_327 = arith.constant 0 : index
    %338 = vector.load %arg6[%c7_325, %c0_326, %c0_327] : memref<14x224x10xf32, #tpu.memory_space<vmem>>, vector<1x224x10xf32>
    %339 = vector.shape_cast %338 : vector<1x224x10xf32> to vector<224x10xf32>
    %cst_328 = arith.constant dense<0.000000e+00> : vector<2x10xf32>
    %340 = tpu.matmul %337, %339, %cst_328 {dimension_numbers = #tpu.dot_dimension_numbers<[1], [0], [0], [1], [0, 0, 1, 1], [], []>} : vector<2x224xf32>, vector<224x10xf32>, vector<2x10xf32> -> vector<2x10xf32>
    %341 = arith.addf %335, %340 : vector<2x10xf32>
    %342 = vector.extract_strided_slice %289 {offsets = [0, 8, 0], sizes = [2, 1, 224], strides = [1, 1, 1]} : vector<2x14x224xf32> to vector<2x1x224xf32>
    %343 = vector.shape_cast %342 : vector<2x1x224xf32> to vector<2x224xf32>
    %c8_329 = arith.constant 8 : index
    %c0_330 = arith.constant 0 : index
    %c0_331 = arith.constant 0 : index
    %344 = vector.load %arg6[%c8_329, %c0_330, %c0_331] : memref<14x224x10xf32, #tpu.memory_space<vmem>>, vector<1x224x10xf32>
    %345 = vector.shape_cast %344 : vector<1x224x10xf32> to vector<224x10xf32>
    %cst_332 = arith.constant dense<0.000000e+00> : vector<2x10xf32>
    %346 = tpu.matmul %343, %345, %cst_332 {dimension_numbers = #tpu.dot_dimension_numbers<[1], [0], [0], [1], [0, 0, 1, 1], [], []>} : vector<2x224xf32>, vector<224x10xf32>, vector<2x10xf32> -> vector<2x10xf32>
    %347 = arith.addf %341, %346 : vector<2x10xf32>
    %348 = vector.extract_strided_slice %289 {offsets = [0, 9, 0], sizes = [2, 1, 224], strides = [1, 1, 1]} : vector<2x14x224xf32> to vector<2x1x224xf32>
    %349 = vector.shape_cast %348 : vector<2x1x224xf32> to vector<2x224xf32>
    %c9_333 = arith.constant 9 : index
    %c0_334 = arith.constant 0 : index
    %c0_335 = arith.constant 0 : index
    %350 = vector.load %arg6[%c9_333, %c0_334, %c0_335] : memref<14x224x10xf32, #tpu.memory_space<vmem>>, vector<1x224x10xf32>
    %351 = vector.shape_cast %350 : vector<1x224x10xf32> to vector<224x10xf32>
    %cst_336 = arith.constant dense<0.000000e+00> : vector<2x10xf32>
    %352 = tpu.matmul %349, %351, %cst_336 {dimension_numbers = #tpu.dot_dimension_numbers<[1], [0], [0], [1], [0, 0, 1, 1], [], []>} : vector<2x224xf32>, vector<224x10xf32>, vector<2x10xf32> -> vector<2x10xf32>
    %353 = arith.addf %347, %352 : vector<2x10xf32>
    %354 = vector.extract_strided_slice %289 {offsets = [0, 10, 0], sizes = [2, 1, 224], strides = [1, 1, 1]} : vector<2x14x224xf32> to vector<2x1x224xf32>
    %355 = vector.shape_cast %354 : vector<2x1x224xf32> to vector<2x224xf32>
    %c10_337 = arith.constant 10 : index
    %c0_338 = arith.constant 0 : index
    %c0_339 = arith.constant 0 : index
    %356 = vector.load %arg6[%c10_337, %c0_338, %c0_339] : memref<14x224x10xf32, #tpu.memory_space<vmem>>, vector<1x224x10xf32>
    %357 = vector.shape_cast %356 : vector<1x224x10xf32> to vector<224x10xf32>
    %cst_340 = arith.constant dense<0.000000e+00> : vector<2x10xf32>
    %358 = tpu.matmul %355, %357, %cst_340 {dimension_numbers = #tpu.dot_dimension_numbers<[1], [0], [0], [1], [0, 0, 1, 1], [], []>} : vector<2x224xf32>, vector<224x10xf32>, vector<2x10xf32> -> vector<2x10xf32>
    %359 = arith.addf %353, %358 : vector<2x10xf32>
    %360 = vector.extract_strided_slice %289 {offsets = [0, 11, 0], sizes = [2, 1, 224], strides = [1, 1, 1]} : vector<2x14x224xf32> to vector<2x1x224xf32>
    %361 = vector.shape_cast %360 : vector<2x1x224xf32> to vector<2x224xf32>
    %c11_341 = arith.constant 11 : index
    %c0_342 = arith.constant 0 : index
    %c0_343 = arith.constant 0 : index
    %362 = vector.load %arg6[%c11_341, %c0_342, %c0_343] : memref<14x224x10xf32, #tpu.memory_space<vmem>>, vector<1x224x10xf32>
    %363 = vector.shape_cast %362 : vector<1x224x10xf32> to vector<224x10xf32>
    %cst_344 = arith.constant dense<0.000000e+00> : vector<2x10xf32>
    %364 = tpu.matmul %361, %363, %cst_344 {dimension_numbers = #tpu.dot_dimension_numbers<[1], [0], [0], [1], [0, 0, 1, 1], [], []>} : vector<2x224xf32>, vector<224x10xf32>, vector<2x10xf32> -> vector<2x10xf32>
    %365 = arith.addf %359, %364 : vector<2x10xf32>
    %366 = vector.extract_strided_slice %289 {offsets = [0, 12, 0], sizes = [2, 1, 224], strides = [1, 1, 1]} : vector<2x14x224xf32> to vector<2x1x224xf32>
    %367 = vector.shape_cast %366 : vector<2x1x224xf32> to vector<2x224xf32>
    %c12_345 = arith.constant 12 : index
    %c0_346 = arith.constant 0 : index
    %c0_347 = arith.constant 0 : index
    %368 = vector.load %arg6[%c12_345, %c0_346, %c0_347] : memref<14x224x10xf32, #tpu.memory_space<vmem>>, vector<1x224x10xf32>
    %369 = vector.shape_cast %368 : vector<1x224x10xf32> to vector<224x10xf32>
    %cst_348 = arith.constant dense<0.000000e+00> : vector<2x10xf32>
    %370 = tpu.matmul %367, %369, %cst_348 {dimension_numbers = #tpu.dot_dimension_numbers<[1], [0], [0], [1], [0, 0, 1, 1], [], []>} : vector<2x224xf32>, vector<224x10xf32>, vector<2x10xf32> -> vector<2x10xf32>
    %371 = arith.addf %365, %370 : vector<2x10xf32>
    %372 = vector.extract_strided_slice %289 {offsets = [0, 13, 0], sizes = [2, 1, 224], strides = [1, 1, 1]} : vector<2x14x224xf32> to vector<2x1x224xf32>
    %373 = vector.shape_cast %372 : vector<2x1x224xf32> to vector<2x224xf32>
    %c13_349 = arith.constant 13 : index
    %c0_350 = arith.constant 0 : index
    %c0_351 = arith.constant 0 : index
    %374 = vector.load %arg6[%c13_349, %c0_350, %c0_351] : memref<14x224x10xf32, #tpu.memory_space<vmem>>, vector<1x224x10xf32>
    %375 = vector.shape_cast %374 : vector<1x224x10xf32> to vector<224x10xf32>
    %cst_352 = arith.constant dense<0.000000e+00> : vector<2x10xf32>
    %376 = tpu.matmul %373, %375, %cst_352 {dimension_numbers = #tpu.dot_dimension_numbers<[1], [0], [0], [1], [0, 0, 1, 1], [], []>} : vector<2x224xf32>, vector<224x10xf32>, vector<2x10xf32> -> vector<2x10xf32>
    %377 = arith.addf %371, %376 : vector<2x10xf32>
    %c0_353 = arith.constant 0 : index
    %c0_354 = arith.constant 0 : index
    %378 = vector.load %arg8[%c0_353, %c0_354] : memref<2x10xf32, #tpu.memory_space<vmem>>, vector<2x10xf32>
    tpu.vector_store %arg8[%c0_353, %c0_354], %377 {strides = array<i32>} : memref<2x10xf32, #tpu.memory_space<vmem>>, vector<2x10xf32>,
    return
  }
}

</mosaic_0001>

<llo_original>
// kernel: tile.19
$region0: #{tile.19}
  %s0 = inlined_call_operand.vmem [shape: f32[16,14,16], index: 0, kind: input, shape index: {}]
  %s1 = inlined_call_operand.vmem [shape: f32[16,224], index: 1, kind: output, shape index: {}]
  %v2 = vld [vmem:[%s0] ss:$8 sm:$0xf]
  %v3 = vld [vmem:[%s0] ss:$8 sm:$0xf0]
  %vm4 = vcmask 1047556
  %v5 = vsel %vm4, %v3, %v2
  %vm6 = vcmask 130048
  %7 = vst.msk [vmem:[%s1] ss:$8 sm:$0x3] %vm6, %v5
  %s8 = scalar_lea.vmem %s1, 4294967281
  %9 = vst.msk [vmem:[%s8] ss:$8 sm:$0xc] %vm6, %v5
  %s10 = scalar_lea.vmem %s1, 4294967266
  %11 = vst.msk [vmem:[%s10] ss:$8 sm:$0x30] %vm6, %v5
  %s12 = scalar_lea.vmem %s1, 4294967251
  %13 = vst.msk [vmem:[%s12] ss:$8 sm:$0xc0] %vm6, %v5
  %s14 = scalar_lea.vmem %s0, 64
  %v15 = vld [vmem:[%s14] ss:$8 sm:$0xf]
  %s16 = scalar_lea.vmem %s0, 64
  %v17 = vld [vmem:[%s16] ss:$8 sm:$0xf0]
  %vm18 = vcmask 1047556
  %v19 = vsel %vm18, %v17, %v15
  %vm20 = vcmask 130048
  %s21 = scalar_lea.vmem %s1, 4
  %22 = vst.msk [vmem:[%s21] ss:$8 sm:$0x3] %vm20, %v19
  %s23 = scalar_lea.vmem %s1, 4294967285
  %24 = vst.msk [vmem:[%s23] ss:$8 sm:$0xc] %vm20, %v19
  %s25 = scalar_lea.vmem %s1, 4294967270
  %26 = vst.msk [vmem:[%s25] ss:$8 sm:$0x30] %vm20, %v19
  %s27 = scalar_lea.vmem %s1, 4294967255
  %28 = vst.msk [vmem:[%s27] ss:$8 sm:$0xc0] %vm20, %v19
  %s29 = scalar_lea.vmem %s0, 128
  %v30 = vld [vmem:[%s29] ss:$8 sm:$0xf]
  %s31 = scalar_lea.vmem %s0, 128
  %v32 = vld [vmem:[%s31] ss:$8 sm:$0xf0]
  %vm33 = vcmask 1047556
  %v34 = vsel %vm33, %v32, %v30
  %vm35 = vcmask 130048
  %s36 = scalar_lea.vmem %s1, 16
  %37 = vst.msk [vmem:[%s36] ss:$8 sm:$0x3] %vm35, %v34
  %s38 = scalar_lea.vmem %s1, 1
  %39 = vst.msk [vmem:[%s38] ss:$8 sm:$0xc] %vm35, %v34
  %s40 = scalar_lea.vmem %s1, 4294967282
  %41 = vst.msk [vmem:[%s40] ss:$8 sm:$0x30] %vm35, %v34
  %s42 = scalar_lea.vmem %s1, 4294967267
  %43 = vst.msk [vmem:[%s42] ss:$8 sm:$0xc0] %vm35, %v34
  %s44 = scalar_lea.vmem %s0, 192
  %v45 = vld [vmem:[%s44] ss:$8 sm:$0xf]
  %s46 = scalar_lea.vmem %s0, 192
  %v47 = vld [vmem:[%s46] ss:$8 sm:$0xf0]
  %vm48 = vcmask 1047556
  %v49 = vsel %vm48, %v47, %v45
  %vm50 = vcmask 130048
  %s51 = scalar_lea.vmem %s1, 20
  %52 = vst.msk [vmem:[%s51] ss:$8 sm:$0x3] %vm50, %v49
  %s53 = scalar_lea.vmem %s1, 5
  %54 = vst.msk [vmem:[%s53] ss:$8 sm:$0xc] %vm50, %v49
  %s55 = scalar_lea.vmem %s1, 4294967286
  %56 = vst.msk [vmem:[%s55] ss:$8 sm:$0x30] %vm50, %v49
  %s57 = scalar_lea.vmem %s1, 4294967271
  %58 = vst.msk [vmem:[%s57] ss:$8 sm:$0xc0] %vm50, %v49
  %s59 = scalar_lea.vmem %s0, 7
  %s60 = smov 3
  %v61 = vld [vmem:[%s59] ss:$16 sm:%s60]
  %s62 = scalar_lea.vmem %s0, 7
  %s63 = smov 12
  %v64 = vld [vmem:[%s62] ss:$16 sm:%s63]
  %vm65 = vcmask 1043458
  %v66 = vsel %vm65, %v64, %v61
  %s67 = scalar_lea.vmem %s0, 7
  %s68 = smov 48
  %v69 = vld [vmem:[%s67] ss:$16 sm:%s68]
  %vm70 = vcmask 1045508
  %v71 = vsel %vm70, %v69, %v66
  %s72 = scalar_lea.vmem %s0, 7
  %s73 = smov 192
  %v74 = vld [vmem:[%s72] ss:$16 sm:%s73]
  %vm75 = vcmask 1047558
  %v76 = vsel %vm75, %v74, %v71
  %77 = vrot.lane.b32.xlu0 %v76, 112
  %v78 = vpop.permute.xlu0 %77
  %vm79 = vcmask 1048448
  %80 = vst.msk [vmem:[%s1] sm:$0xff] %vm79, %v78
  %s81 = scalar_lea.vmem %s0, 135
  %s82 = smov 3
  %v83 = vld [vmem:[%s81] ss:$16 sm:%s82]
  %s84 = scalar_lea.vmem %s0, 135
  %s85 = smov 12
  %v86 = vld [vmem:[%s84] ss:$16 sm:%s85]
  %vm87 = vcmask 1043458
  %v88 = vsel %vm87, %v86, %v83
  %s89 = scalar_lea.vmem %s0, 135
  %s90 = smov 48
  %v91 = vld [vmem:[%s89] ss:$16 sm:%s90]
  %vm92 = vcmask 1045508
  %v93 = vsel %vm92, %v91, %v88
  %s94 = scalar_lea.vmem %s0, 135
  %s95 = smov 192
  %v96 = vld [vmem:[%s94] ss:$16 sm:%s95]
  %vm97 = vcmask 1047558
  %v98 = vsel %vm97, %v96, %v93
  %99 = vrot.lane.b32.xlu0 %v98, 112
  %v100 = vpop.permute.xlu0 %99
  %vm101 = vcmask 1048448
  %s102 = scalar_lea.vmem %s1, 16
  %103 = vst.msk [vmem:[%s102] sm:$0xff] %vm101, %v100
  %s104 = scalar_lea.vmem %s0, 6
  %s105 = smov 3
  %v106 = vld [vmem:[%s104] ss:$16 sm:%s105]
  %s107 = scalar_lea.vmem %s0, 6
  %s108 = smov 12
  %v109 = vld [vmem:[%s107] ss:$16 sm:%s108]
  %vm110 = vcmask 1043458
  %v111 = vsel %vm110, %v109, %v106
  %s112 = scalar_lea.vmem %s0, 6
  %s113 = smov 48
  %v114 = vld [vmem:[%s112] ss:$16 sm:%s113]
  %vm115 = vcmask 1045508
  %v116 = vsel %vm115, %v114, %v111
  %s117 = scalar_lea.vmem %s0, 6
  %s118 = smov 192
  %v119 = vld [vmem:[%s117] ss:$16 sm:%s118]
  %vm120 = vcmask 1047558
  %v121 = vsel %vm120, %v119, %v116
  %122 = vrot.lane.b32.xlu0 %v121, 96
  %v123 = vpop.permute.xlu0 %122
  %vm124 = vcmask 917248
  %125 = vst.msk [vmem:[%s1] sm:$0xff] %vm124, %v123
  %s126 = scalar_lea.vmem %s0, 134
  %s127 = smov 3
  %v128 = vld [vmem:[%s126] ss:$16 sm:%s127]
  %s129 = scalar_lea.vmem %s0, 134
  %s130 = smov 12
  %v131 = vld [vmem:[%s129] ss:$16 sm:%s130]
  %vm132 = vcmask 1043458
  %v133 = vsel %vm132, %v131, %v128
  %s134 = scalar_lea.vmem %s0, 134
  %s135 = smov 48
  %v136 = vld [vmem:[%s134] ss:$16 sm:%s135]
  %vm137 = vcmask 1045508
  %v138 = vsel %vm137, %v136, %v133
  %s139 = scalar_lea.vmem %s0, 134
  %s140 = smov 192
  %v141 = vld [vmem:[%s139] ss:$16 sm:%s140]
  %vm142 = vcmask 1047558
  %v143 = vsel %vm142, %v141, %v138
  %144 = vrot.lane.b32.xlu0 %v143, 96
  %v145 = vpop.permute.xlu0 %144
  %vm146 = vcmask 917248
  %s147 = scalar_lea.vmem %s1, 16
  %148 = vst.msk [vmem:[%s147] sm:$0xff] %vm146, %v145
  %s149 = scalar_lea.vmem %s0, 5
  %s150 = smov 3
  %v151 = vld [vmem:[%s149] ss:$16 sm:%s150]
  %s152 = scalar_lea.vmem %s0, 5
  %s153 = smov 12
  %v154 = vld [vmem:[%s152] ss:$16 sm:%s153]
  %vm155 = vcmask 1043458
  %v156 = vsel %vm155, %v154, %v151
  %s157 = scalar_lea.vmem %s0, 5
  %s158 = smov 48
  %v159 = vld [vmem:[%s157] ss:$16 sm:%s158]
  %vm160 = vcmask 1045508
  %v161 = vsel %vm160, %v159, %v156
  %s162 = scalar_lea.vmem %s0, 5
  %s163 = smov 192
  %v164 = vld [vmem:[%s162] ss:$16 sm:%s163]
  %vm165 = vcmask 1047558
  %v166 = vsel %vm165, %v164, %v161
  %167 = vrot.lane.b32.xlu0 %v166, 80
  %v168 = vpop.permute.xlu0 %167
  %vm169 = vcmask 786048
  %170 = vst.msk [vmem:[%s1] sm:$0xff] %vm169, %v168
  %s171 = scalar_lea.vmem %s0, 13
  %s172 = smov 3
  %v173 = vld [vmem:[%s171] ss:$16 sm:%s172]
  %s174 = scalar_lea.vmem %s0, 13
  %s175 = smov 12
  %v176 = vld [vmem:[%s174] ss:$16 sm:%s175]
  %vm177 = vcmask 1043458
  %v178 = vsel %vm177, %v176, %v173
  %s179 = scalar_lea.vmem %s0, 13
  %s180 = smov 48
  %v181 = vld [vmem:[%s179] ss:$16 sm:%s180]
  %vm182 = vcmask 1045508
  %v183 = vsel %vm182, %v181, %v178
  %s184 = scalar_lea.vmem %s0, 13
  %s185 = smov 192
  %v186 = vld [vmem:[%s184] ss:$16 sm:%s185]
  %vm187 = vcmask 1047558
  %v188 = vsel %vm187, %v186, %v183
  %189 = vrot.lane.b32.xlu0 %v188, 80
  %v190 = vpop.permute.xlu0 %189
  %vm191 = vcmask 786048
  %s192 = scalar_lea.vmem %s1, 8
  %193 = vst.msk [vmem:[%s192] sm:$0xff] %vm191, %v190
  %s194 = scalar_lea.vmem %s0, 133
  %s195 = smov 3
  %v196 = vld [vmem:[%s194] ss:$16 sm:%s195]
  %s197 = scalar_lea.vmem %s0, 133
  %s198 = smov 12
  %v199 = vld [vmem:[%s197] ss:$16 sm:%s198]
  %vm200 = vcmask 1043458
  %v201 = vsel %vm200, %v199, %v196
  %s202 = scalar_lea.vmem %s0, 133
  %s203 = smov 48
  %v204 = vld [vmem:[%s202] ss:$16 sm:%s203]
  %vm205 = vcmask 1045508
  %v206 = vsel %vm205, %v204, %v201
  %s207 = scalar_lea.vmem %s0, 133
  %s208 = smov 192
  %v209 = vld [vmem:[%s207] ss:$16 sm:%s208]
  %vm210 = vcmask 1047558
  %v211 = vsel %vm210, %v209, %v206
  %212 = vrot.lane.b32.xlu0 %v211, 80
  %v213 = vpop.permute.xlu0 %212
  %vm214 = vcmask 786048
  %s215 = scalar_lea.vmem %s1, 16
  %216 = vst.msk [vmem:[%s215] sm:$0xff] %vm214, %v213
  %s217 = scalar_lea.vmem %s0, 141
  %s218 = smov 3
  %v219 = vld [vmem:[%s217] ss:$16 sm:%s218]
  %s220 = scalar_lea.vmem %s0, 141
  %s221 = smov 12
  %v222 = vld [vmem:[%s220] ss:$16 sm:%s221]
  %vm223 = vcmask 1043458
  %v224 = vsel %vm223, %v222, %v219
  %s225 = scalar_lea.vmem %s0, 141
  %s226 = smov 48
  %v227 = vld [vmem:[%s225] ss:$16 sm:%s226]
  %vm228 = vcmask 1045508
  %v229 = vsel %vm228, %v227, %v224
  %s230 = scalar_lea.vmem %s0, 141
  %s231 = smov 192
  %v232 = vld [vmem:[%s230] ss:$16 sm:%s231]
  %vm233 = vcmask 1047558
  %v234 = vsel %vm233, %v232, %v229
  %235 = vrot.lane.b32.xlu0 %v234, 80
  %v236 = vpop.permute.xlu0 %235
  %vm237 = vcmask 786048
  %s238 = scalar_lea.vmem %s1, 24
  %239 = vst.msk [vmem:[%s238] sm:$0xff] %vm237, %v236
  %s240 = scalar_lea.vmem %s0, 4
  %s241 = smov 3
  %v242 = vld [vmem:[%s240] ss:$16 sm:%s241]
  %s243 = scalar_lea.vmem %s0, 4
  %s244 = smov 12
  %v245 = vld [vmem:[%s243] ss:$16 sm:%s244]
  %vm246 = vcmask 1043458
  %v247 = vsel %vm246, %v245, %v242
  %s248 = scalar_lea.vmem %s0, 4
  %s249 = smov 48
  %v250 = vld [vmem:[%s248] ss:$16 sm:%s249]
  %vm251 = vcmask 1045508
  %v252 = vsel %vm251, %v250, %v247
  %s253 = scalar_lea.vmem %s0, 4
  %s254 = smov 192
  %v255 = vld [vmem:[%s253] ss:$16 sm:%s254]
  %vm256 = vcmask 1047558
  %v257 = vsel %vm256, %v255, %v252
  %258 = vrot.lane.b32.xlu0 %v257, 64
  %v259 = vpop.permute.xlu0 %258
  %vm260 = vcmask 654848
  %261 = vst.msk [vmem:[%s1] sm:$0xff] %vm260, %v259
  %s262 = scalar_lea.vmem %s0, 12
  %s263 = smov 3
  %v264 = vld [vmem:[%s262] ss:$16 sm:%s263]
  %s265 = scalar_lea.vmem %s0, 12
  %s266 = smov 12
  %v267 = vld [vmem:[%s265] ss:$16 sm:%s266]
  %vm268 = vcmask 1043458
  %v269 = vsel %vm268, %v267, %v264
  %s270 = scalar_lea.vmem %s0, 12
  %s271 = smov 48
  %v272 = vld [vmem:[%s270] ss:$16 sm:%s271]
  %vm273 = vcmask 1045508
  %v274 = vsel %vm273, %v272, %v269
  %s275 = scalar_lea.vmem %s0, 12
  %s276 = smov 192
  %v277 = vld [vmem:[%s275] ss:$16 sm:%s276]
  %vm278 = vcmask 1047558
  %v279 = vsel %vm278, %v277, %v274
  %280 = vrot.lane.b32.xlu0 %v279, 64
  %v281 = vpop.permute.xlu0 %280
  %vm282 = vcmask 654848
  %s283 = scalar_lea.vmem %s1, 8
  %284 = vst.msk [vmem:[%s283] sm:$0xff] %vm282, %v281
  %s285 = scalar_lea.vmem %s0, 132
  %s286 = smov 3
  %v287 = vld [vmem:[%s285] ss:$16 sm:%s286]
  %s288 = scalar_lea.vmem %s0, 132
  %s289 = smov 12
  %v290 = vld [vmem:[%s288] ss:$16 sm:%s289]
  %vm291 = vcmask 1043458
  %v292 = vsel %vm291, %v290, %v287
  %s293 = scalar_lea.vmem %s0, 132
  %s294 = smov 48
  %v295 = vld [vmem:[%s293] ss:$16 sm:%s294]
  %vm296 = vcmask 1045508
  %v297 = vsel %vm296, %v295, %v292
  %s298 = scalar_lea.vmem %s0, 132
  %s299 = smov 192
  %v300 = vld [vmem:[%s298] ss:$16 sm:%s299]
  %vm301 = vcmask 1047558
  %v302 = vsel %vm301, %v300, %v297
  %303 = vrot.lane.b32.xlu0 %v302, 64
  %v304 = vpop.permute.xlu0 %303
  %vm305 = vcmask 654848
  %s306 = scalar_lea.vmem %s1, 16
  %307 = vst.msk [vmem:[%s306] sm:$0xff] %vm305, %v304
  %s308 = scalar_lea.vmem %s0, 140
  %s309 = smov 3
  %v310 = vld [vmem:[%s308] ss:$16 sm:%s309]
  %s311 = scalar_lea.vmem %s0, 140
  %s312 = smov 12
  %v313 = vld [vmem:[%s311] ss:$16 sm:%s312]
  %vm314 = vcmask 1043458
  %v315 = vsel %vm314, %v313, %v310
  %s316 = scalar_lea.vmem %s0, 140
  %s317 = smov 48
  %v318 = vld [vmem:[%s316] ss:$16 sm:%s317]
  %vm319 = vcmask 1045508
  %v320 = vsel %vm319, %v318, %v315
  %s321 = scalar_lea.vmem %s0, 140
  %s322 = smov 192
  %v323 = vld [vmem:[%s321] ss:$16 sm:%s322]
  %vm324 = vcmask 1047558
  %v325 = vsel %vm324, %v323, %v320
  %326 = vrot.lane.b32.xlu0 %v325, 64
  %v327 = vpop.permute.xlu0 %326
  %vm328 = vcmask 654848
  %s329 = scalar_lea.vmem %s1, 24
  %330 = vst.msk [vmem:[%s329] sm:$0xff] %vm328, %v327
  %s331 = scalar_lea.vmem %s0, 3
  %s332 = smov 3
  %v333 = vld [vmem:[%s331] ss:$16 sm:%s332]
  %s334 = scalar_lea.vmem %s0, 3
  %s335 = smov 12
  %v336 = vld [vmem:[%s334] ss:$16 sm:%s335]
  %vm337 = vcmask 1043458
  %v338 = vsel %vm337, %v336, %v333
  %s339 = scalar_lea.vmem %s0, 3
  %s340 = smov 48
  %v341 = vld [vmem:[%s339] ss:$16 sm:%s340]
  %vm342 = vcmask 1045508
  %v343 = vsel %vm342, %v341, %v338
  %s344 = scalar_lea.vmem %s0, 3
  %s345 = smov 192
  %v346 = vld [vmem:[%s344] ss:$16 sm:%s345]
  %vm347 = vcmask 1047558
  %v348 = vsel %vm347, %v346, %v343
  %349 = vrot.lane.b32.xlu0 %v348, 48
  %v350 = vpop.permute.xlu0 %349
  %vm351 = vcmask 523648
  %352 = vst.msk [vmem:[%s1] sm:$0xff] %vm351, %v350
  %s353 = scalar_lea.vmem %s0, 11
  %s354 = smov 3
  %v355 = vld [vmem:[%s353] ss:$16 sm:%s354]
  %s356 = scalar_lea.vmem %s0, 11
  %s357 = smov 12
  %v358 = vld [vmem:[%s356] ss:$16 sm:%s357]
  %vm359 = vcmask 1043458
  %v360 = vsel %vm359, %v358, %v355
  %s361 = scalar_lea.vmem %s0, 11
  %s362 = smov 48
  %v363 = vld [vmem:[%s361] ss:$16 sm:%s362]
  %vm364 = vcmask 1045508
  %v365 = vsel %vm364, %v363, %v360
  %s366 = scalar_lea.vmem %s0, 11
  %s367 = smov 192
  %v368 = vld [vmem:[%s366] ss:$16 sm:%s367]
  %vm369 = vcmask 1047558
  %v370 = vsel %vm369, %v368, %v365
  %371 = vrot.lane.b32.xlu0 %v370, 48
  %v372 = vpop.permute.xlu0 %371
  %vm373 = vcmask 523648
  %s374 = scalar_lea.vmem %s1, 8
  %375 = vst.msk [vmem:[%s374] sm:$0xff] %vm373, %v372
  %s376 = scalar_lea.vmem %s0, 131
  %s377 = smov 3
  %v378 = vld [vmem:[%s376] ss:$16 sm:%s377]
  %s379 = scalar_lea.vmem %s0, 131
  %s380 = smov 12
  %v381 = vld [vmem:[%s379] ss:$16 sm:%s380]
  %vm382 = vcmask 1043458
  %v383 = vsel %vm382, %v381, %v378
  %s384 = scalar_lea.vmem %s0, 131
  %s385 = smov 48
  %v386 = vld [vmem:[%s384] ss:$16 sm:%s385]
  %vm387 = vcmask 1045508
  %v388 = vsel %vm387, %v386, %v383
  %s389 = scalar_lea.vmem %s0, 131
  %s390 = smov 192
  %v391 = vld [vmem:[%s389] ss:$16 sm:%s390]
  %vm392 = vcmask 1047558
  %v393 = vsel %vm392, %v391, %v388
  %394 = vrot.lane.b32.xlu0 %v393, 48
  %v395 = vpop.permute.xlu0 %394
  %vm396 = vcmask 523648
  %s397 = scalar_lea.vmem %s1, 16
  %398 = vst.msk [vmem:[%s397] sm:$0xff] %vm396, %v395
  %s399 = scalar_lea.vmem %s0, 139
  %s400 = smov 3
  %v401 = vld [vmem:[%s399] ss:$16 sm:%s400]
  %s402 = scalar_lea.vmem %s0, 139
  %s403 = smov 12
  %v404 = vld [vmem:[%s402] ss:$16 sm:%s403]
  %vm405 = vcmask 1043458
  %v406 = vsel %vm405, %v404, %v401
  %s407 = scalar_lea.vmem %s0, 139
  %s408 = smov 48
  %v409 = vld [vmem:[%s407] ss:$16 sm:%s408]
  %vm410 = vcmask 1045508
  %v411 = vsel %vm410, %v409, %v406
  %s412 = scalar_lea.vmem %s0, 139
  %s413 = smov 192
  %v414 = vld [vmem:[%s412] ss:$16 sm:%s413]
  %vm415 = vcmask 1047558
  %v416 = vsel %vm415, %v414, %v411
  %417 = vrot.lane.b32.xlu0 %v416, 48
  %v418 = vpop.permute.xlu0 %417
  %vm419 = vcmask 523648
  %s420 = scalar_lea.vmem %s1, 24
  %421 = vst.msk [vmem:[%s420] sm:$0xff] %vm419, %v418
  %s422 = scalar_lea.vmem %s0, 2
  %s423 = smov 3
  %v424 = vld [vmem:[%s422] ss:$16 sm:%s423]
  %s425 = scalar_lea.vmem %s0, 2
  %s426 = smov 12
  %v427 = vld [vmem:[%s425] ss:$16 sm:%s426]
  %vm428 = vcmask 1043458
  %v429 = vsel %vm428, %v427, %v424
  %s430 = scalar_lea.vmem %s0, 2
  %s431 = smov 48
  %v432 = vld [vmem:[%s430] ss:$16 sm:%s431]
  %vm433 = vcmask 1045508
  %v434 = vsel %vm433, %v432, %v429
  %s435 = scalar_lea.vmem %s0, 2
  %s436 = smov 192
  %v437 = vld [vmem:[%s435] ss:$16 sm:%s436]
  %vm438 = vcmask 1047558
  %v439 = vsel %vm438, %v437, %v434
  %440 = vrot.lane.b32.xlu0 %v439, 32
  %v441 = vpop.permute.xlu0 %440
  %vm442 = vcmask 392448
  %443 = vst.msk [vmem:[%s1] sm:$0xff] %vm442, %v441
  %s444 = scalar_lea.vmem %s0, 10
  %s445 = smov 3
  %v446 = vld [vmem:[%s444] ss:$16 sm:%s445]
  %s447 = scalar_lea.vmem %s0, 10
  %s448 = smov 12
  %v449 = vld [vmem:[%s447] ss:$16 sm:%s448]
  %vm450 = vcmask 1043458
  %v451 = vsel %vm450, %v449, %v446
  %s452 = scalar_lea.vmem %s0, 10
  %s453 = smov 48
  %v454 = vld [vmem:[%s452] ss:$16 sm:%s453]
  %vm455 = vcmask 1045508
  %v456 = vsel %vm455, %v454, %v451
  %s457 = scalar_lea.vmem %s0, 10
  %s458 = smov 192
  %v459 = vld [vmem:[%s457] ss:$16 sm:%s458]
  %vm460 = vcmask 1047558
  %v461 = vsel %vm460, %v459, %v456
  %462 = vrot.lane.b32.xlu0 %v461, 32
  %v463 = vpop.permute.xlu0 %462
  %vm464 = vcmask 392448
  %s465 = scalar_lea.vmem %s1, 8
  %466 = vst.msk [vmem:[%s465] sm:$0xff] %vm464, %v463
  %s467 = scalar_lea.vmem %s0, 130
  %s468 = smov 3
  %v469 = vld [vmem:[%s467] ss:$16 sm:%s468]
  %s470 = scalar_lea.vmem %s0, 130
  %s471 = smov 12
  %v472 = vld [vmem:[%s470] ss:$16 sm:%s471]
  %vm473 = vcmask 1043458
  %v474 = vsel %vm473, %v472, %v469
  %s475 = scalar_lea.vmem %s0, 130
  %s476 = smov 48
  %v477 = vld [vmem:[%s475] ss:$16 sm:%s476]
  %vm478 = vcmask 1045508
  %v479 = vsel %vm478, %v477, %v474
  %s480 = scalar_lea.vmem %s0, 130
  %s481 = smov 192
  %v482 = vld [vmem:[%s480] ss:$16 sm:%s481]
  %vm483 = vcmask 1047558
  %v484 = vsel %vm483, %v482, %v479
  %485 = vrot.lane.b32.xlu0 %v484, 32
  %v486 = vpop.permute.xlu0 %485
  %vm487 = vcmask 392448
  %s488 = scalar_lea.vmem %s1, 16
  %489 = vst.msk [vmem:[%s488] sm:$0xff] %vm487, %v486
  %s490 = scalar_lea.vmem %s0, 138
  %s491 = smov 3
  %v492 = vld [vmem:[%s490] ss:$16 sm:%s491]
  %s493 = scalar_lea.vmem %s0, 138
  %s494 = smov 12
  %v495 = vld [vmem:[%s493] ss:$16 sm:%s494]
  %vm496 = vcmask 1043458
  %v497 = vsel %vm496, %v495, %v492
  %s498 = scalar_lea.vmem %s0, 138
  %s499 = smov 48
  %v500 = vld [vmem:[%s498] ss:$16 sm:%s499]
  %vm501 = vcmask 1045508
  %v502 = vsel %vm501, %v500, %v497
  %s503 = scalar_lea.vmem %s0, 138
  %s504 = smov 192
  %v505 = vld [vmem:[%s503] ss:$16 sm:%s504]
  %vm506 = vcmask 1047558
  %v507 = vsel %vm506, %v505, %v502
  %508 = vrot.lane.b32.xlu0 %v507, 32
  %v509 = vpop.permute.xlu0 %508
  %vm510 = vcmask 392448
  %s511 = scalar_lea.vmem %s1, 24
  %512 = vst.msk [vmem:[%s511] sm:$0xff] %vm510, %v509
  %s513 = scalar_lea.vmem %s0, 1
  %s514 = smov 3
  %v515 = vld [vmem:[%s513] ss:$16 sm:%s514]
  %s516 = scalar_lea.vmem %s0, 1
  %s517 = smov 12
  %v518 = vld [vmem:[%s516] ss:$16 sm:%s517]
  %vm519 = vcmask 1043458
  %v520 = vsel %vm519, %v518, %v515
  %s521 = scalar_lea.vmem %s0, 1
  %s522 = smov 48
  %v523 = vld [vmem:[%s521] ss:$16 sm:%s522]
  %vm524 = vcmask 1045508
  %v525 = vsel %vm524, %v523, %v520
  %s526 = scalar_lea.vmem %s0, 1
  %s527 = smov 192
  %v528 = vld [vmem:[%s526] ss:$16 sm:%s527]
  %vm529 = vcmask 1047558
  %v530 = vsel %vm529, %v528, %v525
  %531 = vrot.lane.b32.xlu0 %v530, 16
  %v532 = vpop.permute.xlu0 %531
  %vm533 = vcmask 261248
  %534 = vst.msk [vmem:[%s1] sm:$0xff] %vm533, %v532
  %s535 = scalar_lea.vmem %s0, 9
  %s536 = smov 3
  %v537 = vld [vmem:[%s535] ss:$16 sm:%s536]
  %s538 = scalar_lea.vmem %s0, 9
  %s539 = smov 12
  %v540 = vld [vmem:[%s538] ss:$16 sm:%s539]
  %vm541 = vcmask 1043458
  %v542 = vsel %vm541, %v540, %v537
  %s543 = scalar_lea.vmem %s0, 9
  %s544 = smov 48
  %v545 = vld [vmem:[%s543] ss:$16 sm:%s544]
  %vm546 = vcmask 1045508
  %v547 = vsel %vm546, %v545, %v542
  %s548 = scalar_lea.vmem %s0, 9
  %s549 = smov 192
  %v550 = vld [vmem:[%s548] ss:$16 sm:%s549]
  %vm551 = vcmask 1047558
  %v552 = vsel %vm551, %v550, %v547
  %553 = vrot.lane.b32.xlu0 %v552, 16
  %v554 = vpop.permute.xlu0 %553
  %vm555 = vcmask 261248
  %s556 = scalar_lea.vmem %s1, 8
  %557 = vst.msk [vmem:[%s556] sm:$0xff] %vm555, %v554
  %s558 = scalar_lea.vmem %s0, 129
  %s559 = smov 3
  %v560 = vld [vmem:[%s558] ss:$16 sm:%s559]
  %s561 = scalar_lea.vmem %s0, 129
  %s562 = smov 12
  %v563 = vld [vmem:[%s561] ss:$16 sm:%s562]
  %vm564 = vcmask 1043458
  %v565 = vsel %vm564, %v563, %v560
  %s566 = scalar_lea.vmem %s0, 129
  %s567 = smov 48
  %v568 = vld [vmem:[%s566] ss:$16 sm:%s567]
  %vm569 = vcmask 1045508
  %v570 = vsel %vm569, %v568, %v565
  %s571 = scalar_lea.vmem %s0, 129
  %s572 = smov 192
  %v573 = vld [vmem:[%s571] ss:$16 sm:%s572]
  %vm574 = vcmask 1047558
  %v575 = vsel %vm574, %v573, %v570
  %576 = vrot.lane.b32.xlu0 %v575, 16
  %v577 = vpop.permute.xlu0 %576
  %vm578 = vcmask 261248
  %s579 = scalar_lea.vmem %s1, 16
  %580 = vst.msk [vmem:[%s579] sm:$0xff] %vm578, %v577
  %s581 = scalar_lea.vmem %s0, 137
  %s582 = smov 3
  %v583 = vld [vmem:[%s581] ss:$16 sm:%s582]
  %s584 = scalar_lea.vmem %s0, 137
  %s585 = smov 12
  %v586 = vld [vmem:[%s584] ss:$16 sm:%s585]
  %vm587 = vcmask 1043458
  %v588 = vsel %vm587, %v586, %v583
  %s589 = scalar_lea.vmem %s0, 137
  %s590 = smov 48
  %v591 = vld [vmem:[%s589] ss:$16 sm:%s590]
  %vm592 = vcmask 1045508
  %v593 = vsel %vm592, %v591, %v588
  %s594 = scalar_lea.vmem %s0, 137
  %s595 = smov 192
  %v596 = vld [vmem:[%s594] ss:$16 sm:%s595]
  %vm597 = vcmask 1047558
  %v598 = vsel %vm597, %v596, %v593
  %599 = vrot.lane.b32.xlu0 %v598, 16
  %v600 = vpop.permute.xlu0 %599
  %vm601 = vcmask 261248
  %s602 = scalar_lea.vmem %s1, 24
  %603 = vst.msk [vmem:[%s602] sm:$0xff] %vm601, %v600

// kernel: testnet_forward.1
$region0: #{testnet_forward.1}
  #allocation0 [shape = 'u32[]', space=smem, size = 0x4, offset = 0x4, fixed_abs, tag = 'smem constant byte address 0x4 - core index']
  #allocation1 [shape = 'u32[144,128]{1,0:T(1,128)}', space=vmem, size = 0x12000, scoped, tag = 'internal scratch']
  %s0 = inlined_call_operand.vmem [shape: f32[16,2,14,224], index: 0, kind: input, shape index: {}]
  %s1 = inlined_call_operand.vmem [shape: f32[9,1,1,224], index: 1, kind: input, shape index: {}]
  %s2 = inlined_call_operand.vmem [shape: f32[1,16], index: 2, kind: input, shape index: {}]
  %s3 = inlined_call_operand.vmem [shape: f32[1,16], index: 3, kind: input, shape index: {}]
  %s4 = inlined_call_operand.vmem [shape: f32[224,16], index: 4, kind: input, shape index: {}]
  %s5 = inlined_call_operand.vmem [shape: f32[16,224], index: 5, kind: input, shape index: {}]
  %s6 = inlined_call_operand.vmem [shape: f32[14,224,10], index: 6, kind: input, shape index: {}]
  %s7 = inlined_call_operand.vmem [shape: f32[1,10], index: 7, kind: input, shape index: {}]
  %s8 = inlined_call_operand.hbm [shape: f32[2,10], index: 8, kind: output, shape index: {}]
  %s9 = sld [smem:[#allocation0]]
  $region42: #{testnet_forward.1} parent=0
    _
  %s11 = ssub.s32 1, %s9
  %s12 = scalar_select 0, %s11, %s9
  $region1: #{testnet_forward.1} parent=0
    #allocation2 [shape = 'u8[1024]{0}', space=vmem, size = 0x400, scoped, tag = 'output window, operand 0, single buffered']
    #allocation3 [shape = 's32[1]{0}', space=sflag, size = 0x4, scoped, tag = 'scoped memory for testnet_forward.1']
    %13 = vsyncpa [#allocation3], 0
    // Predicated region
    $region2: #{testnet_forward.1} parent=1 // pred_check
      _
    $region3: #{testnet_forward.1} parent=1 // pred_check_branch
      %15 = sbr.rel (0) target = $region5
    $region4: #{testnet_forward.1} parent=1 // pred_region
      _
    $region5: #{testnet_forward.1} parent=1 // pred_fallthru
      _
    // Predicated region
    $region6: #{testnet_forward.1} parent=1 // pred_check
      _
    $region7: #{testnet_forward.1} parent=1 // pred_check_branch
      %17 = sbr.rel (0) target = $region9
    $region8: #{testnet_forward.1} parent=1 // pred_region
      _
    $region9: #{testnet_forward.1} parent=1 // pred_fallthru
      _
    // Predicated region
    $region10: #{testnet_forward.1} parent=1 // pred_check
      _
    $region11: #{testnet_forward.1} parent=1 // pred_check_branch
      %19 = sbr.rel (0) target = $region13
    $region12: #{testnet_forward.1} parent=1 // pred_region
      _
    $region13: #{testnet_forward.1} parent=1 // pred_fallthru
      _
    // Predicated region
    $region14: #{testnet_forward.1} parent=1 // pred_check
      _
    $region15: #{testnet_forward.1} parent=1 // pred_check_branch
      %21 = sbr.rel (0) target = $region17
    $region16: #{testnet_forward.1} parent=1 // pred_region
      _
    $region17: #{testnet_forward.1} parent=1 // pred_fallthru
      _
    // Predicated region
    $region18: #{testnet_forward.1} parent=1 // pred_check
      _
    $region19: #{testnet_forward.1} parent=1 // pred_check_branch
      %23 = sbr.rel (0) target = $region21
    $region20: #{testnet_forward.1} parent=1 // pred_region
      _
    $region21: #{testnet_forward.1} parent=1 // pred_fallthru
      _
    // Predicated region
    $region22: #{testnet_forward.1} parent=1 // pred_check
      _
    $region23: #{testnet_forward.1} parent=1 // pred_check_branch
      %25 = sbr.rel (0) target = $region25
    $region24: #{testnet_forward.1} parent=1 // pred_region
      _
    $region25: #{testnet_forward.1} parent=1 // pred_fallthru
      _
    // Predicated region
    $region26: #{testnet_forward.1} parent=1 // pred_check
      _
    $region27: #{testnet_forward.1} parent=1 // pred_check_branch
      %27 = sbr.rel (0) target = $region29
    $region28: #{testnet_forward.1} parent=1 // pred_region
      _
    $region29: #{testnet_forward.1} parent=1 // pred_fallthru
      _
    // Predicated region
    $region30: #{testnet_forward.1} parent=1 // pred_check
      _
    $region31: #{testnet_forward.1} parent=1 // pred_check_branch
      %29 = sbr.rel (0) target = $region33
    $region32: #{testnet_forward.1} parent=1 // pred_region
      _
    $region33: #{testnet_forward.1} parent=1 // pred_fallthru
      _
    %v30 = vld [vmem:[%s0] sm:$0xff]
    %v31 = vld [vmem:[%s0 + $0x8] sm:$0xff]
    %v32 = vld [vmem:[%s0 + $0x10] sm:$0x3f]
    %v33 = vld [vmem:[%s0 + $0x18] sm:$0x3f]
    %v34 = vld [vmem:[%s0 + $0x20] sm:$0xff]
    %v35 = vld [vmem:[%s0 + $0x28] sm:$0xff]
    %v36 = vld [vmem:[%s0 + $0x30] sm:$0x3f]
    %v37 = vld [vmem:[%s0 + $0x38] sm:$0x3f]
    %v38 = vld [vmem:[%s1] sm:$0x3]
    %v40 = vlaneseq
    %v41 = vshrl.u32 %v40, 7
    %v42 = vsub.s32 0, %v41
    %v43 = vrot.slane %v38, %v42
    %v44 = vlaneseq
    %v45 = vshrl.u32 %v44, 7
    %v46 = vsub.s32 1, %v45
    %v47 = vrot.slane %v38, %v46
    %v50 = vmul.f32 %v30, %v43
    %v51 = vmul.f32 %v31, %v47
    %v52 = vmul.f32 %v32, %v43
    %v53 = vmul.f32 %v33, %v47
    %v54 = vmul.f32 %v34, %v43
    %v55 = vmul.f32 %v35, %v47
    %v56 = vmul.f32 %v36, %v43
    %v57 = vmul.f32 %v37, %v47
    %s58 = scalar_lea.vmem %s0, 64
    %v59 = vld [vmem:[%s58] sm:$0xff]
    %v60 = vld [vmem:[%s58 + $0x8] sm:$0xff]
    %v61 = vld [vmem:[%s58 + $0x10] sm:$0x3f]
    %v62 = vld [vmem:[%s58 + $0x18] sm:$0x3f]
    %v63 = vld [vmem:[%s58 + $0x20] sm:$0xff]
    %v64 = vld [vmem:[%s58 + $0x28] sm:$0xff]
    %v65 = vld [vmem:[%s58 + $0x30] sm:$0x3f]
    %v66 = vld [vmem:[%s58 + $0x38] sm:$0x3f]
    %s67 = scalar_lea.vmem %s1, 2
    %v68 = vld [vmem:[%s67] sm:$0x3]
    %v70 = vlaneseq
    %v71 = vshrl.u32 %v70, 7
    %v72 = vsub.s32 0, %v71
    %v73 = vrot.slane %v68, %v72
    %v74 = vlaneseq
    %v75 = vshrl.u32 %v74, 7
    %v76 = vsub.s32 1, %v75
    %v77 = vrot.slane %v68, %v76
    %v80 = vmul.f32 %v59, %v73
    %v81 = vmul.f32 %v60, %v77
    %v82 = vmul.f32 %v61, %v73
    %v83 = vmul.f32 %v62, %v77
    %v84 = vmul.f32 %v63, %v73
    %v85 = vmul.f32 %v64, %v77
    %v86 = vmul.f32 %v65, %v73
    %v87 = vmul.f32 %v66, %v77
    %v88 = vadd.f32 %v50, %v80
    %v89 = vadd.f32 %v51, %v81
    %v90 = vadd.f32 %v52, %v82
    %v91 = vadd.f32 %v53, %v83
    %v92 = vadd.f32 %v54, %v84
    %v93 = vadd.f32 %v55, %v85
    %v94 = vadd.f32 %v56, %v86
    %v95 = vadd.f32 %v57, %v87
    %s96 = scalar_lea.vmem %s0, 128
    %v97 = vld [vmem:[%s96] sm:$0xff]
    %v98 = vld [vmem:[%s96 + $0x8] sm:$0xff]
    %v99 = vld [vmem:[%s96 + $0x10] sm:$0x3f]
    %v100 = vld [vmem:[%s96 + $0x18] sm:$0x3f]
    %v101 = vld [vmem:[%s96 + $0x20] sm:$0xff]
    %v102 = vld [vmem:[%s96 + $0x28] sm:$0xff]
    %v103 = vld [vmem:[%s96 + $0x30] sm:$0x3f]
    %v104 = vld [vmem:[%s96 + $0x38] sm:$0x3f]
    %s105 = scalar_lea.vmem %s1, 4
    %v106 = vld [vmem:[%s105] sm:$0x3]
    %v108 = vlaneseq
    %v109 = vshrl.u32 %v108, 7
    %v110 = vsub.s32 0, %v109
    %v111 = vrot.slane %v106, %v110
    %v112 = vlaneseq
    %v113 = vshrl.u32 %v112, 7
    %v114 = vsub.s32 1, %v113
    %v115 = vrot.slane %v106, %v114
    %v118 = vmul.f32 %v97, %v111
    %v119 = vmul.f32 %v98, %v115
    %v120 = vmul.f32 %v99, %v111
    %v121 = vmul.f32 %v100, %v115
    %v122 = vmul.f32 %v101, %v111
    %v123 = vmul.f32 %v102, %v115
    %v124 = vmul.f32 %v103, %v111
    %v125 = vmul.f32 %v104, %v115
    %v126 = vadd.f32 %v88, %v118
    %v127 = vadd.f32 %v89, %v119
    %v128 = vadd.f32 %v90, %v120
    %v129 = vadd.f32 %v91, %v121
    %v130 = vadd.f32 %v92, %v122
    %v131 = vadd.f32 %v93, %v123
    %v132 = vadd.f32 %v94, %v124
    %v133 = vadd.f32 %v95, %v125
    %s134 = scalar_lea.vmem %s0, 256
    %v135 = vld [vmem:[%s134] sm:$0xff]
    %v136 = vld [vmem:[%s134 + $0x8] sm:$0xff]
    %v137 = vld [vmem:[%s134 + $0x10] sm:$0x3f]
    %v138 = vld [vmem:[%s134 + $0x18] sm:$0x3f]
    %v139 = vld [vmem:[%s134 + $0x20] sm:$0xff]
    %v140 = vld [vmem:[%s134 + $0x28] sm:$0xff]
    %v141 = vld [vmem:[%s134 + $0x30] sm:$0x3f]
    %v142 = vld [vmem:[%s134 + $0x38] sm:$0x3f]
    %s143 = scalar_lea.vmem %s1, 6
    %v144 = vld [vmem:[%s143] sm:$0x3]
    %v146 = vlaneseq
    %v147 = vshrl.u32 %v146, 7
    %v148 = vsub.s32 0, %v147
    %v149 = vrot.slane %v144, %v148
    %v150 = vlaneseq
    %v151 = vshrl.u32 %v150, 7
    %v152 = vsub.s32 1, %v151
    %v153 = vrot.slane %v144, %v152
    %v156 = vmul.f32 %v135, %v149
    %v157 = vmul.f32 %v136, %v153
    %v158 = vmul.f32 %v137, %v149
    %v159 = vmul.f32 %v138, %v153
    %v160 = vmul.f32 %v139, %v149
    %v161 = vmul.f32 %v140, %v153
    %v162 = vmul.f32 %v141, %v149
    %v163 = vmul.f32 %v142, %v153
    %v164 = vadd.f32 %v126, %v156
    %v165 = vadd.f32 %v127, %v157
    %v166 = vadd.f32 %v128, %v158
    %v167 = vadd.f32 %v129, %v159
    %v168 = vadd.f32 %v130, %v160
    %v169 = vadd.f32 %v131, %v161
    %v170 = vadd.f32 %v132, %v162
    %v171 = vadd.f32 %v133, %v163
    %s172 = scalar_lea.vmem %s0, 320
    %v173 = vld [vmem:[%s172] sm:$0xff]
    %v174 = vld [vmem:[%s172 + $0x8] sm:$0xff]
    %v175 = vld [vmem:[%s172 + $0x10] sm:$0x3f]
    %v176 = vld [vmem:[%s172 + $0x18] sm:$0x3f]
    %v177 = vld [vmem:[%s172 + $0x20] sm:$0xff]
    %v178 = vld [vmem:[%s172 + $0x28] sm:$0xff]
    %v179 = vld [vmem:[%s172 + $0x30] sm:$0x3f]
    %v180 = vld [vmem:[%s172 + $0x38] sm:$0x3f]
    %s181 = scalar_lea.vmem %s1, 8
    %v182 = vld [vmem:[%s181] sm:$0x3]
    %v184 = vlaneseq
    %v185 = vshrl.u32 %v184, 7
    %v186 = vsub.s32 0, %v185
    %v187 = vrot.slane %v182, %v186
    %v188 = vlaneseq
    %v189 = vshrl.u32 %v188, 7
    %v190 = vsub.s32 1, %v189
    %v191 = vrot.slane %v182, %v190
    %v194 = vmul.f32 %v173, %v187
    %v195 = vmul.f32 %v174, %v191
    %v196 = vmul.f32 %v175, %v187
    %v197 = vmul.f32 %v176, %v191
    %v198 = vmul.f32 %v177, %v187
    %v199 = vmul.f32 %v178, %v191
    %v200 = vmul.f32 %v179, %v187
    %v201 = vmul.f32 %v180, %v191
    %v202 = vadd.f32 %v164, %v194
    %v203 = vadd.f32 %v165, %v195
    %v204 = vadd.f32 %v166, %v196
    %v205 = vadd.f32 %v167, %v197
    %v206 = vadd.f32 %v168, %v198
    %v207 = vadd.f32 %v169, %v199
    %v208 = vadd.f32 %v170, %v200
    %v209 = vadd.f32 %v171, %v201
    %s210 = scalar_lea.vmem %s0, 384
    %v211 = vld [vmem:[%s210] sm:$0xff]
    %v212 = vld [vmem:[%s210 + $0x8] sm:$0xff]
    %v213 = vld [vmem:[%s210 + $0x10] sm:$0x3f]
    %v214 = vld [vmem:[%s210 + $0x18] sm:$0x3f]
    %v215 = vld [vmem:[%s210 + $0x20] sm:$0xff]
    %v216 = vld [vmem:[%s210 + $0x28] sm:$0xff]
    %v217 = vld [vmem:[%s210 + $0x30] sm:$0x3f]
    %v218 = vld [vmem:[%s210 + $0x38] sm:$0x3f]
    %s219 = scalar_lea.vmem %s1, 10
    %v220 = vld [vmem:[%s219] sm:$0x3]
    %v222 = vlaneseq
    %v223 = vshrl.u32 %v222, 7
    %v224 = vsub.s32 0, %v223
    %v225 = vrot.slane %v220, %v224
    %v226 = vlaneseq
    %v227 = vshrl.u32 %v226, 7
    %v228 = vsub.s32 1, %v227
    %v229 = vrot.slane %v220, %v228
    %v232 = vmul.f32 %v211, %v225
    %v233 = vmul.f32 %v212, %v229
    %v234 = vmul.f32 %v213, %v225
    %v235 = vmul.f32 %v214, %v229
    %v236 = vmul.f32 %v215, %v225
    %v237 = vmul.f32 %v216, %v229
    %v238 = vmul.f32 %v217, %v225
    %v239 = vmul.f32 %v218, %v229
    %v240 = vadd.f32 %v202, %v232
    %v241 = vadd.f32 %v203, %v233
    %v242 = vadd.f32 %v204, %v234
    %v243 = vadd.f32 %v205, %v235
    %v244 = vadd.f32 %v206, %v236
    %v245 = vadd.f32 %v207, %v237
    %v246 = vadd.f32 %v208, %v238
    %v247 = vadd.f32 %v209, %v239
    %s248 = scalar_lea.vmem %s0, 512
    %v249 = vld [vmem:[%s248] sm:$0xff]
    %v250 = vld [vmem:[%s248 + $0x8] sm:$0xff]
    %v251 = vld [vmem:[%s248 + $0x10] sm:$0x3f]
    %v252 = vld [vmem:[%s248 + $0x18] sm:$0x3f]
    %v253 = vld [vmem:[%s248 + $0x20] sm:$0xff]
    %v254 = vld [vmem:[%s248 + $0x28] sm:$0xff]
    %v255 = vld [vmem:[%s248 + $0x30] sm:$0x3f]
    %v256 = vld [vmem:[%s248 + $0x38] sm:$0x3f]
    %s257 = scalar_lea.vmem %s1, 12
    %v258 = vld [vmem:[%s257] sm:$0x3]
    %v260 = vlaneseq
    %v261 = vshrl.u32 %v260, 7
    %v262 = vsub.s32 0, %v261
    %v263 = vrot.slane %v258, %v262
    %v264 = vlaneseq
    %v265 = vshrl.u32 %v264, 7
    %v266 = vsub.s32 1, %v265
    %v267 = vrot.slane %v258, %v266
    %v270 = vmul.f32 %v249, %v263
    %v271 = vmul.f32 %v250, %v267
    %v272 = vmul.f32 %v251, %v263
    %v273 = vmul.f32 %v252, %v267
    %v274 = vmul.f32 %v253, %v263
    %v275 = vmul.f32 %v254, %v267
    %v276 = vmul.f32 %v255, %v263
    %v277 = vmul.f32 %v256, %v267
    %v278 = vadd.f32 %v240, %v270
    %v279 = vadd.f32 %v241, %v271
    %v280 = vadd.f32 %v242, %v272
    %v281 = vadd.f32 %v243, %v273
    %v282 = vadd.f32 %v244, %v274
    %v283 = vadd.f32 %v245, %v275
    %v284 = vadd.f32 %v246, %v276
    %v285 = vadd.f32 %v247, %v277
    %s286 = scalar_lea.vmem %s0, 576
    %v287 = vld [vmem:[%s286] sm:$0xff]
    %v288 = vld [vmem:[%s286 + $0x8] sm:$0xff]
    %v289 = vld [vmem:[%s286 + $0x10] sm:$0x3f]
    %v290 = vld [vmem:[%s286 + $0x18] sm:$0x3f]
    %v291 = vld [vmem:[%s286 + $0x20] sm:$0xff]
    %v292 = vld [vmem:[%s286 + $0x28] sm:$0xff]
    %v293 = vld [vmem:[%s286 + $0x30] sm:$0x3f]
    %v294 = vld [vmem:[%s286 + $0x38] sm:$0x3f]
    %s295 = scalar_lea.vmem %s1, 14
    %v296 = vld [vmem:[%s295] sm:$0x3]
    %v298 = vlaneseq
    %v299 = vshrl.u32 %v298, 7
    %v300 = vsub.s32 0, %v299
    %v301 = vrot.slane %v296, %v300
    %v302 = vlaneseq
    %v303 = vshrl.u32 %v302, 7
    %v304 = vsub.s32 1, %v303
    %v305 = vrot.slane %v296, %v304
    %v308 = vmul.f32 %v287, %v301
    %v309 = vmul.f32 %v288, %v305
    %v310 = vmul.f32 %v289, %v301
    %v311 = vmul.f32 %v290, %v305
    %v312 = vmul.f32 %v291, %v301
    %v313 = vmul.f32 %v292, %v305
    %v314 = vmul.f32 %v293, %v301
    %v315 = vmul.f32 %v294, %v305
    %v316 = vadd.f32 %v278, %v308
    %v317 = vadd.f32 %v279, %v309
    %v318 = vadd.f32 %v280, %v310
    %v319 = vadd.f32 %v281, %v311
    %v320 = vadd.f32 %v282, %v312
    %v321 = vadd.f32 %v283, %v313
    %v322 = vadd.f32 %v284, %v314
    %v323 = vadd.f32 %v285, %v315
    %s324 = scalar_lea.vmem %s0, 640
    %v325 = vld [vmem:[%s324] sm:$0xff]
    %v326 = vld [vmem:[%s324 + $0x8] sm:$0xff]
    %v327 = vld [vmem:[%s324 + $0x10] sm:$0x3f]
    %v328 = vld [vmem:[%s324 + $0x18] sm:$0x3f]
    %v329 = vld [vmem:[%s324 + $0x20] sm:$0xff]
    %v330 = vld [vmem:[%s324 + $0x28] sm:$0xff]
    %v331 = vld [vmem:[%s324 + $0x30] sm:$0x3f]
    %v332 = vld [vmem:[%s324 + $0x38] sm:$0x3f]
    %s333 = scalar_lea.vmem %s1, 16
    %v334 = vld [vmem:[%s333] sm:$0x3]
    %v336 = vlaneseq
    %v337 = vshrl.u32 %v336, 7
    %v338 = vsub.s32 0, %v337
    %v339 = vrot.slane %v334, %v338
    %v340 = vlaneseq
    %v341 = vshrl.u32 %v340, 7
    %v342 = vsub.s32 1, %v341
    %v343 = vrot.slane %v334, %v342
    %v346 = vmul.f32 %v325, %v339
    %v347 = vmul.f32 %v326, %v343
    %v348 = vmul.f32 %v327, %v339
    %v349 = vmul.f32 %v328, %v343
    %v350 = vmul.f32 %v329, %v339
    %v351 = vmul.f32 %v330, %v343
    %v352 = vmul.f32 %v331, %v339
    %v353 = vmul.f32 %v332, %v343
    %v354 = vadd.f32 %v316, %v346
    %v355 = vadd.f32 %v317, %v347
    %v356 = vadd.f32 %v318, %v348
    %v357 = vadd.f32 %v319, %v349
    %v358 = vadd.f32 %v320, %v350
    %v359 = vadd.f32 %v321, %v351
    %v360 = vadd.f32 %v322, %v352
    %v361 = vadd.f32 %v323, %v353
    %v362 = vmul.f32 %v59, %v43
    %v363 = vmul.f32 %v60, %v47
    %v364 = vmul.f32 %v61, %v43
    %v365 = vmul.f32 %v62, %v47
    %v366 = vmul.f32 %v63, %v43
    %v367 = vmul.f32 %v64, %v47
    %v368 = vmul.f32 %v65, %v43
    %v369 = vmul.f32 %v66, %v47
    %v370 = vmul.f32 %v97, %v73
    %v371 = vmul.f32 %v98, %v77
    %v372 = vmul.f32 %v99, %v73
    %v373 = vmul.f32 %v100, %v77
    %v374 = vmul.f32 %v101, %v73
    %v375 = vmul.f32 %v102, %v77
    %v376 = vmul.f32 %v103, %v73
    %v377 = vmul.f32 %v104, %v77
    %v378 = vadd.f32 %v362, %v370
    %v379 = vadd.f32 %v363, %v371
    %v380 = vadd.f32 %v364, %v372
    %v381 = vadd.f32 %v365, %v373
    %v382 = vadd.f32 %v366, %v374
    %v383 = vadd.f32 %v367, %v375
    %v384 = vadd.f32 %v368, %v376
    %v385 = vadd.f32 %v369, %v377
    %s386 = scalar_lea.vmem %s0, 192
    %v387 = vld [vmem:[%s386] sm:$0xff]
    %v388 = vld [vmem:[%s386 + $0x8] sm:$0xff]
    %v389 = vld [vmem:[%s386 + $0x10] sm:$0x3f]
    %v390 = vld [vmem:[%s386 + $0x18] sm:$0x3f]
    %v391 = vld [vmem:[%s386 + $0x20] sm:$0xff]
    %v392 = vld [vmem:[%s386 + $0x28] sm:$0xff]
    %v393 = vld [vmem:[%s386 + $0x30] sm:$0x3f]
    %v394 = vld [vmem:[%s386 + $0x38] sm:$0x3f]
    %v395 = vmul.f32 %v387, %v111
    %v396 = vmul.f32 %v388, %v115
    %v397 = vmul.f32 %v389, %v111
    %v398 = vmul.f32 %v390, %v115
    %v399 = vmul.f32 %v391, %v111
    %v400 = vmul.f32 %v392, %v115
    %v401 = vmul.f32 %v393, %v111
    %v402 = vmul.f32 %v394, %v115
    %v403 = vadd.f32 %v378, %v395
    %v404 = vadd.f32 %v379, %v396
    %v405 = vadd.f32 %v380, %v397
    %v406 = vadd.f32 %v381, %v398
    %v407 = vadd.f32 %v382, %v399
    %v408 = vadd.f32 %v383, %v400
    %v409 = vadd.f32 %v384, %v401
    %v410 = vadd.f32 %v385, %v402
    %v411 = vmul.f32 %v173, %v149
    %v412 = vmul.f32 %v174, %v153
    %v413 = vmul.f32 %v175, %v149
    %v414 = vmul.f32 %v176, %v153
    %v415 = vmul.f32 %v177, %v149
    %v416 = vmul.f32 %v178, %v153
    %v417 = vmul.f32 %v179, %v149
    %v418 = vmul.f32 %v180, %v153
    %v419 = vadd.f32 %v403, %v411
    %v420 = vadd.f32 %v404, %v412
    %v421 = vadd.f32 %v405, %v413
    %v422 = vadd.f32 %v406, %v414
    %v423 = vadd.f32 %v407, %v415
    %v424 = vadd.f32 %v408, %v416
    %v425 = vadd.f32 %v409, %v417
    %v426 = vadd.f32 %v410, %v418
    %v427 = vmul.f32 %v211, %v187
    %v428 = vmul.f32 %v212, %v191
    %v429 = vmul.f32 %v213, %v187
    %v430 = vmul.f32 %v214, %v191
    %v431 = vmul.f32 %v215, %v187
    %v432 = vmul.f32 %v216, %v191
    %v433 = vmul.f32 %v217, %v187
    %v434 = vmul.f32 %v218, %v191
    %v435 = vadd.f32 %v419, %v427
    %v436 = vadd.f32 %v420, %v428
    %v437 = vadd.f32 %v421, %v429
    %v438 = vadd.f32 %v422, %v430
    %v439 = vadd.f32 %v423, %v431
    %v440 = vadd.f32 %v424, %v432
    %v441 = vadd.f32 %v425, %v433
    %v442 = vadd.f32 %v426, %v434
    %s443 = scalar_lea.vmem %s0, 448
    %v444 = vld [vmem:[%s443] sm:$0xff]
    %v445 = vld [vmem:[%s443 + $0x8] sm:$0xff]
    %v446 = vld [vmem:[%s443 + $0x10] sm:$0x3f]
    %v447 = vld [vmem:[%s443 + $0x18] sm:$0x3f]
    %v448 = vld [vmem:[%s443 + $0x20] sm:$0xff]
    %v449 = vld [vmem:[%s443 + $0x28] sm:$0xff]
    %v450 = vld [vmem:[%s443 + $0x30] sm:$0x3f]
    %v451 = vld [vmem:[%s443 + $0x38] sm:$0x3f]
    %v452 = vmul.f32 %v444, %v225
    %v453 = vmul.f32 %v445, %v229
    %v454 = vmul.f32 %v446, %v225
    %v455 = vmul.f32 %v447, %v229
    %v456 = vmul.f32 %v448, %v225
    %v457 = vmul.f32 %v449, %v229
    %v458 = vmul.f32 %v450, %v225
    %v459 = vmul.f32 %v451, %v229
    %v460 = vadd.f32 %v435, %v452
    %v461 = vadd.f32 %v436, %v453
    %v462 = vadd.f32 %v437, %v454
    %v463 = vadd.f32 %v438, %v455
    %v464 = vadd.f32 %v439, %v456
    %v465 = vadd.f32 %v440, %v457
    %v466 = vadd.f32 %v441, %v458
    %v467 = vadd.f32 %v442, %v459
    %v468 = vmul.f32 %v287, %v263
    %v469 = vmul.f32 %v288, %v267
    %v470 = vmul.f32 %v289, %v263
    %v471 = vmul.f32 %v290, %v267
    %v472 = vmul.f32 %v291, %v263
    %v473 = vmul.f32 %v292, %v267
    %v474 = vmul.f32 %v293, %v263
    %v475 = vmul.f32 %v294, %v267
    %v476 = vadd.f32 %v460, %v468
    %v477 = vadd.f32 %v461, %v469
    %v478 = vadd.f32 %v462, %v470
    %v479 = vadd.f32 %v463, %v471
    %v480 = vadd.f32 %v464, %v472
    %v481 = vadd.f32 %v465, %v473
    %v482 = vadd.f32 %v466, %v474
    %v483 = vadd.f32 %v467, %v475
    %v484 = vmul.f32 %v325, %v301
    %v485 = vmul.f32 %v326, %v305
    %v486 = vmul.f32 %v327, %v301
    %v487 = vmul.f32 %v328, %v305
    %v488 = vmul.f32 %v329, %v301
    %v489 = vmul.f32 %v330, %v305
    %v490 = vmul.f32 %v331, %v301
    %v491 = vmul.f32 %v332, %v305
    %v492 = vadd.f32 %v476, %v484
    %v493 = vadd.f32 %v477, %v485
    %v494 = vadd.f32 %v478, %v486
    %v495 = vadd.f32 %v479, %v487
    %v496 = vadd.f32 %v480, %v488
    %v497 = vadd.f32 %v481, %v489
    %v498 = vadd.f32 %v482, %v490
    %v499 = vadd.f32 %v483, %v491
    %s500 = scalar_lea.vmem %s0, 704
    %v501 = vld [vmem:[%s500] sm:$0xff]
    %v502 = vld [vmem:[%s500 + $0x8] sm:$0xff]
    %v503 = vld [vmem:[%s500 + $0x10] sm:$0x3f]
    %v504 = vld [vmem:[%s500 + $0x18] sm:$0x3f]
    %v505 = vld [vmem:[%s500 + $0x20] sm:$0xff]
    %v506 = vld [vmem:[%s500 + $0x28] sm:$0xff]
    %v507 = vld [vmem:[%s500 + $0x30] sm:$0x3f]
    %v508 = vld [vmem:[%s500 + $0x38] sm:$0x3f]
    %v509 = vmul.f32 %v501, %v339
    %v510 = vmul.f32 %v502, %v343
    %v511 = vmul.f32 %v503, %v339
    %v512 = vmul.f32 %v504, %v343
    %v513 = vmul.f32 %v505, %v339
    %v514 = vmul.f32 %v506, %v343
    %v515 = vmul.f32 %v507, %v339
    %v516 = vmul.f32 %v508, %v343
    %v517 = vadd.f32 %v492, %v509
    %v518 = vadd.f32 %v493, %v510
    %v519 = vadd.f32 %v494, %v511
    %v520 = vadd.f32 %v495, %v512
    %v521 = vadd.f32 %v496, %v513
    %v522 = vadd.f32 %v497, %v514
    %v523 = vadd.f32 %v498, %v515
    %v524 = vadd.f32 %v499, %v516
    %v525 = vmax.f32 %v354, %v517
    %v526 = vmax.f32 %v355, %v518
    %v527 = vmax.f32 %v356, %v519
    %v528 = vmax.f32 %v357, %v520
    %v529 = vmax.f32 %v358, %v521
    %v530 = vmax.f32 %v359, %v522
    %v531 = vmax.f32 %v360, %v523
    %v532 = vmax.f32 %v361, %v524
    %v533 = vmul.f32 %v135, %v43
    %v534 = vmul.f32 %v136, %v47
    %v535 = vmul.f32 %v137, %v43
    %v536 = vmul.f32 %v138, %v47
    %v537 = vmul.f32 %v139, %v43
    %v538 = vmul.f32 %v140, %v47
    %v539 = vmul.f32 %v141, %v43
    %v540 = vmul.f32 %v142, %v47
    %v541 = vmul.f32 %v173, %v73
    %v542 = vmul.f32 %v174, %v77
    %v543 = vmul.f32 %v175, %v73
    %v544 = vmul.f32 %v176, %v77
    %v545 = vmul.f32 %v177, %v73
    %v546 = vmul.f32 %v178, %v77
    %v547 = vmul.f32 %v179, %v73
    %v548 = vmul.f32 %v180, %v77
    %v549 = vadd.f32 %v533, %v541
    %v550 = vadd.f32 %v534, %v542
    %v551 = vadd.f32 %v535, %v543
    %v552 = vadd.f32 %v536, %v544
    %v553 = vadd.f32 %v537, %v545
    %v554 = vadd.f32 %v538, %v546
    %v555 = vadd.f32 %v539, %v547
    %v556 = vadd.f32 %v540, %v548
    %v557 = vmul.f32 %v211, %v111
    %v558 = vmul.f32 %v212, %v115
    %v559 = vmul.f32 %v213, %v111
    %v560 = vmul.f32 %v214, %v115
    %v561 = vmul.f32 %v215, %v111
    %v562 = vmul.f32 %v216, %v115
    %v563 = vmul.f32 %v217, %v111
    %v564 = vmul.f32 %v218, %v115
    %v565 = vadd.f32 %v549, %v557
    %v566 = vadd.f32 %v550, %v558
    %v567 = vadd.f32 %v551, %v559
    %v568 = vadd.f32 %v552, %v560
    %v569 = vadd.f32 %v553, %v561
    %v570 = vadd.f32 %v554, %v562
    %v571 = vadd.f32 %v555, %v563
    %v572 = vadd.f32 %v556, %v564
    %v573 = vmul.f32 %v249, %v149
    %v574 = vmul.f32 %v250, %v153
    %v575 = vmul.f32 %v251, %v149
    %v576 = vmul.f32 %v252, %v153
    %v577 = vmul.f32 %v253, %v149
    %v578 = vmul.f32 %v254, %v153
    %v579 = vmul.f32 %v255, %v149
    %v580 = vmul.f32 %v256, %v153
    %v581 = vadd.f32 %v565, %v573
    %v582 = vadd.f32 %v566, %v574
    %v583 = vadd.f32 %v567, %v575
    %v584 = vadd.f32 %v568, %v576
    %v585 = vadd.f32 %v569, %v577
    %v586 = vadd.f32 %v570, %v578
    %v587 = vadd.f32 %v571, %v579
    %v588 = vadd.f32 %v572, %v580
    %v589 = vmul.f32 %v287, %v187
    %v590 = vmul.f32 %v288, %v191
    %v591 = vmul.f32 %v289, %v187
    %v592 = vmul.f32 %v290, %v191
    %v593 = vmul.f32 %v291, %v187
    %v594 = vmul.f32 %v292, %v191
    %v595 = vmul.f32 %v293, %v187
    %v596 = vmul.f32 %v294, %v191
    %v597 = vadd.f32 %v581, %v589
    %v598 = vadd.f32 %v582, %v590
    %v599 = vadd.f32 %v583, %v591
    %v600 = vadd.f32 %v584, %v592
    %v601 = vadd.f32 %v585, %v593
    %v602 = vadd.f32 %v586, %v594
    %v603 = vadd.f32 %v587, %v595
    %v604 = vadd.f32 %v588, %v596
    %v605 = vmul.f32 %v325, %v225
    %v606 = vmul.f32 %v326, %v229
    %v607 = vmul.f32 %v327, %v225
    %v608 = vmul.f32 %v328, %v229
    %v609 = vmul.f32 %v329, %v225
    %v610 = vmul.f32 %v330, %v229
    %v611 = vmul.f32 %v331, %v225
    %v612 = vmul.f32 %v332, %v229
    %v613 = vadd.f32 %v597, %v605
    %v614 = vadd.f32 %v598, %v606
    %v615 = vadd.f32 %v599, %v607
    %v616 = vadd.f32 %v600, %v608
    %v617 = vadd.f32 %v601, %v609
    %v618 = vadd.f32 %v602, %v610
    %v619 = vadd.f32 %v603, %v611
    %v620 = vadd.f32 %v604, %v612
    %s621 = scalar_lea.vmem %s0, 768
    %v622 = vld [vmem:[%s621] sm:$0xff]
    %v623 = vld [vmem:[%s621 + $0x8] sm:$0xff]
    %v624 = vld [vmem:[%s621 + $0x10] sm:$0x3f]
    %v625 = vld [vmem:[%s621 + $0x18] sm:$0x3f]
    %v626 = vld [vmem:[%s621 + $0x20] sm:$0xff]
    %v627 = vld [vmem:[%s621 + $0x28] sm:$0xff]
    %v628 = vld [vmem:[%s621 + $0x30] sm:$0x3f]
    %v629 = vld [vmem:[%s621 + $0x38] sm:$0x3f]
    %v630 = vmul.f32 %v622, %v263
    %v631 = vmul.f32 %v623, %v267
    %v632 = vmul.f32 %v624, %v263
    %v633 = vmul.f32 %v625, %v267
    %v634 = vmul.f32 %v626, %v263
    %v635 = vmul.f32 %v627, %v267
    %v636 = vmul.f32 %v628, %v263
    %v637 = vmul.f32 %v629, %v267
    %v638 = vadd.f32 %v613, %v630
    %v639 = vadd.f32 %v614, %v631
    %v640 = vadd.f32 %v615, %v632
    %v641 = vadd.f32 %v616, %v633
    %v642 = vadd.f32 %v617, %v634
    %v643 = vadd.f32 %v618, %v635
    %v644 = vadd.f32 %v619, %v636
    %v645 = vadd.f32 %v620, %v637
    %s646 = scalar_lea.vmem %s0, 832
    %v647 = vld [vmem:[%s646] sm:$0xff]
    %v648 = vld [vmem:[%s646 + $0x8] sm:$0xff]
    %v649 = vld [vmem:[%s646 + $0x10] sm:$0x3f]
    %v650 = vld [vmem:[%s646 + $0x18] sm:$0x3f]
    %v651 = vld [vmem:[%s646 + $0x20] sm:$0xff]
    %v652 = vld [vmem:[%s646 + $0x28] sm:$0xff]
    %v653 = vld [vmem:[%s646 + $0x30] sm:$0x3f]
    %v654 = vld [vmem:[%s646 + $0x38] sm:$0x3f]
    %v655 = vmul.f32 %v647, %v301
    %v656 = vmul.f32 %v648, %v305
    %v657 = vmul.f32 %v649, %v301
    %v658 = vmul.f32 %v650, %v305
    %v659 = vmul.f32 %v651, %v301
    %v660 = vmul.f32 %v652, %v305
    %v661 = vmul.f32 %v653, %v301
    %v662 = vmul.f32 %v654, %v305
    %v663 = vadd.f32 %v638, %v655
    %v664 = vadd.f32 %v639, %v656
    %v665 = vadd.f32 %v640, %v657
    %v666 = vadd.f32 %v641, %v658
    %v667 = vadd.f32 %v642, %v659
    %v668 = vadd.f32 %v643, %v660
    %v669 = vadd.f32 %v644, %v661
    %v670 = vadd.f32 %v645, %v662
    %s671 = scalar_lea.vmem %s0, 896
    %v672 = vld [vmem:[%s671] sm:$0xff]
    %v673 = vld [vmem:[%s671 + $0x8] sm:$0xff]
    %v674 = vld [vmem:[%s671 + $0x10] sm:$0x3f]
    %v675 = vld [vmem:[%s671 + $0x18] sm:$0x3f]
    %v676 = vld [vmem:[%s671 + $0x20] sm:$0xff]
    %v677 = vld [vmem:[%s671 + $0x28] sm:$0xff]
    %v678 = vld [vmem:[%s671 + $0x30] sm:$0x3f]
    %v679 = vld [vmem:[%s671 + $0x38] sm:$0x3f]
    %v680 = vmul.f32 %v672, %v339
    %v681 = vmul.f32 %v673, %v343
    %v682 = vmul.f32 %v674, %v339
    %v683 = vmul.f32 %v675, %v343
    %v684 = vmul.f32 %v676, %v339
    %v685 = vmul.f32 %v677, %v343
    %v686 = vmul.f32 %v678, %v339
    %v687 = vmul.f32 %v679, %v343
    %v688 = vadd.f32 %v663, %v680
    %v689 = vadd.f32 %v664, %v681
    %v690 = vadd.f32 %v665, %v682
    %v691 = vadd.f32 %v666, %v683
    %v692 = vadd.f32 %v667, %v684
    %v693 = vadd.f32 %v668, %v685
    %v694 = vadd.f32 %v669, %v686
    %v695 = vadd.f32 %v670, %v687
    %v696 = vmax.f32 %v525, %v688
    %v697 = vmax.f32 %v526, %v689
    %v698 = vmax.f32 %v527, %v690
    %v699 = vmax.f32 %v528, %v691
    %v700 = vmax.f32 %v529, %v692
    %v701 = vmax.f32 %v530, %v693
    %v702 = vmax.f32 %v531, %v694
    %v703 = vmax.f32 %v532, %v695
    %v704 = vmul.f32 %v173, %v43
    %v705 = vmul.f32 %v174, %v47
    %v706 = vmul.f32 %v175, %v43
    %v707 = vmul.f32 %v176, %v47
    %v708 = vmul.f32 %v177, %v43
    %v709 = vmul.f32 %v178, %v47
    %v710 = vmul.f32 %v179, %v43
    %v711 = vmul.f32 %v180, %v47
    %v712 = vmul.f32 %v211, %v73
    %v713 = vmul.f32 %v212, %v77
    %v714 = vmul.f32 %v213, %v73
    %v715 = vmul.f32 %v214, %v77
    %v716 = vmul.f32 %v215, %v73
    %v717 = vmul.f32 %v216, %v77
    %v718 = vmul.f32 %v217, %v73
    %v719 = vmul.f32 %v218, %v77
    %v720 = vadd.f32 %v704, %v712
    %v721 = vadd.f32 %v705, %v713
    %v722 = vadd.f32 %v706, %v714
    %v723 = vadd.f32 %v707, %v715
    %v724 = vadd.f32 %v708, %v716
    %v725 = vadd.f32 %v709, %v717
    %v726 = vadd.f32 %v710, %v718
    %v727 = vadd.f32 %v711, %v719
    %v728 = vmul.f32 %v444, %v111
    %v729 = vmul.f32 %v445, %v115
    %v730 = vmul.f32 %v446, %v111
    %v731 = vmul.f32 %v447, %v115
    %v732 = vmul.f32 %v448, %v111
    %v733 = vmul.f32 %v449, %v115
    %v734 = vmul.f32 %v450, %v111
    %v735 = vmul.f32 %v451, %v115
    %v736 = vadd.f32 %v720, %v728
    %v737 = vadd.f32 %v721, %v729
    %v738 = vadd.f32 %v722, %v730
    %v739 = vadd.f32 %v723, %v731
    %v740 = vadd.f32 %v724, %v732
    %v741 = vadd.f32 %v725, %v733
    %v742 = vadd.f32 %v726, %v734
    %v743 = vadd.f32 %v727, %v735
    %v744 = vmul.f32 %v287, %v149
    %v745 = vmul.f32 %v288, %v153
    %v746 = vmul.f32 %v289, %v149
    %v747 = vmul.f32 %v290, %v153
    %v748 = vmul.f32 %v291, %v149
    %v749 = vmul.f32 %v292, %v153
    %v750 = vmul.f32 %v293, %v149
    %v751 = vmul.f32 %v294, %v153
    %v752 = vadd.f32 %v736, %v744
    %v753 = vadd.f32 %v737, %v745
    %v754 = vadd.f32 %v738, %v746
    %v755 = vadd.f32 %v739, %v747
    %v756 = vadd.f32 %v740, %v748
    %v757 = vadd.f32 %v741, %v749
    %v758 = vadd.f32 %v742, %v750
    %v759 = vadd.f32 %v743, %v751
    %v760 = vmul.f32 %v325, %v187
    %v761 = vmul.f32 %v326, %v191
    %v762 = vmul.f32 %v327, %v187
    %v763 = vmul.f32 %v328, %v191
    %v764 = vmul.f32 %v329, %v187
    %v765 = vmul.f32 %v330, %v191
    %v766 = vmul.f32 %v331, %v187
    %v767 = vmul.f32 %v332, %v191
    %v768 = vadd.f32 %v752, %v760
    %v769 = vadd.f32 %v753, %v761
    %v770 = vadd.f32 %v754, %v762
    %v771 = vadd.f32 %v755, %v763
    %v772 = vadd.f32 %v756, %v764
    %v773 = vadd.f32 %v757, %v765
    %v774 = vadd.f32 %v758, %v766
    %v775 = vadd.f32 %v759, %v767
    %v776 = vmul.f32 %v501, %v225
    %v777 = vmul.f32 %v502, %v229
    %v778 = vmul.f32 %v503, %v225
    %v779 = vmul.f32 %v504, %v229
    %v780 = vmul.f32 %v505, %v225
    %v781 = vmul.f32 %v506, %v229
    %v782 = vmul.f32 %v507, %v225
    %v783 = vmul.f32 %v508, %v229
    %v784 = vadd.f32 %v768, %v776
    %v785 = vadd.f32 %v769, %v777
    %v786 = vadd.f32 %v770, %v778
    %v787 = vadd.f32 %v771, %v779
    %v788 = vadd.f32 %v772, %v780
    %v789 = vadd.f32 %v773, %v781
    %v790 = vadd.f32 %v774, %v782
    %v791 = vadd.f32 %v775, %v783
    %v792 = vmul.f32 %v647, %v263
    %v793 = vmul.f32 %v648, %v267
    %v794 = vmul.f32 %v649, %v263
    %v795 = vmul.f32 %v650, %v267
    %v796 = vmul.f32 %v651, %v263
    %v797 = vmul.f32 %v652, %v267
    %v798 = vmul.f32 %v653, %v263
    %v799 = vmul.f32 %v654, %v267
    %v800 = vadd.f32 %v784, %v792
    %v801 = vadd.f32 %v785, %v793
    %v802 = vadd.f32 %v786, %v794
    %v803 = vadd.f32 %v787, %v795
    %v804 = vadd.f32 %v788, %v796
    %v805 = vadd.f32 %v789, %v797
    %v806 = vadd.f32 %v790, %v798
    %v807 = vadd.f32 %v791, %v799
    %v808 = vmul.f32 %v672, %v301
    %v809 = vmul.f32 %v673, %v305
    %v810 = vmul.f32 %v674, %v301
    %v811 = vmul.f32 %v675, %v305
    %v812 = vmul.f32 %v676, %v301
    %v813 = vmul.f32 %v677, %v305
    %v814 = vmul.f32 %v678, %v301
    %v815 = vmul.f32 %v679, %v305
    %v816 = vadd.f32 %v800, %v808
    %v817 = vadd.f32 %v801, %v809
    %v818 = vadd.f32 %v802, %v810
    %v819 = vadd.f32 %v803, %v811
    %v820 = vadd.f32 %v804, %v812
    %v821 = vadd.f32 %v805, %v813
    %v822 = vadd.f32 %v806, %v814
    %v823 = vadd.f32 %v807, %v815
    %s824 = scalar_lea.vmem %s0, 960
    %v825 = vld [vmem:[%s824] sm:$0xff]
    %v826 = vld [vmem:[%s824 + $0x8] sm:$0xff]
    %v827 = vld [vmem:[%s824 + $0x10] sm:$0x3f]
    %v828 = vld [vmem:[%s824 + $0x18] sm:$0x3f]
    %v829 = vld [vmem:[%s824 + $0x20] sm:$0xff]
    %v830 = vld [vmem:[%s824 + $0x28] sm:$0xff]
    %v831 = vld [vmem:[%s824 + $0x30] sm:$0x3f]
    %v832 = vld [vmem:[%s824 + $0x38] sm:$0x3f]
    %v833 = vmul.f32 %v825, %v339
    %v834 = vmul.f32 %v826, %v343
    %v835 = vmul.f32 %v827, %v339
    %v836 = vmul.f32 %v828, %v343
    %v837 = vmul.f32 %v829, %v339
    %v838 = vmul.f32 %v830, %v343
    %v839 = vmul.f32 %v831, %v339
    %v840 = vmul.f32 %v832, %v343
    %v841 = vadd.f32 %v816, %v833
    %v842 = vadd.f32 %v817, %v834
    %v843 = vadd.f32 %v818, %v835
    %v844 = vadd.f32 %v819, %v836
    %v845 = vadd.f32 %v820, %v837
    %v846 = vadd.f32 %v821, %v838
    %v847 = vadd.f32 %v822, %v839
    %v848 = vadd.f32 %v823, %v840
    %v849 = vmax.f32 %v696, %v841
    %v850 = vmax.f32 %v697, %v842
    %v851 = vmax.f32 %v698, %v843
    %v852 = vmax.f32 %v699, %v844
    %v853 = vmax.f32 %v700, %v845
    %v854 = vmax.f32 %v701, %v846
    %v855 = vmax.f32 %v702, %v847
    %v856 = vmax.f32 %v703, %v848
    %vm857 = vcmask 1045504
    %v858 = vsel %vm857, %v851, 0.0
    %v859 = vadd.f32 %v849, %v858
    %v860 = vrot.slane %v859, 4
    %v861 = vadd.f32 %v859, %v860
    %v862 = vrot.slane %v861, 2
    %v863 = vadd.f32 %v861, %v862
    %v864 = vrot.slane %v863, 1
    %v865 = vadd.f32 %v863, %v864
    %vm866 = vcmask 785408
    %v867 = vsel %vm866, %v850, 0.0
    %vm868 = vcmask 783360
    %v869 = vsel %vm868, %v852, 0.0
    %v870 = vadd.f32 %v867, %v869
    %v871 = vrot.slane %v870, 4
    %v872 = vadd.f32 %v870, %v871
    %v873 = vrot.slane %v872, 2
    %v874 = vadd.f32 %v872, %v873
    %v875 = vrot.slane %v874, 1
    %v876 = vadd.f32 %v874, %v875
    %v877 = vsel %vm857, %v855, 0.0
    %v878 = vadd.f32 %v853, %v877
    %v879 = vrot.slane %v878, 4
    %v880 = vadd.f32 %v878, %v879
    %v881 = vrot.slane %v880, 2
    %v882 = vadd.f32 %v880, %v881
    %v883 = vrot.slane %v882, 1
    %v884 = vadd.f32 %v882, %v883
    %v885 = vsel %vm866, %v854, 0.0
    %v886 = vsel %vm868, %v856, 0.0
    %v887 = vadd.f32 %v885, %v886
    %v888 = vrot.slane %v887, 4
    %v889 = vadd.f32 %v887, %v888
    %v890 = vrot.slane %v889, 2
    %v891 = vadd.f32 %v889, %v890
    %v892 = vrot.slane %v891, 1
    %v893 = vadd.f32 %v891, %v892
    %v894 = vadd.f32 %v865, %v884
    %v895 = vsel %vm866, %v876, 0.0
    %v896 = vsel %vm866, %v893, 0.0
    %v897 = vadd.f32 %v895, %v896
    %v898 = vmul.f32 %v849, %v849
    %v899 = vmul.f32 %v850, %v850
    %v900 = vmul.f32 %v851, %v851
    %v901 = vmul.f32 %v852, %v852
    %v902 = vmul.f32 %v853, %v853
    %v903 = vmul.f32 %v854, %v854
    %v904 = vmul.f32 %v855, %v855
    %v905 = vmul.f32 %v856, %v856
    %v906 = vsel %vm857, %v900, 0.0
    %v907 = vadd.f32 %v898, %v906
    %v908 = vrot.slane %v907, 4
    %v909 = vadd.f32 %v907, %v908
    %v910 = vrot.slane %v909, 2
    %v911 = vadd.f32 %v909, %v910
    %v912 = vrot.slane %v911, 1
    %v913 = vadd.f32 %v911, %v912
    %v914 = vsel %vm866, %v899, 0.0
    %v915 = vsel %vm868, %v901, 0.0
    %v916 = vadd.f32 %v914, %v915
    %v917 = vrot.slane %v916, 4
    %v918 = vadd.f32 %v916, %v917
    %v919 = vrot.slane %v918, 2
    %v920 = vadd.f32 %v918, %v919
    %v921 = vrot.slane %v920, 1
    %v922 = vadd.f32 %v920, %v921
    %v923 = vsel %vm857, %v904, 0.0
    %v924 = vadd.f32 %v902, %v923
    %v925 = vrot.slane %v924, 4
    %v926 = vadd.f32 %v924, %v925
    %v927 = vrot.slane %v926, 2
    %v928 = vadd.f32 %v926, %v927
    %v929 = vrot.slane %v928, 1
    %v930 = vadd.f32 %v928, %v929
    %v931 = vsel %vm866, %v903, 0.0
    %v932 = vsel %vm868, %v905, 0.0
    %v933 = vadd.f32 %v931, %v932
    %v934 = vrot.slane %v933, 4
    %v935 = vadd.f32 %v933, %v934
    %v936 = vrot.slane %v935, 2
    %v937 = vadd.f32 %v935, %v936
    %v938 = vrot.slane %v937, 1
    %v939 = vadd.f32 %v937, %v938
    %v940 = vadd.f32 %v913, %v930
    %v941 = vsel %vm866, %v922, 0.0
    %v942 = vsel %vm866, %v939, 0.0
    %v943 = vadd.f32 %v941, %v942
    %v944 = vld [vmem:[%s4] sm:$0xff]
    %v945 = vld [vmem:[%s4 + $0x8] sm:$0xff]
    %v946 = vld [vmem:[%s4 + $0x10] sm:$0xff]
    %v947 = vld [vmem:[%s4 + $0x18] sm:$0xff]
    %v948 = vld [vmem:[%s4 + $0x20] sm:$0xff]
    %v949 = vld [vmem:[%s4 + $0x28] sm:$0xff]
    %v950 = vld [vmem:[%s4 + $0x30] sm:$0xff]
    %v951 = vld [vmem:[%s4 + $0x38] sm:$0xff]
    %v952 = vld [vmem:[%s4 + $0x40] sm:$0xff]
    %v953 = vld [vmem:[%s4 + $0x48] sm:$0xff]
    %v954 = vld [vmem:[%s4 + $0x50] sm:$0xff]
    %v955 = vld [vmem:[%s4 + $0x58] sm:$0xff]
    %v956 = vld [vmem:[%s4 + $0x60] sm:$0xff]
    %v957 = vld [vmem:[%s4 + $0x68] sm:$0xff]
    %v958 = vld [vmem:[%s4 + $0x70] sm:$0xff]
    %v959 = vld [vmem:[%s4 + $0x78] sm:$0xff]
    %v960 = vld [vmem:[%s4 + $0x80] sm:$0xff]
    %v961 = vld [vmem:[%s4 + $0x88] sm:$0xff]
    %v962 = vld [vmem:[%s4 + $0x90] sm:$0xff]
    %v963 = vld [vmem:[%s4 + $0x98] sm:$0xff]
    %v964 = vld [vmem:[%s4 + $0xa0] sm:$0xff]
    %v965 = vld [vmem:[%s4 + $0xa8] sm:$0xff]
    %v966 = vld [vmem:[%s4 + $0xb0] sm:$0xff]
    %v967 = vld [vmem:[%s4 + $0xb8] sm:$0xff]
    %v968 = vld [vmem:[%s4 + $0xc0] sm:$0xff]
    %v969 = vld [vmem:[%s4 + $0xc8] sm:$0xff]
    %v970 = vld [vmem:[%s4 + $0xd0] sm:$0xff]
    %v971 = vld [vmem:[%s4 + $0xd8] sm:$0xff]
    %v973 = vsel %vm866, %v897, 0
    %975 = vmatprep.subr.mxu0 0.0
    %976 = vmatpush1.msra.mxu0 %v959
    %977 = vmatprep.subr.mxu0 0.0
    %978 = vmatpush1.msra.mxu0 %v958
    %979 = vmatprep.subr.mxu0 0.0
    %980 = vmatpush1.msra.mxu0 %v957
    %981 = vmatprep.subr.mxu0 0.0
    %982 = vmatpush1.msra.mxu0 %v956
    %983 = vmatprep.subr.mxu0 0.0
    %984 = vmatpush1.msra.mxu0 %v955
    %985 = vmatprep.subr.mxu0 0.0
    %986 = vmatpush1.msra.mxu0 %v954
    %987 = vmatprep.subr.mxu0 0.0
    %988 = vmatpush1.msra.mxu0 %v953
    %989 = vmatprep.subr.mxu0 0.0
    %990 = vmatpush1.msra.mxu0 %v952
    %991 = vmatprep.subr.mxu0 0.0
    %992 = vmatpush1.msra.mxu0 %v951
    %993 = vmatprep.subr.mxu0 0.0
    %994 = vmatpush1.msra.mxu0 %v950
    %995 = vmatprep.subr.mxu0 0.0
    %996 = vmatpush1.msra.mxu0 %v949
    %997 = vmatprep.subr.mxu0 0.0
    %998 = vmatpush1.msra.mxu0 %v948
    %999 = vmatprep.subr.mxu0 0.0
    %1000 = vmatpush1.msra.mxu0 %v947
    %1001 = vmatprep.subr.mxu0 0.0
    %1002 = vmatpush1.msra.mxu0 %v946
    %1003 = vmatprep.subr.mxu0 0.0
    %1004 = vmatpush1.msra.mxu0 %v945
    %1005 = vmatprep.subr.mxu0 0.0
    %1006 = vmatpush1.msra.mxu0 %v944
    %1007 = vmatprep.subr.mxu0 0.0
    %1008 = vmatpush2.msra.mxu0 0.0
    %1009 = vmatprep.subr.mxu0 0.0
    %1010 = vmatpush2.msra.mxu0 0.0
    %1011 = vmatprep.subr.mxu0 0.0
    %1012 = vmatpush2.msra.mxu0 0.0
    %1013 = vmatprep.subr.mxu0 0.0
    %1014 = vmatpush2.msra.mxu0 0.0
    %1015 = vmatprep.subr.mxu0 0.0
    %1016 = vmatpush2.msra.mxu0 %v971
    %1017 = vmatprep.subr.mxu0 0.0
    %1018 = vmatpush2.msra.mxu0 %v970
    %1019 = vmatprep.subr.mxu0 0.0
    %1020 = vmatpush2.msra.mxu0 %v969
    %1021 = vmatprep.subr.mxu0 0.0
    %1022 = vmatpush2.msra.mxu0 %v968
    %1023 = vmatprep.subr.mxu0 0.0
    %1024 = vmatpush2.msra.mxu0 %v967
    %1025 = vmatprep.subr.mxu0 0.0
    %1026 = vmatpush2.msra.mxu0 %v966
    %1027 = vmatprep.subr.mxu0 0.0
    %1028 = vmatpush2.msra.mxu0 %v965
    %1029 = vmatprep.subr.mxu0 0.0
    %1030 = vmatpush2.msra.mxu0 %v964
    %1031 = vmatprep.subr.mxu0 0.0
    %1032 = vmatpush2.msra.mxu0 %v963
    %1033 = vmatprep.subr.mxu0 0.0
    %1034 = vmatpush2.msra.mxu0 %v962
    %1035 = vmatprep.subr.mxu0 0.0
    %1036 = vmatpush2.msra.mxu0 %v961
    %1037 = vmatprep.subr.mxu0 0.0
    %1038 = vmatpush2.msra.mxu0 %v960
    %1039 = vmatprep.mubr.f32.mxu0 %v973
    %1040 = vmatmul.mubr.f32.gmra.mxu0 %v894
    %v1041 = vpop.f32.mrf.mxu0
    %v1042 = vadd.f32 0.0, %v1041
    %v1043 = vpop.f32.mrf.mxu0
    %1044 = vdwg.mxu0
    %v1046 = vsel %vm866, %v943, 0
    %1048 = vmatprep.subr.mxu0 0.0
    %1049 = vmatpush1.msra.mxu0 %v959
    %1050 = vmatprep.subr.mxu0 0.0
    %1051 = vmatpush1.msra.mxu0 %v958
    %1052 = vmatprep.subr.mxu0 0.0
    %1053 = vmatpush1.msra.mxu0 %v957
    %1054 = vmatprep.subr.mxu0 0.0
    %1055 = vmatpush1.msra.mxu0 %v956
    %1056 = vmatprep.subr.mxu0 0.0
    %1057 = vmatpush1.msra.mxu0 %v955
    %1058 = vmatprep.subr.mxu0 0.0
    %1059 = vmatpush1.msra.mxu0 %v954
    %1060 = vmatprep.subr.mxu0 0.0
    %1061 = vmatpush1.msra.mxu0 %v953
    %1062 = vmatprep.subr.mxu0 0.0
    %1063 = vmatpush1.msra.mxu0 %v952
    %1064 = vmatprep.subr.mxu0 0.0
    %1065 = vmatpush1.msra.mxu0 %v951
    %1066 = vmatprep.subr.mxu0 0.0
    %1067 = vmatpush1.msra.mxu0 %v950
    %1068 = vmatprep.subr.mxu0 0.0
    %1069 = vmatpush1.msra.mxu0 %v949
    %1070 = vmatprep.subr.mxu0 0.0
    %1071 = vmatpush1.msra.mxu0 %v948
    %1072 = vmatprep.subr.mxu0 0.0
    %1073 = vmatpush1.msra.mxu0 %v947
    %1074 = vmatprep.subr.mxu0 0.0
    %1075 = vmatpush1.msra.mxu0 %v946
    %1076 = vmatprep.subr.mxu0 0.0
    %1077 = vmatpush1.msra.mxu0 %v945
    %1078 = vmatprep.subr.mxu0 0.0
    %1079 = vmatpush1.msra.mxu0 %v944
    %1080 = vmatprep.subr.mxu0 0.0
    %1081 = vmatpush2.msra.mxu0 0.0
    %1082 = vmatprep.subr.mxu0 0.0
    %1083 = vmatpush2.msra.mxu0 0.0
    %1084 = vmatprep.subr.mxu0 0.0
    %1085 = vmatpush2.msra.mxu0 0.0
    %1086 = vmatprep.subr.mxu0 0.0
    %1087 = vmatpush2.msra.mxu0 0.0
    %1088 = vmatprep.subr.mxu0 0.0
    %1089 = vmatpush2.msra.mxu0 %v971
    %1090 = vmatprep.subr.mxu0 0.0
    %1091 = vmatpush2.msra.mxu0 %v970
    %1092 = vmatprep.subr.mxu0 0.0
    %1093 = vmatpush2.msra.mxu0 %v969
    %1094 = vmatprep.subr.mxu0 0.0
    %1095 = vmatpush2.msra.mxu0 %v968
    %1096 = vmatprep.subr.mxu0 0.0
    %1097 = vmatpush2.msra.mxu0 %v967
    %1098 = vmatprep.subr.mxu0 0.0
    %1099 = vmatpush2.msra.mxu0 %v966
    %1100 = vmatprep.subr.mxu0 0.0
    %1101 = vmatpush2.msra.mxu0 %v965
    %1102 = vmatprep.subr.mxu0 0.0
    %1103 = vmatpush2.msra.mxu0 %v964
    %1104 = vmatprep.subr.mxu0 0.0
    %1105 = vmatpush2.msra.mxu0 %v963
    %1106 = vmatprep.subr.mxu0 0.0
    %1107 = vmatpush2.msra.mxu0 %v962
    %1108 = vmatprep.subr.mxu0 0.0
    %1109 = vmatpush2.msra.mxu0 %v961
    %1110 = vmatprep.subr.mxu0 0.0
    %1111 = vmatpush2.msra.mxu0 %v960
    %1112 = vmatprep.mubr.f32.mxu0 %v1046
    %1113 = vmatmul.mubr.f32.gmra.mxu0 %v940
    %v1114 = vpop.f32.mrf.mxu0
    %v1115 = vadd.f32 0.0, %v1114
    %v1116 = vpop.f32.mrf.mxu0
    %1117 = vdwg.mxu0
    %v1118 = vmul.f32 %v1042, 0.0025510204
    %v1119 = vmul.f32 %v1115, 0.0025510204
    %v1120 = vmul.f32 %v1118, %v1118
    %v1121 = vsub.f32 %v1119, %v1120
    %v1122 = vld [vmem:[%s2] sm:$0x1]
    %v1123 = vadd.f32 %v1121, 1e-05
    %v1124 = vrsqrt.pop %v1123
    %v1125 = vmul.f32 %v1122, %v1124
    %v1126 = vld [vmem:[%s3] sm:$0x1]
    %v1127 = vmul.f32 %v1118, %v1125
    %v1128 = vsub.f32 %v1126, %v1127
    %v1129 = vld [vmem:[%s5] sm:$0xff]
    %v1130 = vld [vmem:[%s5 + $0x8] sm:$0xff]
    %v1131 = vld [vmem:[%s5 + $0x10] sm:$0xff]
    %v1132 = vld [vmem:[%s5 + $0x18] sm:$0xff]
    %vm1133 = vcmask 130048
    %v1135 = vsel %vm1133, %v1125, 0
    %1137 = vmatprep.subr.mxu0 0.0
    %1138 = vmatpush1.msra.mxu0 0.0
    %1139 = vmatprep.subr.mxu0 0.0
    %1140 = vmatpush1.msra.mxu0 0.0
    %1141 = vmatprep.subr.mxu0 0.0
    %1142 = vmatpush1.msra.mxu0 0.0
    %1143 = vmatprep.subr.mxu0 0.0
    %1144 = vmatpush1.msra.mxu0 0.0
    %1145 = vmatprep.subr.mxu0 0.0
    %1146 = vmatpush1.msra.mxu0 0.0
    %1147 = vmatprep.subr.mxu0 0.0
    %1148 = vmatpush1.msra.mxu0 0.0
    %1149 = vmatprep.subr.mxu0 0.0
    %1150 = vmatpush1.msra.mxu0 0.0
    %1151 = vmatprep.subr.mxu0 0.0
    %1152 = vmatpush1.msra.mxu0 0.0
    %1153 = vmatprep.subr.mxu0 0.0
    %1154 = vmatpush1.msra.mxu0 0.0
    %1155 = vmatprep.subr.mxu0 0.0
    %1156 = vmatpush1.msra.mxu0 0.0
    %1157 = vmatprep.subr.mxu0 0.0
    %1158 = vmatpush1.msra.mxu0 0.0
    %1159 = vmatprep.subr.mxu0 0.0
    %1160 = vmatpush1.msra.mxu0 0.0
    %1161 = vmatprep.subr.mxu0 0.0
    %1162 = vmatpush1.msra.mxu0 0.0
    %1163 = vmatprep.subr.mxu0 0.0
    %1164 = vmatpush1.msra.mxu0 0.0
    %1165 = vmatprep.subr.mxu0 %v1132
    %1166 = vmatpush1.msra.mxu0 %v1131
    %1167 = vmatprep.subr.mxu0 %v1130
    %1168 = vmatpush1.msra.mxu0 %v1129
    %1169 = vmatprep.subr.mxu0 0.0
    %1170 = vmatpush2.msra.mxu0 0.0
    %1171 = vmatprep.subr.mxu0 0.0
    %1172 = vmatpush2.msra.mxu0 0.0
    %1173 = vmatprep.subr.mxu0 0.0
    %1174 = vmatpush2.msra.mxu0 0.0
    %1175 = vmatprep.subr.mxu0 0.0
    %1176 = vmatpush2.msra.mxu0 0.0
    %1177 = vmatprep.subr.mxu0 0.0
    %1178 = vmatpush2.msra.mxu0 0.0
    %1179 = vmatprep.subr.mxu0 0.0
    %1180 = vmatpush2.msra.mxu0 0.0
    %1181 = vmatprep.subr.mxu0 0.0
    %1182 = vmatpush2.msra.mxu0 0.0
    %1183 = vmatprep.subr.mxu0 0.0
    %1184 = vmatpush2.msra.mxu0 0.0
    %1185 = vmatprep.subr.mxu0 0.0
    %1186 = vmatpush2.msra.mxu0 0.0
    %1187 = vmatprep.subr.mxu0 0.0
    %1188 = vmatpush2.msra.mxu0 0.0
    %1189 = vmatprep.subr.mxu0 0.0
    %1190 = vmatpush2.msra.mxu0 0.0
    %1191 = vmatprep.subr.mxu0 0.0
    %1192 = vmatpush2.msra.mxu0 0.0
    %1193 = vmatprep.subr.mxu0 0.0
    %1194 = vmatpush2.msra.mxu0 0.0
    %1195 = vmatprep.subr.mxu0 0.0
    %1196 = vmatpush2.msra.mxu0 0.0
    %1197 = vmatprep.subr.mxu0 0.0
    %1198 = vmatpush2.msra.mxu0 0.0
    %1199 = vmatprep.subr.mxu0 0.0
    %1200 = vmatpush2.msra.mxu0 0.0
    %1201 = vmatprep.mubr.f32.mxu0 0.0
    %1202 = vmatmul.mubr.f32.gmra.mxu0 %v1135
    %v1203 = vpop.f32.mrf.mxu0
    %v1204 = vadd.f32 0.0, %v1203
    %v1205 = vpop.f32.mrf.mxu0
    %v1206 = vadd.f32 0.0, %v1205
    %1207 = vdwg.mxu0
    %v1209 = vsel %vm1133, %v1128, 0
    %1211 = vmatprep.subr.mxu0 0.0
    %1212 = vmatpush1.msra.mxu0 0.0
    %1213 = vmatprep.subr.mxu0 0.0
    %1214 = vmatpush1.msra.mxu0 0.0
    %1215 = vmatprep.subr.mxu0 0.0
    %1216 = vmatpush1.msra.mxu0 0.0
    %1217 = vmatprep.subr.mxu0 0.0
    %1218 = vmatpush1.msra.mxu0 0.0
    %1219 = vmatprep.subr.mxu0 0.0
    %1220 = vmatpush1.msra.mxu0 0.0
    %1221 = vmatprep.subr.mxu0 0.0
    %1222 = vmatpush1.msra.mxu0 0.0
    %1223 = vmatprep.subr.mxu0 0.0
    %1224 = vmatpush1.msra.mxu0 0.0
    %1225 = vmatprep.subr.mxu0 0.0
    %1226 = vmatpush1.msra.mxu0 0.0
    %1227 = vmatprep.subr.mxu0 0.0
    %1228 = vmatpush1.msra.mxu0 0.0
    %1229 = vmatprep.subr.mxu0 0.0
    %1230 = vmatpush1.msra.mxu0 0.0
    %1231 = vmatprep.subr.mxu0 0.0
    %1232 = vmatpush1.msra.mxu0 0.0
    %1233 = vmatprep.subr.mxu0 0.0
    %1234 = vmatpush1.msra.mxu0 0.0
    %1235 = vmatprep.subr.mxu0 0.0
    %1236 = vmatpush1.msra.mxu0 0.0
    %1237 = vmatprep.subr.mxu0 0.0
    %1238 = vmatpush1.msra.mxu0 0.0
    %1239 = vmatprep.subr.mxu0 %v1132
    %1240 = vmatpush1.msra.mxu0 %v1131
    %1241 = vmatprep.subr.mxu0 %v1130
    %1242 = vmatpush1.msra.mxu0 %v1129
    %1243 = vmatprep.subr.mxu0 0.0
    %1244 = vmatpush2.msra.mxu0 0.0
    %1245 = vmatprep.subr.mxu0 0.0
    %1246 = vmatpush2.msra.mxu0 0.0
    %1247 = vmatprep.subr.mxu0 0.0
    %1248 = vmatpush2.msra.mxu0 0.0
    %1249 = vmatprep.subr.mxu0 0.0
    %1250 = vmatpush2.msra.mxu0 0.0
    %1251 = vmatprep.subr.mxu0 0.0
    %1252 = vmatpush2.msra.mxu0 0.0
    %1253 = vmatprep.subr.mxu0 0.0
    %1254 = vmatpush2.msra.mxu0 0.0
    %1255 = vmatprep.subr.mxu0 0.0
    %1256 = vmatpush2.msra.mxu0 0.0
    %1257 = vmatprep.subr.mxu0 0.0
    %1258 = vmatpush2.msra.mxu0 0.0
    %1259 = vmatprep.subr.mxu0 0.0
    %1260 = vmatpush2.msra.mxu0 0.0
    %1261 = vmatprep.subr.mxu0 0.0
    %1262 = vmatpush2.msra.mxu0 0.0
    %1263 = vmatprep.subr.mxu0 0.0
    %1264 = vmatpush2.msra.mxu0 0.0
    %1265 = vmatprep.subr.mxu0 0.0
    %1266 = vmatpush2.msra.mxu0 0.0
    %1267 = vmatprep.subr.mxu0 0.0
    %1268 = vmatpush2.msra.mxu0 0.0
    %1269 = vmatprep.subr.mxu0 0.0
    %1270 = vmatpush2.msra.mxu0 0.0
    %1271 = vmatprep.subr.mxu0 0.0
    %1272 = vmatpush2.msra.mxu0 0.0
    %1273 = vmatprep.subr.mxu0 0.0
    %1274 = vmatpush2.msra.mxu0 0.0
    %1275 = vmatprep.mubr.f32.mxu0 0.0
    %1276 = vmatmul.mubr.f32.gmra.mxu0 %v1209
    %v1277 = vpop.f32.mrf.mxu0
    %v1278 = vadd.f32 0.0, %v1277
    %v1279 = vpop.f32.mrf.mxu0
    %v1280 = vadd.f32 0.0, %v1279
    %1281 = vdwg.mxu0
    %v1282 = vlaneseq
    %v1283 = vshrl.u32 %v1282, 7
    %v1284 = vsub.s32 0, %v1283
    %v1285 = vrot.slane %v1204, %v1284
    %v1286 = vlaneseq
    %v1287 = vshrl.u32 %v1286, 7
    %v1288 = vsub.s32 0, %v1287
    %v1289 = vrot.slane %v1206, %v1288
    %v1290 = vmul.f32 %v849, %v1285
    %v1291 = vmul.f32 %v850, %v1289
    %v1292 = vmul.f32 %v851, %v1285
    %v1293 = vmul.f32 %v852, %v1289
    %v1294 = vmul.f32 %v853, %v1285
    %v1295 = vmul.f32 %v854, %v1289
    %v1296 = vmul.f32 %v855, %v1285
    %v1297 = vmul.f32 %v856, %v1289
    %v1298 = vlaneseq
    %v1299 = vshrl.u32 %v1298, 7
    %v1300 = vsub.s32 0, %v1299
    %v1301 = vrot.slane %v1278, %v1300
    %v1302 = vlaneseq
    %v1303 = vshrl.u32 %v1302, 7
    %v1304 = vsub.s32 0, %v1303
    %v1305 = vrot.slane %v1280, %v1304
    %v1306 = vadd.f32 %v1290, %v1301
    %v1307 = vadd.f32 %v1291, %v1305
    %v1308 = vadd.f32 %v1292, %v1301
    %v1309 = vadd.f32 %v1293, %v1305
    %v1310 = vadd.f32 %v1294, %v1301
    %v1311 = vadd.f32 %v1295, %v1305
    %v1312 = vadd.f32 %v1296, %v1301
    %v1313 = vadd.f32 %v1297, %v1305
    %v1314 = vld [vmem:[%s7] sm:$0x1]
    %v1316 = vlaneseq
    %v1317 = vshrl.u32 %v1316, 7
    %v1318 = vsub.s32 0, %v1317
    %v1319 = vrot.slane %v1314, %v1318
    %v1321 = vadd.f32 %v1319, 0.0
    %v1322 = vld [vmem:[%s6] sm:$0xff]
    %v1323 = vld [vmem:[%s6 + $0x8] sm:$0xff]
    %v1324 = vld [vmem:[%s6 + $0x10] sm:$0xff]
    %v1325 = vld [vmem:[%s6 + $0x18] sm:$0xff]
    %v1326 = vld [vmem:[%s6 + $0x20] sm:$0xff]
    %v1327 = vld [vmem:[%s6 + $0x28] sm:$0xff]
    %v1328 = vld [vmem:[%s6 + $0x30] sm:$0xff]
    %v1329 = vld [vmem:[%s6 + $0x38] sm:$0xff]
    %v1330 = vld [vmem:[%s6 + $0x40] sm:$0xff]
    %v1331 = vld [vmem:[%s6 + $0x48] sm:$0xff]
    %v1332 = vld [vmem:[%s6 + $0x50] sm:$0xff]
    %v1333 = vld [vmem:[%s6 + $0x58] sm:$0xff]
    %v1334 = vld [vmem:[%s6 + $0x60] sm:$0xff]
    %v1335 = vld [vmem:[%s6 + $0x68] sm:$0xff]
    %v1336 = vld [vmem:[%s6 + $0x70] sm:$0xff]
    %v1337 = vld [vmem:[%s6 + $0x78] sm:$0xff]
    %v1338 = vld [vmem:[%s6 + $0x80] sm:$0xff]
    %v1339 = vld [vmem:[%s6 + $0x88] sm:$0xff]
    %v1340 = vld [vmem:[%s6 + $0x90] sm:$0xff]
    %v1341 = vld [vmem:[%s6 + $0x98] sm:$0xff]
    %v1342 = vld [vmem:[%s6 + $0xa0] sm:$0xff]
    %v1343 = vld [vmem:[%s6 + $0xa8] sm:$0xff]
    %v1344 = vld [vmem:[%s6 + $0xb0] sm:$0xff]
    %v1345 = vld [vmem:[%s6 + $0xb8] sm:$0xff]
    %v1346 = vld [vmem:[%s6 + $0xc0] sm:$0xff]
    %v1347 = vld [vmem:[%s6 + $0xc8] sm:$0xff]
    %v1348 = vld [vmem:[%s6 + $0xd0] sm:$0xff]
    %v1349 = vld [vmem:[%s6 + $0xd8] sm:$0xff]
    %v1354 = vrot.slane %v1310, 7
    %vm1355 = vcmask 1041409
    %v1356 = vsel %vm1355, %v1354, %v1306
    %v1357 = vrot.slane %v1311, 7
    %v1358 = vsel %vm1355, %v1357, %v1307
    %v1360 = vsel %vm866, %v1358, 0
    %1362 = vmatprep.subr.mxu0 0.0
    %1363 = vmatpush1.msra.mxu0 %v1337
    %1364 = vmatprep.subr.mxu0 0.0
    %1365 = vmatpush1.msra.mxu0 %v1336
    %1366 = vmatprep.subr.mxu0 0.0
    %1367 = vmatpush1.msra.mxu0 %v1335
    %1368 = vmatprep.subr.mxu0 0.0
    %1369 = vmatpush1.msra.mxu0 %v1334
    %1370 = vmatprep.subr.mxu0 0.0
    %1371 = vmatpush1.msra.mxu0 %v1333
    %1372 = vmatprep.subr.mxu0 0.0
    %1373 = vmatpush1.msra.mxu0 %v1332
    %1374 = vmatprep.subr.mxu0 0.0
    %1375 = vmatpush1.msra.mxu0 %v1331
    %1376 = vmatprep.subr.mxu0 0.0
    %1377 = vmatpush1.msra.mxu0 %v1330
    %1378 = vmatprep.subr.mxu0 0.0
    %1379 = vmatpush1.msra.mxu0 %v1329
    %1380 = vmatprep.subr.mxu0 0.0
    %1381 = vmatpush1.msra.mxu0 %v1328
    %1382 = vmatprep.subr.mxu0 0.0
    %1383 = vmatpush1.msra.mxu0 %v1327
    %1384 = vmatprep.subr.mxu0 0.0
    %1385 = vmatpush1.msra.mxu0 %v1326
    %1386 = vmatprep.subr.mxu0 0.0
    %1387 = vmatpush1.msra.mxu0 %v1325
    %1388 = vmatprep.subr.mxu0 0.0
    %1389 = vmatpush1.msra.mxu0 %v1324
    %1390 = vmatprep.subr.mxu0 0.0
    %1391 = vmatpush1.msra.mxu0 %v1323
    %1392 = vmatprep.subr.mxu0 0.0
    %1393 = vmatpush1.msra.mxu0 %v1322
    %1394 = vmatprep.subr.mxu0 0.0
    %1395 = vmatpush2.msra.mxu0 0.0
    %1396 = vmatprep.subr.mxu0 0.0
    %1397 = vmatpush2.msra.mxu0 0.0
    %1398 = vmatprep.subr.mxu0 0.0
    %1399 = vmatpush2.msra.mxu0 0.0
    %1400 = vmatprep.subr.mxu0 0.0
    %1401 = vmatpush2.msra.mxu0 0.0
    %1402 = vmatprep.subr.mxu0 0.0
    %1403 = vmatpush2.msra.mxu0 %v1349
    %1404 = vmatprep.subr.mxu0 0.0
    %1405 = vmatpush2.msra.mxu0 %v1348
    %1406 = vmatprep.subr.mxu0 0.0
    %1407 = vmatpush2.msra.mxu0 %v1347
    %1408 = vmatprep.subr.mxu0 0.0
    %1409 = vmatpush2.msra.mxu0 %v1346
    %1410 = vmatprep.subr.mxu0 0.0
    %1411 = vmatpush2.msra.mxu0 %v1345
    %1412 = vmatprep.subr.mxu0 0.0
    %1413 = vmatpush2.msra.mxu0 %v1344
    %1414 = vmatprep.subr.mxu0 0.0
    %1415 = vmatpush2.msra.mxu0 %v1343
    %1416 = vmatprep.subr.mxu0 0.0
    %1417 = vmatpush2.msra.mxu0 %v1342
    %1418 = vmatprep.subr.mxu0 0.0
    %1419 = vmatpush2.msra.mxu0 %v1341
    %1420 = vmatprep.subr.mxu0 0.0
    %1421 = vmatpush2.msra.mxu0 %v1340
    %1422 = vmatprep.subr.mxu0 0.0
    %1423 = vmatpush2.msra.mxu0 %v1339
    %1424 = vmatprep.subr.mxu0 0.0
    %1425 = vmatpush2.msra.mxu0 %v1338
    %1426 = vmatprep.mubr.f32.mxu0 %v1360
    %1427 = vmatmul.mubr.f32.gmra.mxu0 %v1356
    %v1428 = vpop.f32.mrf.mxu0
    %v1429 = vadd.f32 0.0, %v1428
    %v1430 = vpop.f32.mrf.mxu0
    %1431 = vdwg.mxu0
    %v1432 = vadd.f32 %v1321, %v1429
    %s1433 = scalar_lea.vmem %s6, 224
    %v1434 = vld [vmem:[%s1433] sm:$0xff]
    %v1435 = vld [vmem:[%s1433 + $0x8] sm:$0xff]
    %v1436 = vld [vmem:[%s1433 + $0x10] sm:$0xff]
    %v1437 = vld [vmem:[%s1433 + $0x18] sm:$0xff]
    %v1438 = vld [vmem:[%s1433 + $0x20] sm:$0xff]
    %v1439 = vld [vmem:[%s1433 + $0x28] sm:$0xff]
    %v1440 = vld [vmem:[%s1433 + $0x30] sm:$0xff]
    %v1441 = vld [vmem:[%s1433 + $0x38] sm:$0xff]
    %v1442 = vld [vmem:[%s1433 + $0x40] sm:$0xff]
    %v1443 = vld [vmem:[%s1433 + $0x48] sm:$0xff]
    %v1444 = vld [vmem:[%s1433 + $0x50] sm:$0xff]
    %v1445 = vld [vmem:[%s1433 + $0x58] sm:$0xff]
    %v1446 = vld [vmem:[%s1433 + $0x60] sm:$0xff]
    %v1447 = vld [vmem:[%s1433 + $0x68] sm:$0xff]
    %v1448 = vld [vmem:[%s1433 + $0x70] sm:$0xff]
    %v1449 = vld [vmem:[%s1433 + $0x78] sm:$0xff]
    %v1450 = vld [vmem:[%s1433 + $0x80] sm:$0xff]
    %v1451 = vld [vmem:[%s1433 + $0x88] sm:$0xff]
    %v1452 = vld [vmem:[%s1433 + $0x90] sm:$0xff]
    %v1453 = vld [vmem:[%s1433 + $0x98] sm:$0xff]
    %v1454 = vld [vmem:[%s1433 + $0xa0] sm:$0xff]
    %v1455 = vld [vmem:[%s1433 + $0xa8] sm:$0xff]
    %v1456 = vld [vmem:[%s1433 + $0xb0] sm:$0xff]
    %v1457 = vld [vmem:[%s1433 + $0xb8] sm:$0xff]
    %v1458 = vld [vmem:[%s1433 + $0xc0] sm:$0xff]
    %v1459 = vld [vmem:[%s1433 + $0xc8] sm:$0xff]
    %v1460 = vld [vmem:[%s1433 + $0xd0] sm:$0xff]
    %v1461 = vld [vmem:[%s1433 + $0xd8] sm:$0xff]
    %v1462 = vrot.slane %v1306, 1
    %v1463 = vsel %vm1355, %v1310, %v1462
    %v1464 = vrot.slane %v1307, 1
    %v1465 = vsel %vm1355, %v1311, %v1464
    %v1467 = vsel %vm866, %v1465, 0
    %1469 = vmatprep.subr.mxu0 0.0
    %1470 = vmatpush1.msra.mxu0 %v1449
    %1471 = vmatprep.subr.mxu0 0.0
    %1472 = vmatpush1.msra.mxu0 %v1448
    %1473 = vmatprep.subr.mxu0 0.0
    %1474 = vmatpush1.msra.mxu0 %v1447
    %1475 = vmatprep.subr.mxu0 0.0
    %1476 = vmatpush1.msra.mxu0 %v1446
    %1477 = vmatprep.subr.mxu0 0.0
    %1478 = vmatpush1.msra.mxu0 %v1445
    %1479 = vmatprep.subr.mxu0 0.0
    %1480 = vmatpush1.msra.mxu0 %v1444
    %1481 = vmatprep.subr.mxu0 0.0
    %1482 = vmatpush1.msra.mxu0 %v1443
    %1483 = vmatprep.subr.mxu0 0.0
    %1484 = vmatpush1.msra.mxu0 %v1442
    %1485 = vmatprep.subr.mxu0 0.0
    %1486 = vmatpush1.msra.mxu0 %v1441
    %1487 = vmatprep.subr.mxu0 0.0
    %1488 = vmatpush1.msra.mxu0 %v1440
    %1489 = vmatprep.subr.mxu0 0.0
    %1490 = vmatpush1.msra.mxu0 %v1439
    %1491 = vmatprep.subr.mxu0 0.0
    %1492 = vmatpush1.msra.mxu0 %v1438
    %1493 = vmatprep.subr.mxu0 0.0
    %1494 = vmatpush1.msra.mxu0 %v1437
    %1495 = vmatprep.subr.mxu0 0.0
    %1496 = vmatpush1.msra.mxu0 %v1436
    %1497 = vmatprep.subr.mxu0 0.0
    %1498 = vmatpush1.msra.mxu0 %v1435
    %1499 = vmatprep.subr.mxu0 0.0
    %1500 = vmatpush1.msra.mxu0 %v1434
    %1501 = vmatprep.subr.mxu0 0.0
    %1502 = vmatpush2.msra.mxu0 0.0
    %1503 = vmatprep.subr.mxu0 0.0
    %1504 = vmatpush2.msra.mxu0 0.0
    %1505 = vmatprep.subr.mxu0 0.0
    %1506 = vmatpush2.msra.mxu0 0.0
    %1507 = vmatprep.subr.mxu0 0.0
    %1508 = vmatpush2.msra.mxu0 0.0
    %1509 = vmatprep.subr.mxu0 0.0
    %1510 = vmatpush2.msra.mxu0 %v1461
    %1511 = vmatprep.subr.mxu0 0.0
    %1512 = vmatpush2.msra.mxu0 %v1460
    %1513 = vmatprep.subr.mxu0 0.0
    %1514 = vmatpush2.msra.mxu0 %v1459
    %1515 = vmatprep.subr.mxu0 0.0
    %1516 = vmatpush2.msra.mxu0 %v1458
    %1517 = vmatprep.subr.mxu0 0.0
    %1518 = vmatpush2.msra.mxu0 %v1457
    %1519 = vmatprep.subr.mxu0 0.0
    %1520 = vmatpush2.msra.mxu0 %v1456
    %1521 = vmatprep.subr.mxu0 0.0
    %1522 = vmatpush2.msra.mxu0 %v1455
    %1523 = vmatprep.subr.mxu0 0.0
    %1524 = vmatpush2.msra.mxu0 %v1454
    %1525 = vmatprep.subr.mxu0 0.0
    %1526 = vmatpush2.msra.mxu0 %v1453
    %1527 = vmatprep.subr.mxu0 0.0
    %1528 = vmatpush2.msra.mxu0 %v1452
    %1529 = vmatprep.subr.mxu0 0.0
    %1530 = vmatpush2.msra.mxu0 %v1451
    %1531 = vmatprep.subr.mxu0 0.0
    %1532 = vmatpush2.msra.mxu0 %v1450
    %1533 = vmatprep.mubr.f32.mxu0 %v1467
    %1534 = vmatmul.mubr.f32.gmra.mxu0 %v1463
    %v1535 = vpop.f32.mrf.mxu0
    %v1536 = vadd.f32 0.0, %v1535
    %v1537 = vpop.f32.mrf.mxu0
    %1538 = vdwg.mxu0
    %v1539 = vadd.f32 %v1432, %v1536
    %s1540 = scalar_lea.vmem %s6, 448
    %v1541 = vld [vmem:[%s1540] sm:$0xff]
    %v1542 = vld [vmem:[%s1540 + $0x8] sm:$0xff]
    %v1543 = vld [vmem:[%s1540 + $0x10] sm:$0xff]
    %v1544 = vld [vmem:[%s1540 + $0x18] sm:$0xff]
    %v1545 = vld [vmem:[%s1540 + $0x20] sm:$0xff]
    %v1546 = vld [vmem:[%s1540 + $0x28] sm:$0xff]
    %v1547 = vld [vmem:[%s1540 + $0x30] sm:$0xff]
    %v1548 = vld [vmem:[%s1540 + $0x38] sm:$0xff]
    %v1549 = vld [vmem:[%s1540 + $0x40] sm:$0xff]
    %v1550 = vld [vmem:[%s1540 + $0x48] sm:$0xff]
    %v1551 = vld [vmem:[%s1540 + $0x50] sm:$0xff]
    %v1552 = vld [vmem:[%s1540 + $0x58] sm:$0xff]
    %v1553 = vld [vmem:[%s1540 + $0x60] sm:$0xff]
    %v1554 = vld [vmem:[%s1540 + $0x68] sm:$0xff]
    %v1555 = vld [vmem:[%s1540 + $0x70] sm:$0xff]
    %v1556 = vld [vmem:[%s1540 + $0x78] sm:$0xff]
    %v1557 = vld [vmem:[%s1540 + $0x80] sm:$0xff]
    %v1558 = vld [vmem:[%s1540 + $0x88] sm:$0xff]
    %v1559 = vld [vmem:[%s1540 + $0x90] sm:$0xff]
    %v1560 = vld [vmem:[%s1540 + $0x98] sm:$0xff]
    %v1561 = vld [vmem:[%s1540 + $0xa0] sm:$0xff]
    %v1562 = vld [vmem:[%s1540 + $0xa8] sm:$0xff]
    %v1563 = vld [vmem:[%s1540 + $0xb0] sm:$0xff]
    %v1564 = vld [vmem:[%s1540 + $0xb8] sm:$0xff]
    %v1565 = vld [vmem:[%s1540 + $0xc0] sm:$0xff]
    %v1566 = vld [vmem:[%s1540 + $0xc8] sm:$0xff]
    %v1567 = vld [vmem:[%s1540 + $0xd0] sm:$0xff]
    %v1568 = vld [vmem:[%s1540 + $0xd8] sm:$0xff]
    %v1569 = vrot.slane %v1306, 2
    %v1570 = vrot.slane %v1310, 1
    %v1571 = vsel %vm1355, %v1570, %v1569
    %v1572 = vrot.slane %v1307, 2
    %v1573 = vrot.slane %v1311, 1
    %v1574 = vsel %vm1355, %v1573, %v1572
    %v1576 = vsel %vm866, %v1574, 0
    %1578 = vmatprep.subr.mxu0 0.0
    %1579 = vmatpush1.msra.mxu0 %v1556
    %1580 = vmatprep.subr.mxu0 0.0
    %1581 = vmatpush1.msra.mxu0 %v1555
    %1582 = vmatprep.subr.mxu0 0.0
    %1583 = vmatpush1.msra.mxu0 %v1554
    %1584 = vmatprep.subr.mxu0 0.0
    %1585 = vmatpush1.msra.mxu0 %v1553
    %1586 = vmatprep.subr.mxu0 0.0
    %1587 = vmatpush1.msra.mxu0 %v1552
    %1588 = vmatprep.subr.mxu0 0.0
    %1589 = vmatpush1.msra.mxu0 %v1551
    %1590 = vmatprep.subr.mxu0 0.0
    %1591 = vmatpush1.msra.mxu0 %v1550
    %1592 = vmatprep.subr.mxu0 0.0
    %1593 = vmatpush1.msra.mxu0 %v1549
    %1594 = vmatprep.subr.mxu0 0.0
    %1595 = vmatpush1.msra.mxu0 %v1548
    %1596 = vmatprep.subr.mxu0 0.0
    %1597 = vmatpush1.msra.mxu0 %v1547
    %1598 = vmatprep.subr.mxu0 0.0
    %1599 = vmatpush1.msra.mxu0 %v1546
    %1600 = vmatprep.subr.mxu0 0.0
    %1601 = vmatpush1.msra.mxu0 %v1545
    %1602 = vmatprep.subr.mxu0 0.0
    %1603 = vmatpush1.msra.mxu0 %v1544
    %1604 = vmatprep.subr.mxu0 0.0
    %1605 = vmatpush1.msra.mxu0 %v1543
    %1606 = vmatprep.subr.mxu0 0.0
    %1607 = vmatpush1.msra.mxu0 %v1542
    %1608 = vmatprep.subr.mxu0 0.0
    %1609 = vmatpush1.msra.mxu0 %v1541
    %1610 = vmatprep.subr.mxu0 0.0
    %1611 = vmatpush2.msra.mxu0 0.0
    %1612 = vmatprep.subr.mxu0 0.0
    %1613 = vmatpush2.msra.mxu0 0.0
    %1614 = vmatprep.subr.mxu0 0.0
    %1615 = vmatpush2.msra.mxu0 0.0
    %1616 = vmatprep.subr.mxu0 0.0
    %1617 = vmatpush2.msra.mxu0 0.0
    %1618 = vmatprep.subr.mxu0 0.0
    %1619 = vmatpush2.msra.mxu0 %v1568
    %1620 = vmatprep.subr.mxu0 0.0
    %1621 = vmatpush2.msra.mxu0 %v1567
    %1622 = vmatprep.subr.mxu0 0.0
    %1623 = vmatpush2.msra.mxu0 %v1566
    %1624 = vmatprep.subr.mxu0 0.0
    %1625 = vmatpush2.msra.mxu0 %v1565
    %1626 = vmatprep.subr.mxu0 0.0
    %1627 = vmatpush2.msra.mxu0 %v1564
    %1628 = vmatprep.subr.mxu0 0.0
    %1629 = vmatpush2.msra.mxu0 %v1563
    %1630 = vmatprep.subr.mxu0 0.0
    %1631 = vmatpush2.msra.mxu0 %v1562
    %1632 = vmatprep.subr.mxu0 0.0
    %1633 = vmatpush2.msra.mxu0 %v1561
    %1634 = vmatprep.subr.mxu0 0.0
    %1635 = vmatpush2.msra.mxu0 %v1560
    %1636 = vmatprep.subr.mxu0 0.0
    %1637 = vmatpush2.msra.mxu0 %v1559
    %1638 = vmatprep.subr.mxu0 0.0
    %1639 = vmatpush2.msra.mxu0 %v1558
    %1640 = vmatprep.subr.mxu0 0.0
    %1641 = vmatpush2.msra.mxu0 %v1557
    %1642 = vmatprep.mubr.f32.mxu0 %v1576
    %1643 = vmatmul.mubr.f32.gmra.mxu0 %v1571
    %v1644 = vpop.f32.mrf.mxu0
    %v1645 = vadd.f32 0.0, %v1644
    %v1646 = vpop.f32.mrf.mxu0
    %1647 = vdwg.mxu0
    %v1648 = vadd.f32 %v1539, %v1645
    %s1649 = scalar_lea.vmem %s6, 672
    %v1650 = vld [vmem:[%s1649] sm:$0xff]
    %v1651 = vld [vmem:[%s1649 + $0x8] sm:$0xff]
    %v1652 = vld [vmem:[%s1649 + $0x10] sm:$0xff]
    %v1653 = vld [vmem:[%s1649 + $0x18] sm:$0xff]
    %v1654 = vld [vmem:[%s1649 + $0x20] sm:$0xff]
    %v1655 = vld [vmem:[%s1649 + $0x28] sm:$0xff]
    %v1656 = vld [vmem:[%s1649 + $0x30] sm:$0xff]
    %v1657 = vld [vmem:[%s1649 + $0x38] sm:$0xff]
    %v1658 = vld [vmem:[%s1649 + $0x40] sm:$0xff]
    %v1659 = vld [vmem:[%s1649 + $0x48] sm:$0xff]
    %v1660 = vld [vmem:[%s1649 + $0x50] sm:$0xff]
    %v1661 = vld [vmem:[%s1649 + $0x58] sm:$0xff]
    %v1662 = vld [vmem:[%s1649 + $0x60] sm:$0xff]
    %v1663 = vld [vmem:[%s1649 + $0x68] sm:$0xff]
    %v1664 = vld [vmem:[%s1649 + $0x70] sm:$0xff]
    %v1665 = vld [vmem:[%s1649 + $0x78] sm:$0xff]
    %v1666 = vld [vmem:[%s1649 + $0x80] sm:$0xff]
    %v1667 = vld [vmem:[%s1649 + $0x88] sm:$0xff]
    %v1668 = vld [vmem:[%s1649 + $0x90] sm:$0xff]
    %v1669 = vld [vmem:[%s1649 + $0x98] sm:$0xff]
    %v1670 = vld [vmem:[%s1649 + $0xa0] sm:$0xff]
    %v1671 = vld [vmem:[%s1649 + $0xa8] sm:$0xff]
    %v1672 = vld [vmem:[%s1649 + $0xb0] sm:$0xff]
    %v1673 = vld [vmem:[%s1649 + $0xb8] sm:$0xff]
    %v1674 = vld [vmem:[%s1649 + $0xc0] sm:$0xff]
    %v1675 = vld [vmem:[%s1649 + $0xc8] sm:$0xff]
    %v1676 = vld [vmem:[%s1649 + $0xd0] sm:$0xff]
    %v1677 = vld [vmem:[%s1649 + $0xd8] sm:$0xff]
    %v1678 = vrot.slane %v1306, 3
    %v1679 = vrot.slane %v1310, 2
    %v1680 = vsel %vm1355, %v1679, %v1678
    %v1681 = vrot.slane %v1307, 3
    %v1682 = vrot.slane %v1311, 2
    %v1683 = vsel %vm1355, %v1682, %v1681
    %v1685 = vsel %vm866, %v1683, 0
    %1687 = vmatprep.subr.mxu0 0.0
    %1688 = vmatpush1.msra.mxu0 %v1665
    %1689 = vmatprep.subr.mxu0 0.0
    %1690 = vmatpush1.msra.mxu0 %v1664
    %1691 = vmatprep.subr.mxu0 0.0
    %1692 = vmatpush1.msra.mxu0 %v1663
    %1693 = vmatprep.subr.mxu0 0.0
    %1694 = vmatpush1.msra.mxu0 %v1662
    %1695 = vmatprep.subr.mxu0 0.0
    %1696 = vmatpush1.msra.mxu0 %v1661
    %1697 = vmatprep.subr.mxu0 0.0
    %1698 = vmatpush1.msra.mxu0 %v1660
    %1699 = vmatprep.subr.mxu0 0.0
    %1700 = vmatpush1.msra.mxu0 %v1659
    %1701 = vmatprep.subr.mxu0 0.0
    %1702 = vmatpush1.msra.mxu0 %v1658
    %1703 = vmatprep.subr.mxu0 0.0
    %1704 = vmatpush1.msra.mxu0 %v1657
    %1705 = vmatprep.subr.mxu0 0.0
    %1706 = vmatpush1.msra.mxu0 %v1656
    %1707 = vmatprep.subr.mxu0 0.0
    %1708 = vmatpush1.msra.mxu0 %v1655
    %1709 = vmatprep.subr.mxu0 0.0
    %1710 = vmatpush1.msra.mxu0 %v1654
    %1711 = vmatprep.subr.mxu0 0.0
    %1712 = vmatpush1.msra.mxu0 %v1653
    %1713 = vmatprep.subr.mxu0 0.0
    %1714 = vmatpush1.msra.mxu0 %v1652
    %1715 = vmatprep.subr.mxu0 0.0
    %1716 = vmatpush1.msra.mxu0 %v1651
    %1717 = vmatprep.subr.mxu0 0.0
    %1718 = vmatpush1.msra.mxu0 %v1650
    %1719 = vmatprep.subr.mxu0 0.0
    %1720 = vmatpush2.msra.mxu0 0.0
    %1721 = vmatprep.subr.mxu0 0.0
    %1722 = vmatpush2.msra.mxu0 0.0
    %1723 = vmatprep.subr.mxu0 0.0
    %1724 = vmatpush2.msra.mxu0 0.0
    %1725 = vmatprep.subr.mxu0 0.0
    %1726 = vmatpush2.msra.mxu0 0.0
    %1727 = vmatprep.subr.mxu0 0.0
    %1728 = vmatpush2.msra.mxu0 %v1677
    %1729 = vmatprep.subr.mxu0 0.0
    %1730 = vmatpush2.msra.mxu0 %v1676
    %1731 = vmatprep.subr.mxu0 0.0
    %1732 = vmatpush2.msra.mxu0 %v1675
    %1733 = vmatprep.subr.mxu0 0.0
    %1734 = vmatpush2.msra.mxu0 %v1674
    %1735 = vmatprep.subr.mxu0 0.0
    %1736 = vmatpush2.msra.mxu0 %v1673
    %1737 = vmatprep.subr.mxu0 0.0
    %1738 = vmatpush2.msra.mxu0 %v1672
    %1739 = vmatprep.subr.mxu0 0.0
    %1740 = vmatpush2.msra.mxu0 %v1671
    %1741 = vmatprep.subr.mxu0 0.0
    %1742 = vmatpush2.msra.mxu0 %v1670
    %1743 = vmatprep.subr.mxu0 0.0
    %1744 = vmatpush2.msra.mxu0 %v1669
    %1745 = vmatprep.subr.mxu0 0.0
    %1746 = vmatpush2.msra.mxu0 %v1668
    %1747 = vmatprep.subr.mxu0 0.0
    %1748 = vmatpush2.msra.mxu0 %v1667
    %1749 = vmatprep.subr.mxu0 0.0
    %1750 = vmatpush2.msra.mxu0 %v1666
    %1751 = vmatprep.mubr.f32.mxu0 %v1685
    %1752 = vmatmul.mubr.f32.gmra.mxu0 %v1680
    %v1753 = vpop.f32.mrf.mxu0
    %v1754 = vadd.f32 0.0, %v1753
    %v1755 = vpop.f32.mrf.mxu0
    %1756 = vdwg.mxu0
    %v1757 = vadd.f32 %v1648, %v1754
    %s1758 = scalar_lea.vmem %s6, 896
    %v1759 = vld [vmem:[%s1758] sm:$0xff]
    %v1760 = vld [vmem:[%s1758 + $0x8] sm:$0xff]
    %v1761 = vld [vmem:[%s1758 + $0x10] sm:$0xff]
    %v1762 = vld [vmem:[%s1758 + $0x18] sm:$0xff]
    %v1763 = vld [vmem:[%s1758 + $0x20] sm:$0xff]
    %v1764 = vld [vmem:[%s1758 + $0x28] sm:$0xff]
    %v1765 = vld [vmem:[%s1758 + $0x30] sm:$0xff]
    %v1766 = vld [vmem:[%s1758 + $0x38] sm:$0xff]
    %v1767 = vld [vmem:[%s1758 + $0x40] sm:$0xff]
    %v1768 = vld [vmem:[%s1758 + $0x48] sm:$0xff]
    %v1769 = vld [vmem:[%s1758 + $0x50] sm:$0xff]
    %v1770 = vld [vmem:[%s1758 + $0x58] sm:$0xff]
    %v1771 = vld [vmem:[%s1758 + $0x60] sm:$0xff]
    %v1772 = vld [vmem:[%s1758 + $0x68] sm:$0xff]
    %v1773 = vld [vmem:[%s1758 + $0x70] sm:$0xff]
    %v1774 = vld [vmem:[%s1758 + $0x78] sm:$0xff]
    %v1775 = vld [vmem:[%s1758 + $0x80] sm:$0xff]
    %v1776 = vld [vmem:[%s1758 + $0x88] sm:$0xff]
    %v1777 = vld [vmem:[%s1758 + $0x90] sm:$0xff]
    %v1778 = vld [vmem:[%s1758 + $0x98] sm:$0xff]
    %v1779 = vld [vmem:[%s1758 + $0xa0] sm:$0xff]
    %v1780 = vld [vmem:[%s1758 + $0xa8] sm:$0xff]
    %v1781 = vld [vmem:[%s1758 + $0xb0] sm:$0xff]
    %v1782 = vld [vmem:[%s1758 + $0xb8] sm:$0xff]
    %v1783 = vld [vmem:[%s1758 + $0xc0] sm:$0xff]
    %v1784 = vld [vmem:[%s1758 + $0xc8] sm:$0xff]
    %v1785 = vld [vmem:[%s1758 + $0xd0] sm:$0xff]
    %v1786 = vld [vmem:[%s1758 + $0xd8] sm:$0xff]
    %v1787 = vrot.slane %v1306, 4
    %v1788 = vrot.slane %v1310, 3
    %v1789 = vsel %vm1355, %v1788, %v1787
    %v1790 = vrot.slane %v1307, 4
    %v1791 = vrot.slane %v1311, 3
    %v1792 = vsel %vm1355, %v1791, %v1790
    %v1794 = vsel %vm866, %v1792, 0
    %1796 = vmatprep.subr.mxu0 0.0
    %1797 = vmatpush1.msra.mxu0 %v1774
    %1798 = vmatprep.subr.mxu0 0.0
    %1799 = vmatpush1.msra.mxu0 %v1773
    %1800 = vmatprep.subr.mxu0 0.0
    %1801 = vmatpush1.msra.mxu0 %v1772
    %1802 = vmatprep.subr.mxu0 0.0
    %1803 = vmatpush1.msra.mxu0 %v1771
    %1804 = vmatprep.subr.mxu0 0.0
    %1805 = vmatpush1.msra.mxu0 %v1770
    %1806 = vmatprep.subr.mxu0 0.0
    %1807 = vmatpush1.msra.mxu0 %v1769
    %1808 = vmatprep.subr.mxu0 0.0
    %1809 = vmatpush1.msra.mxu0 %v1768
    %1810 = vmatprep.subr.mxu0 0.0
    %1811 = vmatpush1.msra.mxu0 %v1767
    %1812 = vmatprep.subr.mxu0 0.0
    %1813 = vmatpush1.msra.mxu0 %v1766
    %1814 = vmatprep.subr.mxu0 0.0
    %1815 = vmatpush1.msra.mxu0 %v1765
    %1816 = vmatprep.subr.mxu0 0.0
    %1817 = vmatpush1.msra.mxu0 %v1764
    %1818 = vmatprep.subr.mxu0 0.0
    %1819 = vmatpush1.msra.mxu0 %v1763
    %1820 = vmatprep.subr.mxu0 0.0
    %1821 = vmatpush1.msra.mxu0 %v1762
    %1822 = vmatprep.subr.mxu0 0.0
    %1823 = vmatpush1.msra.mxu0 %v1761
    %1824 = vmatprep.subr.mxu0 0.0
    %1825 = vmatpush1.msra.mxu0 %v1760
    %1826 = vmatprep.subr.mxu0 0.0
    %1827 = vmatpush1.msra.mxu0 %v1759
    %1828 = vmatprep.subr.mxu0 0.0
    %1829 = vmatpush2.msra.mxu0 0.0
    %1830 = vmatprep.subr.mxu0 0.0
    %1831 = vmatpush2.msra.mxu0 0.0
    %1832 = vmatprep.subr.mxu0 0.0
    %1833 = vmatpush2.msra.mxu0 0.0
    %1834 = vmatprep.subr.mxu0 0.0
    %1835 = vmatpush2.msra.mxu0 0.0
    %1836 = vmatprep.subr.mxu0 0.0
    %1837 = vmatpush2.msra.mxu0 %v1786
    %1838 = vmatprep.subr.mxu0 0.0
    %1839 = vmatpush2.msra.mxu0 %v1785
    %1840 = vmatprep.subr.mxu0 0.0
    %1841 = vmatpush2.msra.mxu0 %v1784
    %1842 = vmatprep.subr.mxu0 0.0
    %1843 = vmatpush2.msra.mxu0 %v1783
    %1844 = vmatprep.subr.mxu0 0.0
    %1845 = vmatpush2.msra.mxu0 %v1782
    %1846 = vmatprep.subr.mxu0 0.0
    %1847 = vmatpush2.msra.mxu0 %v1781
    %1848 = vmatprep.subr.mxu0 0.0
    %1849 = vmatpush2.msra.mxu0 %v1780
    %1850 = vmatprep.subr.mxu0 0.0
    %1851 = vmatpush2.msra.mxu0 %v1779
    %1852 = vmatprep.subr.mxu0 0.0
    %1853 = vmatpush2.msra.mxu0 %v1778
    %1854 = vmatprep.subr.mxu0 0.0
    %1855 = vmatpush2.msra.mxu0 %v1777
    %1856 = vmatprep.subr.mxu0 0.0
    %1857 = vmatpush2.msra.mxu0 %v1776
    %1858 = vmatprep.subr.mxu0 0.0
    %1859 = vmatpush2.msra.mxu0 %v1775
    %1860 = vmatprep.mubr.f32.mxu0 %v1794
    %1861 = vmatmul.mubr.f32.gmra.mxu0 %v1789
    %v1862 = vpop.f32.mrf.mxu0
    %v1863 = vadd.f32 0.0, %v1862
    %v1864 = vpop.f32.mrf.mxu0
    %1865 = vdwg.mxu0
    %v1866 = vadd.f32 %v1757, %v1863
    %s1867 = scalar_lea.vmem %s6, 1120
    %v1868 = vld [vmem:[%s1867] sm:$0xff]
    %v1869 = vld [vmem:[%s1867 + $0x8] sm:$0xff]
    %v1870 = vld [vmem:[%s1867 + $0x10] sm:$0xff]
    %v1871 = vld [vmem:[%s1867 + $0x18] sm:$0xff]
    %v1872 = vld [vmem:[%s1867 + $0x20] sm:$0xff]
    %v1873 = vld [vmem:[%s1867 + $0x28] sm:$0xff]
    %v1874 = vld [vmem:[%s1867 + $0x30] sm:$0xff]
    %v1875 = vld [vmem:[%s1867 + $0x38] sm:$0xff]
    %v1876 = vld [vmem:[%s1867 + $0x40] sm:$0xff]
    %v1877 = vld [vmem:[%s1867 + $0x48] sm:$0xff]
    %v1878 = vld [vmem:[%s1867 + $0x50] sm:$0xff]
    %v1879 = vld [vmem:[%s1867 + $0x58] sm:$0xff]
    %v1880 = vld [vmem:[%s1867 + $0x60] sm:$0xff]
    %v1881 = vld [vmem:[%s1867 + $0x68] sm:$0xff]
    %v1882 = vld [vmem:[%s1867 + $0x70] sm:$0xff]
    %v1883 = vld [vmem:[%s1867 + $0x78] sm:$0xff]
    %v1884 = vld [vmem:[%s1867 + $0x80] sm:$0xff]
    %v1885 = vld [vmem:[%s1867 + $0x88] sm:$0xff]
    %v1886 = vld [vmem:[%s1867 + $0x90] sm:$0xff]
    %v1887 = vld [vmem:[%s1867 + $0x98] sm:$0xff]
    %v1888 = vld [vmem:[%s1867 + $0xa0] sm:$0xff]
    %v1889 = vld [vmem:[%s1867 + $0xa8] sm:$0xff]
    %v1890 = vld [vmem:[%s1867 + $0xb0] sm:$0xff]
    %v1891 = vld [vmem:[%s1867 + $0xb8] sm:$0xff]
    %v1892 = vld [vmem:[%s1867 + $0xc0] sm:$0xff]
    %v1893 = vld [vmem:[%s1867 + $0xc8] sm:$0xff]
    %v1894 = vld [vmem:[%s1867 + $0xd0] sm:$0xff]
    %v1895 = vld [vmem:[%s1867 + $0xd8] sm:$0xff]
    %v1896 = vrot.slane %v1306, 5
    %v1897 = vrot.slane %v1310, 4
    %v1898 = vsel %vm1355, %v1897, %v1896
    %v1899 = vrot.slane %v1307, 5
    %v1900 = vrot.slane %v1311, 4
    %v1901 = vsel %vm1355, %v1900, %v1899
    %v1903 = vsel %vm866, %v1901, 0
    %1905 = vmatprep.subr.mxu0 0.0
    %1906 = vmatpush1.msra.mxu0 %v1883
    %1907 = vmatprep.subr.mxu0 0.0
    %1908 = vmatpush1.msra.mxu0 %v1882
    %1909 = vmatprep.subr.mxu0 0.0
    %1910 = vmatpush1.msra.mxu0 %v1881
    %1911 = vmatprep.subr.mxu0 0.0
    %1912 = vmatpush1.msra.mxu0 %v1880
    %1913 = vmatprep.subr.mxu0 0.0
    %1914 = vmatpush1.msra.mxu0 %v1879
    %1915 = vmatprep.subr.mxu0 0.0
    %1916 = vmatpush1.msra.mxu0 %v1878
    %1917 = vmatprep.subr.mxu0 0.0
    %1918 = vmatpush1.msra.mxu0 %v1877
    %1919 = vmatprep.subr.mxu0 0.0
    %1920 = vmatpush1.msra.mxu0 %v1876
    %1921 = vmatprep.subr.mxu0 0.0
    %1922 = vmatpush1.msra.mxu0 %v1875
    %1923 = vmatprep.subr.mxu0 0.0
    %1924 = vmatpush1.msra.mxu0 %v1874
    %1925 = vmatprep.subr.mxu0 0.0
    %1926 = vmatpush1.msra.mxu0 %v1873
    %1927 = vmatprep.subr.mxu0 0.0
    %1928 = vmatpush1.msra.mxu0 %v1872
    %1929 = vmatprep.subr.mxu0 0.0
    %1930 = vmatpush1.msra.mxu0 %v1871
    %1931 = vmatprep.subr.mxu0 0.0
    %1932 = vmatpush1.msra.mxu0 %v1870
    %1933 = vmatprep.subr.mxu0 0.0
    %1934 = vmatpush1.msra.mxu0 %v1869
    %1935 = vmatprep.subr.mxu0 0.0
    %1936 = vmatpush1.msra.mxu0 %v1868
    %1937 = vmatprep.subr.mxu0 0.0
    %1938 = vmatpush2.msra.mxu0 0.0
    %1939 = vmatprep.subr.mxu0 0.0
    %1940 = vmatpush2.msra.mxu0 0.0
    %1941 = vmatprep.subr.mxu0 0.0
    %1942 = vmatpush2.msra.mxu0 0.0
    %1943 = vmatprep.subr.mxu0 0.0
    %1944 = vmatpush2.msra.mxu0 0.0
    %1945 = vmatprep.subr.mxu0 0.0
    %1946 = vmatpush2.msra.mxu0 %v1895
    %1947 = vmatprep.subr.mxu0 0.0
    %1948 = vmatpush2.msra.mxu0 %v1894
    %1949 = vmatprep.subr.mxu0 0.0
    %1950 = vmatpush2.msra.mxu0 %v1893
    %1951 = vmatprep.subr.mxu0 0.0
    %1952 = vmatpush2.msra.mxu0 %v1892
    %1953 = vmatprep.subr.mxu0 0.0
    %1954 = vmatpush2.msra.mxu0 %v1891
    %1955 = vmatprep.subr.mxu0 0.0
    %1956 = vmatpush2.msra.mxu0 %v1890
    %1957 = vmatprep.subr.mxu0 0.0
    %1958 = vmatpush2.msra.mxu0 %v1889
    %1959 = vmatprep.subr.mxu0 0.0
    %1960 = vmatpush2.msra.mxu0 %v1888
    %1961 = vmatprep.subr.mxu0 0.0
    %1962 = vmatpush2.msra.mxu0 %v1887
    %1963 = vmatprep.subr.mxu0 0.0
    %1964 = vmatpush2.msra.mxu0 %v1886
    %1965 = vmatprep.subr.mxu0 0.0
    %1966 = vmatpush2.msra.mxu0 %v1885
    %1967 = vmatprep.subr.mxu0 0.0
    %1968 = vmatpush2.msra.mxu0 %v1884
    %1969 = vmatprep.mubr.f32.mxu0 %v1903
    %1970 = vmatmul.mubr.f32.gmra.mxu0 %v1898
    %v1971 = vpop.f32.mrf.mxu0
    %v1972 = vadd.f32 0.0, %v1971
    %v1973 = vpop.f32.mrf.mxu0
    %1974 = vdwg.mxu0
    %v1975 = vadd.f32 %v1866, %v1972
    %s1976 = scalar_lea.vmem %s6, 1344
    %v1977 = vld [vmem:[%s1976] sm:$0xff]
    %v1978 = vld [vmem:[%s1976 + $0x8] sm:$0xff]
    %v1979 = vld [vmem:[%s1976 + $0x10] sm:$0xff]
    %v1980 = vld [vmem:[%s1976 + $0x18] sm:$0xff]
    %v1981 = vld [vmem:[%s1976 + $0x20] sm:$0xff]
    %v1982 = vld [vmem:[%s1976 + $0x28] sm:$0xff]
    %v1983 = vld [vmem:[%s1976 + $0x30] sm:$0xff]
    %v1984 = vld [vmem:[%s1976 + $0x38] sm:$0xff]
    %v1985 = vld [vmem:[%s1976 + $0x40] sm:$0xff]
    %v1986 = vld [vmem:[%s1976 + $0x48] sm:$0xff]
    %v1987 = vld [vmem:[%s1976 + $0x50] sm:$0xff]
    %v1988 = vld [vmem:[%s1976 + $0x58] sm:$0xff]
    %v1989 = vld [vmem:[%s1976 + $0x60] sm:$0xff]
    %v1990 = vld [vmem:[%s1976 + $0x68] sm:$0xff]
    %v1991 = vld [vmem:[%s1976 + $0x70] sm:$0xff]
    %v1992 = vld [vmem:[%s1976 + $0x78] sm:$0xff]
    %v1993 = vld [vmem:[%s1976 + $0x80] sm:$0xff]
    %v1994 = vld [vmem:[%s1976 + $0x88] sm:$0xff]
    %v1995 = vld [vmem:[%s1976 + $0x90] sm:$0xff]
    %v1996 = vld [vmem:[%s1976 + $0x98] sm:$0xff]
    %v1997 = vld [vmem:[%s1976 + $0xa0] sm:$0xff]
    %v1998 = vld [vmem:[%s1976 + $0xa8] sm:$0xff]
    %v1999 = vld [vmem:[%s1976 + $0xb0] sm:$0xff]
    %v2000 = vld [vmem:[%s1976 + $0xb8] sm:$0xff]
    %v2001 = vld [vmem:[%s1976 + $0xc0] sm:$0xff]
    %v2002 = vld [vmem:[%s1976 + $0xc8] sm:$0xff]
    %v2003 = vld [vmem:[%s1976 + $0xd0] sm:$0xff]
    %v2004 = vld [vmem:[%s1976 + $0xd8] sm:$0xff]
    %v2005 = vrot.slane %v1306, 6
    %v2006 = vrot.slane %v1310, 5
    %v2007 = vsel %vm1355, %v2006, %v2005
    %v2008 = vrot.slane %v1307, 6
    %v2009 = vrot.slane %v1311, 5
    %v2010 = vsel %vm1355, %v2009, %v2008
    %v2012 = vsel %vm866, %v2010, 0
    %2014 = vmatprep.subr.mxu0 0.0
    %2015 = vmatpush1.msra.mxu0 %v1992
    %2016 = vmatprep.subr.mxu0 0.0
    %2017 = vmatpush1.msra.mxu0 %v1991
    %2018 = vmatprep.subr.mxu0 0.0
    %2019 = vmatpush1.msra.mxu0 %v1990
    %2020 = vmatprep.subr.mxu0 0.0
    %2021 = vmatpush1.msra.mxu0 %v1989
    %2022 = vmatprep.subr.mxu0 0.0
    %2023 = vmatpush1.msra.mxu0 %v1988
    %2024 = vmatprep.subr.mxu0 0.0
    %2025 = vmatpush1.msra.mxu0 %v1987
    %2026 = vmatprep.subr.mxu0 0.0
    %2027 = vmatpush1.msra.mxu0 %v1986
    %2028 = vmatprep.subr.mxu0 0.0
    %2029 = vmatpush1.msra.mxu0 %v1985
    %2030 = vmatprep.subr.mxu0 0.0
    %2031 = vmatpush1.msra.mxu0 %v1984
    %2032 = vmatprep.subr.mxu0 0.0
    %2033 = vmatpush1.msra.mxu0 %v1983
    %2034 = vmatprep.subr.mxu0 0.0
    %2035 = vmatpush1.msra.mxu0 %v1982
    %2036 = vmatprep.subr.mxu0 0.0
    %2037 = vmatpush1.msra.mxu0 %v1981
    %2038 = vmatprep.subr.mxu0 0.0
    %2039 = vmatpush1.msra.mxu0 %v1980
    %2040 = vmatprep.subr.mxu0 0.0
    %2041 = vmatpush1.msra.mxu0 %v1979
    %2042 = vmatprep.subr.mxu0 0.0
    %2043 = vmatpush1.msra.mxu0 %v1978
    %2044 = vmatprep.subr.mxu0 0.0
    %2045 = vmatpush1.msra.mxu0 %v1977
    %2046 = vmatprep.subr.mxu0 0.0
    %2047 = vmatpush2.msra.mxu0 0.0
    %2048 = vmatprep.subr.mxu0 0.0
    %2049 = vmatpush2.msra.mxu0 0.0
    %2050 = vmatprep.subr.mxu0 0.0
    %2051 = vmatpush2.msra.mxu0 0.0
    %2052 = vmatprep.subr.mxu0 0.0
    %2053 = vmatpush2.msra.mxu0 0.0
    %2054 = vmatprep.subr.mxu0 0.0
    %2055 = vmatpush2.msra.mxu0 %v2004
    %2056 = vmatprep.subr.mxu0 0.0
    %2057 = vmatpush2.msra.mxu0 %v2003
    %2058 = vmatprep.subr.mxu0 0.0
    %2059 = vmatpush2.msra.mxu0 %v2002
    %2060 = vmatprep.subr.mxu0 0.0
    %2061 = vmatpush2.msra.mxu0 %v2001
    %2062 = vmatprep.subr.mxu0 0.0
    %2063 = vmatpush2.msra.mxu0 %v2000
    %2064 = vmatprep.subr.mxu0 0.0
    %2065 = vmatpush2.msra.mxu0 %v1999
    %2066 = vmatprep.subr.mxu0 0.0
    %2067 = vmatpush2.msra.mxu0 %v1998
    %2068 = vmatprep.subr.mxu0 0.0
    %2069 = vmatpush2.msra.mxu0 %v1997
    %2070 = vmatprep.subr.mxu0 0.0
    %2071 = vmatpush2.msra.mxu0 %v1996
    %2072 = vmatprep.subr.mxu0 0.0
    %2073 = vmatpush2.msra.mxu0 %v1995
    %2074 = vmatprep.subr.mxu0 0.0
    %2075 = vmatpush2.msra.mxu0 %v1994
    %2076 = vmatprep.subr.mxu0 0.0
    %2077 = vmatpush2.msra.mxu0 %v1993
    %2078 = vmatprep.mubr.f32.mxu0 %v2012
    %2079 = vmatmul.mubr.f32.gmra.mxu0 %v2007
    %v2080 = vpop.f32.mrf.mxu0
    %v2081 = vadd.f32 0.0, %v2080
    %v2082 = vpop.f32.mrf.mxu0
    %2083 = vdwg.mxu0
    %v2084 = vadd.f32 %v1975, %v2081
    %s2085 = scalar_lea.vmem %s6, 1568
    %v2086 = vld [vmem:[%s2085] sm:$0xff]
    %v2087 = vld [vmem:[%s2085 + $0x8] sm:$0xff]
    %v2088 = vld [vmem:[%s2085 + $0x10] sm:$0xff]
    %v2089 = vld [vmem:[%s2085 + $0x18] sm:$0xff]
    %v2090 = vld [vmem:[%s2085 + $0x20] sm:$0xff]
    %v2091 = vld [vmem:[%s2085 + $0x28] sm:$0xff]
    %v2092 = vld [vmem:[%s2085 + $0x30] sm:$0xff]
    %v2093 = vld [vmem:[%s2085 + $0x38] sm:$0xff]
    %v2094 = vld [vmem:[%s2085 + $0x40] sm:$0xff]
    %v2095 = vld [vmem:[%s2085 + $0x48] sm:$0xff]
    %v2096 = vld [vmem:[%s2085 + $0x50] sm:$0xff]
    %v2097 = vld [vmem:[%s2085 + $0x58] sm:$0xff]
    %v2098 = vld [vmem:[%s2085 + $0x60] sm:$0xff]
    %v2099 = vld [vmem:[%s2085 + $0x68] sm:$0xff]
    %v2100 = vld [vmem:[%s2085 + $0x70] sm:$0xff]
    %v2101 = vld [vmem:[%s2085 + $0x78] sm:$0xff]
    %v2102 = vld [vmem:[%s2085 + $0x80] sm:$0xff]
    %v2103 = vld [vmem:[%s2085 + $0x88] sm:$0xff]
    %v2104 = vld [vmem:[%s2085 + $0x90] sm:$0xff]
    %v2105 = vld [vmem:[%s2085 + $0x98] sm:$0xff]
    %v2106 = vld [vmem:[%s2085 + $0xa0] sm:$0xff]
    %v2107 = vld [vmem:[%s2085 + $0xa8] sm:$0xff]
    %v2108 = vld [vmem:[%s2085 + $0xb0] sm:$0xff]
    %v2109 = vld [vmem:[%s2085 + $0xb8] sm:$0xff]
    %v2110 = vld [vmem:[%s2085 + $0xc0] sm:$0xff]
    %v2111 = vld [vmem:[%s2085 + $0xc8] sm:$0xff]
    %v2112 = vld [vmem:[%s2085 + $0xd0] sm:$0xff]
    %v2113 = vld [vmem:[%s2085 + $0xd8] sm:$0xff]
    %v2114 = vrot.slane %v1306, 7
    %v2115 = vrot.slane %v1310, 6
    %v2116 = vsel %vm1355, %v2115, %v2114
    %v2117 = vrot.slane %v1307, 7
    %v2118 = vrot.slane %v1311, 6
    %v2119 = vsel %vm1355, %v2118, %v2117
    %v2121 = vsel %vm866, %v2119, 0
    %2123 = vmatprep.subr.mxu0 0.0
    %2124 = vmatpush1.msra.mxu0 %v2101
    %2125 = vmatprep.subr.mxu0 0.0
    %2126 = vmatpush1.msra.mxu0 %v2100
    %2127 = vmatprep.subr.mxu0 0.0
    %2128 = vmatpush1.msra.mxu0 %v2099
    %2129 = vmatprep.subr.mxu0 0.0
    %2130 = vmatpush1.msra.mxu0 %v2098
    %2131 = vmatprep.subr.mxu0 0.0
    %2132 = vmatpush1.msra.mxu0 %v2097
    %2133 = vmatprep.subr.mxu0 0.0
    %2134 = vmatpush1.msra.mxu0 %v2096
    %2135 = vmatprep.subr.mxu0 0.0
    %2136 = vmatpush1.msra.mxu0 %v2095
    %2137 = vmatprep.subr.mxu0 0.0
    %2138 = vmatpush1.msra.mxu0 %v2094
    %2139 = vmatprep.subr.mxu0 0.0
    %2140 = vmatpush1.msra.mxu0 %v2093
    %2141 = vmatprep.subr.mxu0 0.0
    %2142 = vmatpush1.msra.mxu0 %v2092
    %2143 = vmatprep.subr.mxu0 0.0
    %2144 = vmatpush1.msra.mxu0 %v2091
    %2145 = vmatprep.subr.mxu0 0.0
    %2146 = vmatpush1.msra.mxu0 %v2090
    %2147 = vmatprep.subr.mxu0 0.0
    %2148 = vmatpush1.msra.mxu0 %v2089
    %2149 = vmatprep.subr.mxu0 0.0
    %2150 = vmatpush1.msra.mxu0 %v2088
    %2151 = vmatprep.subr.mxu0 0.0
    %2152 = vmatpush1.msra.mxu0 %v2087
    %2153 = vmatprep.subr.mxu0 0.0
    %2154 = vmatpush1.msra.mxu0 %v2086
    %2155 = vmatprep.subr.mxu0 0.0
    %2156 = vmatpush2.msra.mxu0 0.0
    %2157 = vmatprep.subr.mxu0 0.0
    %2158 = vmatpush2.msra.mxu0 0.0
    %2159 = vmatprep.subr.mxu0 0.0
    %2160 = vmatpush2.msra.mxu0 0.0
    %2161 = vmatprep.subr.mxu0 0.0
    %2162 = vmatpush2.msra.mxu0 0.0
    %2163 = vmatprep.subr.mxu0 0.0
    %2164 = vmatpush2.msra.mxu0 %v2113
    %2165 = vmatprep.subr.mxu0 0.0
    %2166 = vmatpush2.msra.mxu0 %v2112
    %2167 = vmatprep.subr.mxu0 0.0
    %2168 = vmatpush2.msra.mxu0 %v2111
    %2169 = vmatprep.subr.mxu0 0.0
    %2170 = vmatpush2.msra.mxu0 %v2110
    %2171 = vmatprep.subr.mxu0 0.0
    %2172 = vmatpush2.msra.mxu0 %v2109
    %2173 = vmatprep.subr.mxu0 0.0
    %2174 = vmatpush2.msra.mxu0 %v2108
    %2175 = vmatprep.subr.mxu0 0.0
    %2176 = vmatpush2.msra.mxu0 %v2107
    %2177 = vmatprep.subr.mxu0 0.0
    %2178 = vmatpush2.msra.mxu0 %v2106
    %2179 = vmatprep.subr.mxu0 0.0
    %2180 = vmatpush2.msra.mxu0 %v2105
    %2181 = vmatprep.subr.mxu0 0.0
    %2182 = vmatpush2.msra.mxu0 %v2104
    %2183 = vmatprep.subr.mxu0 0.0
    %2184 = vmatpush2.msra.mxu0 %v2103
    %2185 = vmatprep.subr.mxu0 0.0
    %2186 = vmatpush2.msra.mxu0 %v2102
    %2187 = vmatprep.mubr.f32.mxu0 %v2121
    %2188 = vmatmul.mubr.f32.gmra.mxu0 %v2116
    %v2189 = vpop.f32.mrf.mxu0
    %v2190 = vadd.f32 0.0, %v2189
    %v2191 = vpop.f32.mrf.mxu0
    %2192 = vdwg.mxu0
    %v2193 = vadd.f32 %v2084, %v2190
    %s2194 = scalar_lea.vmem %s6, 1792
    %v2195 = vld [vmem:[%s2194] sm:$0xff]
    %v2196 = vld [vmem:[%s2194 + $0x8] sm:$0xff]
    %v2197 = vld [vmem:[%s2194 + $0x10] sm:$0xff]
    %v2198 = vld [vmem:[%s2194 + $0x18] sm:$0xff]
    %v2199 = vld [vmem:[%s2194 + $0x20] sm:$0xff]
    %v2200 = vld [vmem:[%s2194 + $0x28] sm:$0xff]
    %v2201 = vld [vmem:[%s2194 + $0x30] sm:$0xff]
    %v2202 = vld [vmem:[%s2194 + $0x38] sm:$0xff]
    %v2203 = vld [vmem:[%s2194 + $0x40] sm:$0xff]
    %v2204 = vld [vmem:[%s2194 + $0x48] sm:$0xff]
    %v2205 = vld [vmem:[%s2194 + $0x50] sm:$0xff]
    %v2206 = vld [vmem:[%s2194 + $0x58] sm:$0xff]
    %v2207 = vld [vmem:[%s2194 + $0x60] sm:$0xff]
    %v2208 = vld [vmem:[%s2194 + $0x68] sm:$0xff]
    %v2209 = vld [vmem:[%s2194 + $0x70] sm:$0xff]
    %v2210 = vld [vmem:[%s2194 + $0x78] sm:$0xff]
    %v2211 = vld [vmem:[%s2194 + $0x80] sm:$0xff]
    %v2212 = vld [vmem:[%s2194 + $0x88] sm:$0xff]
    %v2213 = vld [vmem:[%s2194 + $0x90] sm:$0xff]
    %v2214 = vld [vmem:[%s2194 + $0x98] sm:$0xff]
    %v2215 = vld [vmem:[%s2194 + $0xa0] sm:$0xff]
    %v2216 = vld [vmem:[%s2194 + $0xa8] sm:$0xff]
    %v2217 = vld [vmem:[%s2194 + $0xb0] sm:$0xff]
    %v2218 = vld [vmem:[%s2194 + $0xb8] sm:$0xff]
    %v2219 = vld [vmem:[%s2194 + $0xc0] sm:$0xff]
    %v2220 = vld [vmem:[%s2194 + $0xc8] sm:$0xff]
    %v2221 = vld [vmem:[%s2194 + $0xd0] sm:$0xff]
    %v2222 = vld [vmem:[%s2194 + $0xd8] sm:$0xff]
    %v2227 = vrot.slane %v1312, 7
    %v2228 = vsel %vm1355, %v2227, %v1308
    %v2229 = vrot.slane %v1313, 7
    %v2230 = vsel %vm1355, %v2229, %v1309
    %v2232 = vsel %vm866, %v2230, 0
    %2234 = vmatprep.subr.mxu0 0.0
    %2235 = vmatpush1.msra.mxu0 %v2210
    %2236 = vmatprep.subr.mxu0 0.0
    %2237 = vmatpush1.msra.mxu0 %v2209
    %2238 = vmatprep.subr.mxu0 0.0
    %2239 = vmatpush1.msra.mxu0 %v2208
    %2240 = vmatprep.subr.mxu0 0.0
    %2241 = vmatpush1.msra.mxu0 %v2207
    %2242 = vmatprep.subr.mxu0 0.0
    %2243 = vmatpush1.msra.mxu0 %v2206
    %2244 = vmatprep.subr.mxu0 0.0
    %2245 = vmatpush1.msra.mxu0 %v2205
    %2246 = vmatprep.subr.mxu0 0.0
    %2247 = vmatpush1.msra.mxu0 %v2204
    %2248 = vmatprep.subr.mxu0 0.0
    %2249 = vmatpush1.msra.mxu0 %v2203
    %2250 = vmatprep.subr.mxu0 0.0
    %2251 = vmatpush1.msra.mxu0 %v2202
    %2252 = vmatprep.subr.mxu0 0.0
    %2253 = vmatpush1.msra.mxu0 %v2201
    %2254 = vmatprep.subr.mxu0 0.0
    %2255 = vmatpush1.msra.mxu0 %v2200
    %2256 = vmatprep.subr.mxu0 0.0
    %2257 = vmatpush1.msra.mxu0 %v2199
    %2258 = vmatprep.subr.mxu0 0.0
    %2259 = vmatpush1.msra.mxu0 %v2198
    %2260 = vmatprep.subr.mxu0 0.0
    %2261 = vmatpush1.msra.mxu0 %v2197
    %2262 = vmatprep.subr.mxu0 0.0
    %2263 = vmatpush1.msra.mxu0 %v2196
    %2264 = vmatprep.subr.mxu0 0.0
    %2265 = vmatpush1.msra.mxu0 %v2195
    %2266 = vmatprep.subr.mxu0 0.0
    %2267 = vmatpush2.msra.mxu0 0.0
    %2268 = vmatprep.subr.mxu0 0.0
    %2269 = vmatpush2.msra.mxu0 0.0
    %2270 = vmatprep.subr.mxu0 0.0
    %2271 = vmatpush2.msra.mxu0 0.0
    %2272 = vmatprep.subr.mxu0 0.0
    %2273 = vmatpush2.msra.mxu0 0.0
    %2274 = vmatprep.subr.mxu0 0.0
    %2275 = vmatpush2.msra.mxu0 %v2222
    %2276 = vmatprep.subr.mxu0 0.0
    %2277 = vmatpush2.msra.mxu0 %v2221
    %2278 = vmatprep.subr.mxu0 0.0
    %2279 = vmatpush2.msra.mxu0 %v2220
    %2280 = vmatprep.subr.mxu0 0.0
    %2281 = vmatpush2.msra.mxu0 %v2219
    %2282 = vmatprep.subr.mxu0 0.0
    %2283 = vmatpush2.msra.mxu0 %v2218
    %2284 = vmatprep.subr.mxu0 0.0
    %2285 = vmatpush2.msra.mxu0 %v2217
    %2286 = vmatprep.subr.mxu0 0.0
    %2287 = vmatpush2.msra.mxu0 %v2216
    %2288 = vmatprep.subr.mxu0 0.0
    %2289 = vmatpush2.msra.mxu0 %v2215
    %2290 = vmatprep.subr.mxu0 0.0
    %2291 = vmatpush2.msra.mxu0 %v2214
    %2292 = vmatprep.subr.mxu0 0.0
    %2293 = vmatpush2.msra.mxu0 %v2213
    %2294 = vmatprep.subr.mxu0 0.0
    %2295 = vmatpush2.msra.mxu0 %v2212
    %2296 = vmatprep.subr.mxu0 0.0
    %2297 = vmatpush2.msra.mxu0 %v2211
    %2298 = vmatprep.mubr.f32.mxu0 %v2232
    %2299 = vmatmul.mubr.f32.gmra.mxu0 %v2228
    %v2300 = vpop.f32.mrf.mxu0
    %v2301 = vadd.f32 0.0, %v2300
    %v2302 = vpop.f32.mrf.mxu0
    %2303 = vdwg.mxu0
    %v2304 = vadd.f32 %v2193, %v2301
    %s2305 = scalar_lea.vmem %s6, 2016
    %v2306 = vld [vmem:[%s2305] sm:$0xff]
    %v2307 = vld [vmem:[%s2305 + $0x8] sm:$0xff]
    %v2308 = vld [vmem:[%s2305 + $0x10] sm:$0xff]
    %v2309 = vld [vmem:[%s2305 + $0x18] sm:$0xff]
    %v2310 = vld [vmem:[%s2305 + $0x20] sm:$0xff]
    %v2311 = vld [vmem:[%s2305 + $0x28] sm:$0xff]
    %v2312 = vld [vmem:[%s2305 + $0x30] sm:$0xff]
    %v2313 = vld [vmem:[%s2305 + $0x38] sm:$0xff]
    %v2314 = vld [vmem:[%s2305 + $0x40] sm:$0xff]
    %v2315 = vld [vmem:[%s2305 + $0x48] sm:$0xff]
    %v2316 = vld [vmem:[%s2305 + $0x50] sm:$0xff]
    %v2317 = vld [vmem:[%s2305 + $0x58] sm:$0xff]
    %v2318 = vld [vmem:[%s2305 + $0x60] sm:$0xff]
    %v2319 = vld [vmem:[%s2305 + $0x68] sm:$0xff]
    %v2320 = vld [vmem:[%s2305 + $0x70] sm:$0xff]
    %v2321 = vld [vmem:[%s2305 + $0x78] sm:$0xff]
    %v2322 = vld [vmem:[%s2305 + $0x80] sm:$0xff]
    %v2323 = vld [vmem:[%s2305 + $0x88] sm:$0xff]
    %v2324 = vld [vmem:[%s2305 + $0x90] sm:$0xff]
    %v2325 = vld [vmem:[%s2305 + $0x98] sm:$0xff]
    %v2326 = vld [vmem:[%s2305 + $0xa0] sm:$0xff]
    %v2327 = vld [vmem:[%s2305 + $0xa8] sm:$0xff]
    %v2328 = vld [vmem:[%s2305 + $0xb0] sm:$0xff]
    %v2329 = vld [vmem:[%s2305 + $0xb8] sm:$0xff]
    %v2330 = vld [vmem:[%s2305 + $0xc0] sm:$0xff]
    %v2331 = vld [vmem:[%s2305 + $0xc8] sm:$0xff]
    %v2332 = vld [vmem:[%s2305 + $0xd0] sm:$0xff]
    %v2333 = vld [vmem:[%s2305 + $0xd8] sm:$0xff]
    %v2334 = vrot.slane %v1308, 1
    %v2335 = vsel %vm1355, %v1312, %v2334
    %v2336 = vrot.slane %v1309, 1
    %v2337 = vsel %vm1355, %v1313, %v2336
    %v2339 = vsel %vm866, %v2337, 0
    %2341 = vmatprep.subr.mxu0 0.0
    %2342 = vmatpush1.msra.mxu0 %v2321
    %2343 = vmatprep.subr.mxu0 0.0
    %2344 = vmatpush1.msra.mxu0 %v2320
    %2345 = vmatprep.subr.mxu0 0.0
    %2346 = vmatpush1.msra.mxu0 %v2319
    %2347 = vmatprep.subr.mxu0 0.0
    %2348 = vmatpush1.msra.mxu0 %v2318
    %2349 = vmatprep.subr.mxu0 0.0
    %2350 = vmatpush1.msra.mxu0 %v2317
    %2351 = vmatprep.subr.mxu0 0.0
    %2352 = vmatpush1.msra.mxu0 %v2316
    %2353 = vmatprep.subr.mxu0 0.0
    %2354 = vmatpush1.msra.mxu0 %v2315
    %2355 = vmatprep.subr.mxu0 0.0
    %2356 = vmatpush1.msra.mxu0 %v2314
    %2357 = vmatprep.subr.mxu0 0.0
    %2358 = vmatpush1.msra.mxu0 %v2313
    %2359 = vmatprep.subr.mxu0 0.0
    %2360 = vmatpush1.msra.mxu0 %v2312
    %2361 = vmatprep.subr.mxu0 0.0
    %2362 = vmatpush1.msra.mxu0 %v2311
    %2363 = vmatprep.subr.mxu0 0.0
    %2364 = vmatpush1.msra.mxu0 %v2310
    %2365 = vmatprep.subr.mxu0 0.0
    %2366 = vmatpush1.msra.mxu0 %v2309
    %2367 = vmatprep.subr.mxu0 0.0
    %2368 = vmatpush1.msra.mxu0 %v2308
    %2369 = vmatprep.subr.mxu0 0.0
    %2370 = vmatpush1.msra.mxu0 %v2307
    %2371 = vmatprep.subr.mxu0 0.0
    %2372 = vmatpush1.msra.mxu0 %v2306
    %2373 = vmatprep.subr.mxu0 0.0
    %2374 = vmatpush2.msra.mxu0 0.0
    %2375 = vmatprep.subr.mxu0 0.0
    %2376 = vmatpush2.msra.mxu0 0.0
    %2377 = vmatprep.subr.mxu0 0.0
    %2378 = vmatpush2.msra.mxu0 0.0
    %2379 = vmatprep.subr.mxu0 0.0
    %2380 = vmatpush2.msra.mxu0 0.0
    %2381 = vmatprep.subr.mxu0 0.0
    %2382 = vmatpush2.msra.mxu0 %v2333
    %2383 = vmatprep.subr.mxu0 0.0
    %2384 = vmatpush2.msra.mxu0 %v2332
    %2385 = vmatprep.subr.mxu0 0.0
    %2386 = vmatpush2.msra.mxu0 %v2331
    %2387 = vmatprep.subr.mxu0 0.0
    %2388 = vmatpush2.msra.mxu0 %v2330
    %2389 = vmatprep.subr.mxu0 0.0
    %2390 = vmatpush2.msra.mxu0 %v2329
    %2391 = vmatprep.subr.mxu0 0.0
    %2392 = vmatpush2.msra.mxu0 %v2328
    %2393 = vmatprep.subr.mxu0 0.0
    %2394 = vmatpush2.msra.mxu0 %v2327
    %2395 = vmatprep.subr.mxu0 0.0
    %2396 = vmatpush2.msra.mxu0 %v2326
    %2397 = vmatprep.subr.mxu0 0.0
    %2398 = vmatpush2.msra.mxu0 %v2325
    %2399 = vmatprep.subr.mxu0 0.0
    %2400 = vmatpush2.msra.mxu0 %v2324
    %2401 = vmatprep.subr.mxu0 0.0
    %2402 = vmatpush2.msra.mxu0 %v2323
    %2403 = vmatprep.subr.mxu0 0.0
    %2404 = vmatpush2.msra.mxu0 %v2322
    %2405 = vmatprep.mubr.f32.mxu0 %v2339
    %2406 = vmatmul.mubr.f32.gmra.mxu0 %v2335
    %v2407 = vpop.f32.mrf.mxu0
    %v2408 = vadd.f32 0.0, %v2407
    %v2409 = vpop.f32.mrf.mxu0
    %2410 = vdwg.mxu0
    %v2411 = vadd.f32 %v2304, %v2408
    %s2412 = scalar_lea.vmem %s6, 2240
    %v2413 = vld [vmem:[%s2412] sm:$0xff]
    %v2414 = vld [vmem:[%s2412 + $0x8] sm:$0xff]
    %v2415 = vld [vmem:[%s2412 + $0x10] sm:$0xff]
    %v2416 = vld [vmem:[%s2412 + $0x18] sm:$0xff]
    %v2417 = vld [vmem:[%s2412 + $0x20] sm:$0xff]
    %v2418 = vld [vmem:[%s2412 + $0x28] sm:$0xff]
    %v2419 = vld [vmem:[%s2412 + $0x30] sm:$0xff]
    %v2420 = vld [vmem:[%s2412 + $0x38] sm:$0xff]
    %v2421 = vld [vmem:[%s2412 + $0x40] sm:$0xff]
    %v2422 = vld [vmem:[%s2412 + $0x48] sm:$0xff]
    %v2423 = vld [vmem:[%s2412 + $0x50] sm:$0xff]
    %v2424 = vld [vmem:[%s2412 + $0x58] sm:$0xff]
    %v2425 = vld [vmem:[%s2412 + $0x60] sm:$0xff]
    %v2426 = vld [vmem:[%s2412 + $0x68] sm:$0xff]
    %v2427 = vld [vmem:[%s2412 + $0x70] sm:$0xff]
    %v2428 = vld [vmem:[%s2412 + $0x78] sm:$0xff]
    %v2429 = vld [vmem:[%s2412 + $0x80] sm:$0xff]
    %v2430 = vld [vmem:[%s2412 + $0x88] sm:$0xff]
    %v2431 = vld [vmem:[%s2412 + $0x90] sm:$0xff]
    %v2432 = vld [vmem:[%s2412 + $0x98] sm:$0xff]
    %v2433 = vld [vmem:[%s2412 + $0xa0] sm:$0xff]
    %v2434 = vld [vmem:[%s2412 + $0xa8] sm:$0xff]
    %v2435 = vld [vmem:[%s2412 + $0xb0] sm:$0xff]
    %v2436 = vld [vmem:[%s2412 + $0xb8] sm:$0xff]
    %v2437 = vld [vmem:[%s2412 + $0xc0] sm:$0xff]
    %v2438 = vld [vmem:[%s2412 + $0xc8] sm:$0xff]
    %v2439 = vld [vmem:[%s2412 + $0xd0] sm:$0xff]
    %v2440 = vld [vmem:[%s2412 + $0xd8] sm:$0xff]
    %v2441 = vrot.slane %v1308, 2
    %v2442 = vrot.slane %v1312, 1
    %v2443 = vsel %vm1355, %v2442, %v2441
    %v2444 = vrot.slane %v1309, 2
    %v2445 = vrot.slane %v1313, 1
    %v2446 = vsel %vm1355, %v2445, %v2444
    %v2448 = vsel %vm866, %v2446, 0
    %2450 = vmatprep.subr.mxu0 0.0
    %2451 = vmatpush1.msra.mxu0 %v2428
    %2452 = vmatprep.subr.mxu0 0.0
    %2453 = vmatpush1.msra.mxu0 %v2427
    %2454 = vmatprep.subr.mxu0 0.0
    %2455 = vmatpush1.msra.mxu0 %v2426
    %2456 = vmatprep.subr.mxu0 0.0
    %2457 = vmatpush1.msra.mxu0 %v2425
    %2458 = vmatprep.subr.mxu0 0.0
    %2459 = vmatpush1.msra.mxu0 %v2424
    %2460 = vmatprep.subr.mxu0 0.0
    %2461 = vmatpush1.msra.mxu0 %v2423
    %2462 = vmatprep.subr.mxu0 0.0
    %2463 = vmatpush1.msra.mxu0 %v2422
    %2464 = vmatprep.subr.mxu0 0.0
    %2465 = vmatpush1.msra.mxu0 %v2421
    %2466 = vmatprep.subr.mxu0 0.0
    %2467 = vmatpush1.msra.mxu0 %v2420
    %2468 = vmatprep.subr.mxu0 0.0
    %2469 = vmatpush1.msra.mxu0 %v2419
    %2470 = vmatprep.subr.mxu0 0.0
    %2471 = vmatpush1.msra.mxu0 %v2418
    %2472 = vmatprep.subr.mxu0 0.0
    %2473 = vmatpush1.msra.mxu0 %v2417
    %2474 = vmatprep.subr.mxu0 0.0
    %2475 = vmatpush1.msra.mxu0 %v2416
    %2476 = vmatprep.subr.mxu0 0.0
    %2477 = vmatpush1.msra.mxu0 %v2415
    %2478 = vmatprep.subr.mxu0 0.0
    %2479 = vmatpush1.msra.mxu0 %v2414
    %2480 = vmatprep.subr.mxu0 0.0
    %2481 = vmatpush1.msra.mxu0 %v2413
    %2482 = vmatprep.subr.mxu0 0.0
    %2483 = vmatpush2.msra.mxu0 0.0
    %2484 = vmatprep.subr.mxu0 0.0
    %2485 = vmatpush2.msra.mxu0 0.0
    %2486 = vmatprep.subr.mxu0 0.0
    %2487 = vmatpush2.msra.mxu0 0.0
    %2488 = vmatprep.subr.mxu0 0.0
    %2489 = vmatpush2.msra.mxu0 0.0
    %2490 = vmatprep.subr.mxu0 0.0
    %2491 = vmatpush2.msra.mxu0 %v2440
    %2492 = vmatprep.subr.mxu0 0.0
    %2493 = vmatpush2.msra.mxu0 %v2439
    %2494 = vmatprep.subr.mxu0 0.0
    %2495 = vmatpush2.msra.mxu0 %v2438
    %2496 = vmatprep.subr.mxu0 0.0
    %2497 = vmatpush2.msra.mxu0 %v2437
    %2498 = vmatprep.subr.mxu0 0.0
    %2499 = vmatpush2.msra.mxu0 %v2436
    %2500 = vmatprep.subr.mxu0 0.0
    %2501 = vmatpush2.msra.mxu0 %v2435
    %2502 = vmatprep.subr.mxu0 0.0
    %2503 = vmatpush2.msra.mxu0 %v2434
    %2504 = vmatprep.subr.mxu0 0.0
    %2505 = vmatpush2.msra.mxu0 %v2433
    %2506 = vmatprep.subr.mxu0 0.0
    %2507 = vmatpush2.msra.mxu0 %v2432
    %2508 = vmatprep.subr.mxu0 0.0
    %2509 = vmatpush2.msra.mxu0 %v2431
    %2510 = vmatprep.subr.mxu0 0.0
    %2511 = vmatpush2.msra.mxu0 %v2430
    %2512 = vmatprep.subr.mxu0 0.0
    %2513 = vmatpush2.msra.mxu0 %v2429
    %2514 = vmatprep.mubr.f32.mxu0 %v2448
    %2515 = vmatmul.mubr.f32.gmra.mxu0 %v2443
    %v2516 = vpop.f32.mrf.mxu0
    %v2517 = vadd.f32 0.0, %v2516
    %v2518 = vpop.f32.mrf.mxu0
    %2519 = vdwg.mxu0
    %v2520 = vadd.f32 %v2411, %v2517
    %s2521 = scalar_lea.vmem %s6, 2464
    %v2522 = vld [vmem:[%s2521] sm:$0xff]
    %v2523 = vld [vmem:[%s2521 + $0x8] sm:$0xff]
    %v2524 = vld [vmem:[%s2521 + $0x10] sm:$0xff]
    %v2525 = vld [vmem:[%s2521 + $0x18] sm:$0xff]
    %v2526 = vld [vmem:[%s2521 + $0x20] sm:$0xff]
    %v2527 = vld [vmem:[%s2521 + $0x28] sm:$0xff]
    %v2528 = vld [vmem:[%s2521 + $0x30] sm:$0xff]
    %v2529 = vld [vmem:[%s2521 + $0x38] sm:$0xff]
    %v2530 = vld [vmem:[%s2521 + $0x40] sm:$0xff]
    %v2531 = vld [vmem:[%s2521 + $0x48] sm:$0xff]
    %v2532 = vld [vmem:[%s2521 + $0x50] sm:$0xff]
    %v2533 = vld [vmem:[%s2521 + $0x58] sm:$0xff]
    %v2534 = vld [vmem:[%s2521 + $0x60] sm:$0xff]
    %v2535 = vld [vmem:[%s2521 + $0x68] sm:$0xff]
    %v2536 = vld [vmem:[%s2521 + $0x70] sm:$0xff]
    %v2537 = vld [vmem:[%s2521 + $0x78] sm:$0xff]
    %v2538 = vld [vmem:[%s2521 + $0x80] sm:$0xff]
    %v2539 = vld [vmem:[%s2521 + $0x88] sm:$0xff]
    %v2540 = vld [vmem:[%s2521 + $0x90] sm:$0xff]
    %v2541 = vld [vmem:[%s2521 + $0x98] sm:$0xff]
    %v2542 = vld [vmem:[%s2521 + $0xa0] sm:$0xff]
    %v2543 = vld [vmem:[%s2521 + $0xa8] sm:$0xff]
    %v2544 = vld [vmem:[%s2521 + $0xb0] sm:$0xff]
    %v2545 = vld [vmem:[%s2521 + $0xb8] sm:$0xff]
    %v2546 = vld [vmem:[%s2521 + $0xc0] sm:$0xff]
    %v2547 = vld [vmem:[%s2521 + $0xc8] sm:$0xff]
    %v2548 = vld [vmem:[%s2521 + $0xd0] sm:$0xff]
    %v2549 = vld [vmem:[%s2521 + $0xd8] sm:$0xff]
    %v2550 = vrot.slane %v1308, 3
    %v2551 = vrot.slane %v1312, 2
    %v2552 = vsel %vm1355, %v2551, %v2550
    %v2553 = vrot.slane %v1309, 3
    %v2554 = vrot.slane %v1313, 2
    %v2555 = vsel %vm1355, %v2554, %v2553
    %v2557 = vsel %vm866, %v2555, 0
    %2559 = vmatprep.subr.mxu0 0.0
    %2560 = vmatpush1.msra.mxu0 %v2537
    %2561 = vmatprep.subr.mxu0 0.0
    %2562 = vmatpush1.msra.mxu0 %v2536
    %2563 = vmatprep.subr.mxu0 0.0
    %2564 = vmatpush1.msra.mxu0 %v2535
    %2565 = vmatprep.subr.mxu0 0.0
    %2566 = vmatpush1.msra.mxu0 %v2534
    %2567 = vmatprep.subr.mxu0 0.0
    %2568 = vmatpush1.msra.mxu0 %v2533
    %2569 = vmatprep.subr.mxu0 0.0
    %2570 = vmatpush1.msra.mxu0 %v2532
    %2571 = vmatprep.subr.mxu0 0.0
    %2572 = vmatpush1.msra.mxu0 %v2531
    %2573 = vmatprep.subr.mxu0 0.0
    %2574 = vmatpush1.msra.mxu0 %v2530
    %2575 = vmatprep.subr.mxu0 0.0
    %2576 = vmatpush1.msra.mxu0 %v2529
    %2577 = vmatprep.subr.mxu0 0.0
    %2578 = vmatpush1.msra.mxu0 %v2528
    %2579 = vmatprep.subr.mxu0 0.0
    %2580 = vmatpush1.msra.mxu0 %v2527
    %2581 = vmatprep.subr.mxu0 0.0
    %2582 = vmatpush1.msra.mxu0 %v2526
    %2583 = vmatprep.subr.mxu0 0.0
    %2584 = vmatpush1.msra.mxu0 %v2525
    %2585 = vmatprep.subr.mxu0 0.0
    %2586 = vmatpush1.msra.mxu0 %v2524
    %2587 = vmatprep.subr.mxu0 0.0
    %2588 = vmatpush1.msra.mxu0 %v2523
    %2589 = vmatprep.subr.mxu0 0.0
    %2590 = vmatpush1.msra.mxu0 %v2522
    %2591 = vmatprep.subr.mxu0 0.0
    %2592 = vmatpush2.msra.mxu0 0.0
    %2593 = vmatprep.subr.mxu0 0.0
    %2594 = vmatpush2.msra.mxu0 0.0
    %2595 = vmatprep.subr.mxu0 0.0
    %2596 = vmatpush2.msra.mxu0 0.0
    %2597 = vmatprep.subr.mxu0 0.0
    %2598 = vmatpush2.msra.mxu0 0.0
    %2599 = vmatprep.subr.mxu0 0.0
    %2600 = vmatpush2.msra.mxu0 %v2549
    %2601 = vmatprep.subr.mxu0 0.0
    %2602 = vmatpush2.msra.mxu0 %v2548
    %2603 = vmatprep.subr.mxu0 0.0
    %2604 = vmatpush2.msra.mxu0 %v2547
    %2605 = vmatprep.subr.mxu0 0.0
    %2606 = vmatpush2.msra.mxu0 %v2546
    %2607 = vmatprep.subr.mxu0 0.0
    %2608 = vmatpush2.msra.mxu0 %v2545
    %2609 = vmatprep.subr.mxu0 0.0
    %2610 = vmatpush2.msra.mxu0 %v2544
    %2611 = vmatprep.subr.mxu0 0.0
    %2612 = vmatpush2.msra.mxu0 %v2543
    %2613 = vmatprep.subr.mxu0 0.0
    %2614 = vmatpush2.msra.mxu0 %v2542
    %2615 = vmatprep.subr.mxu0 0.0
    %2616 = vmatpush2.msra.mxu0 %v2541
    %2617 = vmatprep.subr.mxu0 0.0
    %2618 = vmatpush2.msra.mxu0 %v2540
    %2619 = vmatprep.subr.mxu0 0.0
    %2620 = vmatpush2.msra.mxu0 %v2539
    %2621 = vmatprep.subr.mxu0 0.0
    %2622 = vmatpush2.msra.mxu0 %v2538
    %2623 = vmatprep.mubr.f32.mxu0 %v2557
    %2624 = vmatmul.mubr.f32.gmra.mxu0 %v2552
    %v2625 = vpop.f32.mrf.mxu0
    %v2626 = vadd.f32 0.0, %v2625
    %v2627 = vpop.f32.mrf.mxu0
    %2628 = vdwg.mxu0
    %v2629 = vadd.f32 %v2520, %v2626
    %s2630 = scalar_lea.vmem %s6, 2688
    %v2631 = vld [vmem:[%s2630] sm:$0xff]
    %v2632 = vld [vmem:[%s2630 + $0x8] sm:$0xff]
    %v2633 = vld [vmem:[%s2630 + $0x10] sm:$0xff]
    %v2634 = vld [vmem:[%s2630 + $0x18] sm:$0xff]
    %v2635 = vld [vmem:[%s2630 + $0x20] sm:$0xff]
    %v2636 = vld [vmem:[%s2630 + $0x28] sm:$0xff]
    %v2637 = vld [vmem:[%s2630 + $0x30] sm:$0xff]
    %v2638 = vld [vmem:[%s2630 + $0x38] sm:$0xff]
    %v2639 = vld [vmem:[%s2630 + $0x40] sm:$0xff]
    %v2640 = vld [vmem:[%s2630 + $0x48] sm:$0xff]
    %v2641 = vld [vmem:[%s2630 + $0x50] sm:$0xff]
    %v2642 = vld [vmem:[%s2630 + $0x58] sm:$0xff]
    %v2643 = vld [vmem:[%s2630 + $0x60] sm:$0xff]
    %v2644 = vld [vmem:[%s2630 + $0x68] sm:$0xff]
    %v2645 = vld [vmem:[%s2630 + $0x70] sm:$0xff]
    %v2646 = vld [vmem:[%s2630 + $0x78] sm:$0xff]
    %v2647 = vld [vmem:[%s2630 + $0x80] sm:$0xff]
    %v2648 = vld [vmem:[%s2630 + $0x88] sm:$0xff]
    %v2649 = vld [vmem:[%s2630 + $0x90] sm:$0xff]
    %v2650 = vld [vmem:[%s2630 + $0x98] sm:$0xff]
    %v2651 = vld [vmem:[%s2630 + $0xa0] sm:$0xff]
    %v2652 = vld [vmem:[%s2630 + $0xa8] sm:$0xff]
    %v2653 = vld [vmem:[%s2630 + $0xb0] sm:$0xff]
    %v2654 = vld [vmem:[%s2630 + $0xb8] sm:$0xff]
    %v2655 = vld [vmem:[%s2630 + $0xc0] sm:$0xff]
    %v2656 = vld [vmem:[%s2630 + $0xc8] sm:$0xff]
    %v2657 = vld [vmem:[%s2630 + $0xd0] sm:$0xff]
    %v2658 = vld [vmem:[%s2630 + $0xd8] sm:$0xff]
    %v2659 = vrot.slane %v1308, 4
    %v2660 = vrot.slane %v1312, 3
    %v2661 = vsel %vm1355, %v2660, %v2659
    %v2662 = vrot.slane %v1309, 4
    %v2663 = vrot.slane %v1313, 3
    %v2664 = vsel %vm1355, %v2663, %v2662
    %v2666 = vsel %vm866, %v2664, 0
    %2668 = vmatprep.subr.mxu0 0.0
    %2669 = vmatpush1.msra.mxu0 %v2646
    %2670 = vmatprep.subr.mxu0 0.0
    %2671 = vmatpush1.msra.mxu0 %v2645
    %2672 = vmatprep.subr.mxu0 0.0
    %2673 = vmatpush1.msra.mxu0 %v2644
    %2674 = vmatprep.subr.mxu0 0.0
    %2675 = vmatpush1.msra.mxu0 %v2643
    %2676 = vmatprep.subr.mxu0 0.0
    %2677 = vmatpush1.msra.mxu0 %v2642
    %2678 = vmatprep.subr.mxu0 0.0
    %2679 = vmatpush1.msra.mxu0 %v2641
    %2680 = vmatprep.subr.mxu0 0.0
    %2681 = vmatpush1.msra.mxu0 %v2640
    %2682 = vmatprep.subr.mxu0 0.0
    %2683 = vmatpush1.msra.mxu0 %v2639
    %2684 = vmatprep.subr.mxu0 0.0
    %2685 = vmatpush1.msra.mxu0 %v2638
    %2686 = vmatprep.subr.mxu0 0.0
    %2687 = vmatpush1.msra.mxu0 %v2637
    %2688 = vmatprep.subr.mxu0 0.0
    %2689 = vmatpush1.msra.mxu0 %v2636
    %2690 = vmatprep.subr.mxu0 0.0
    %2691 = vmatpush1.msra.mxu0 %v2635
    %2692 = vmatprep.subr.mxu0 0.0
    %2693 = vmatpush1.msra.mxu0 %v2634
    %2694 = vmatprep.subr.mxu0 0.0
    %2695 = vmatpush1.msra.mxu0 %v2633
    %2696 = vmatprep.subr.mxu0 0.0
    %2697 = vmatpush1.msra.mxu0 %v2632
    %2698 = vmatprep.subr.mxu0 0.0
    %2699 = vmatpush1.msra.mxu0 %v2631
    %2700 = vmatprep.subr.mxu0 0.0
    %2701 = vmatpush2.msra.mxu0 0.0
    %2702 = vmatprep.subr.mxu0 0.0
    %2703 = vmatpush2.msra.mxu0 0.0
    %2704 = vmatprep.subr.mxu0 0.0
    %2705 = vmatpush2.msra.mxu0 0.0
    %2706 = vmatprep.subr.mxu0 0.0
    %2707 = vmatpush2.msra.mxu0 0.0
    %2708 = vmatprep.subr.mxu0 0.0
    %2709 = vmatpush2.msra.mxu0 %v2658
    %2710 = vmatprep.subr.mxu0 0.0
    %2711 = vmatpush2.msra.mxu0 %v2657
    %2712 = vmatprep.subr.mxu0 0.0
    %2713 = vmatpush2.msra.mxu0 %v2656
    %2714 = vmatprep.subr.mxu0 0.0
    %2715 = vmatpush2.msra.mxu0 %v2655
    %2716 = vmatprep.subr.mxu0 0.0
    %2717 = vmatpush2.msra.mxu0 %v2654
    %2718 = vmatprep.subr.mxu0 0.0
    %2719 = vmatpush2.msra.mxu0 %v2653
    %2720 = vmatprep.subr.mxu0 0.0
    %2721 = vmatpush2.msra.mxu0 %v2652
    %2722 = vmatprep.subr.mxu0 0.0
    %2723 = vmatpush2.msra.mxu0 %v2651
    %2724 = vmatprep.subr.mxu0 0.0
    %2725 = vmatpush2.msra.mxu0 %v2650
    %2726 = vmatprep.subr.mxu0 0.0
    %2727 = vmatpush2.msra.mxu0 %v2649
    %2728 = vmatprep.subr.mxu0 0.0
    %2729 = vmatpush2.msra.mxu0 %v2648
    %2730 = vmatprep.subr.mxu0 0.0
    %2731 = vmatpush2.msra.mxu0 %v2647
    %2732 = vmatprep.mubr.f32.mxu0 %v2666
    %2733 = vmatmul.mubr.f32.gmra.mxu0 %v2661
    %v2734 = vpop.f32.mrf.mxu0
    %v2735 = vadd.f32 0.0, %v2734
    %v2736 = vpop.f32.mrf.mxu0
    %2737 = vdwg.mxu0
    %v2738 = vadd.f32 %v2629, %v2735
    %s2739 = scalar_lea.vmem %s6, 2912
    %v2740 = vld [vmem:[%s2739] sm:$0xff]
    %v2741 = vld [vmem:[%s2739 + $0x8] sm:$0xff]
    %v2742 = vld [vmem:[%s2739 + $0x10] sm:$0xff]
    %v2743 = vld [vmem:[%s2739 + $0x18] sm:$0xff]
    %v2744 = vld [vmem:[%s2739 + $0x20] sm:$0xff]
    %v2745 = vld [vmem:[%s2739 + $0x28] sm:$0xff]
    %v2746 = vld [vmem:[%s2739 + $0x30] sm:$0xff]
    %v2747 = vld [vmem:[%s2739 + $0x38] sm:$0xff]
    %v2748 = vld [vmem:[%s2739 + $0x40] sm:$0xff]
    %v2749 = vld [vmem:[%s2739 + $0x48] sm:$0xff]
    %v2750 = vld [vmem:[%s2739 + $0x50] sm:$0xff]
    %v2751 = vld [vmem:[%s2739 + $0x58] sm:$0xff]
    %v2752 = vld [vmem:[%s2739 + $0x60] sm:$0xff]
    %v2753 = vld [vmem:[%s2739 + $0x68] sm:$0xff]
    %v2754 = vld [vmem:[%s2739 + $0x70] sm:$0xff]
    %v2755 = vld [vmem:[%s2739 + $0x78] sm:$0xff]
    %v2756 = vld [vmem:[%s2739 + $0x80] sm:$0xff]
    %v2757 = vld [vmem:[%s2739 + $0x88] sm:$0xff]
    %v2758 = vld [vmem:[%s2739 + $0x90] sm:$0xff]
    %v2759 = vld [vmem:[%s2739 + $0x98] sm:$0xff]
    %v2760 = vld [vmem:[%s2739 + $0xa0] sm:$0xff]
    %v2761 = vld [vmem:[%s2739 + $0xa8] sm:$0xff]
    %v2762 = vld [vmem:[%s2739 + $0xb0] sm:$0xff]
    %v2763 = vld [vmem:[%s2739 + $0xb8] sm:$0xff]
    %v2764 = vld [vmem:[%s2739 + $0xc0] sm:$0xff]
    %v2765 = vld [vmem:[%s2739 + $0xc8] sm:$0xff]
    %v2766 = vld [vmem:[%s2739 + $0xd0] sm:$0xff]
    %v2767 = vld [vmem:[%s2739 + $0xd8] sm:$0xff]
    %v2768 = vrot.slane %v1308, 5
    %v2769 = vrot.slane %v1312, 4
    %v2770 = vsel %vm1355, %v2769, %v2768
    %v2771 = vrot.slane %v1309, 5
    %v2772 = vrot.slane %v1313, 4
    %v2773 = vsel %vm1355, %v2772, %v2771
    %v2775 = vsel %vm866, %v2773, 0
    %2777 = vmatprep.subr.mxu0 0.0
    %2778 = vmatpush1.msra.mxu0 %v2755
    %2779 = vmatprep.subr.mxu0 0.0
    %2780 = vmatpush1.msra.mxu0 %v2754
    %2781 = vmatprep.subr.mxu0 0.0
    %2782 = vmatpush1.msra.mxu0 %v2753
    %2783 = vmatprep.subr.mxu0 0.0
    %2784 = vmatpush1.msra.mxu0 %v2752
    %2785 = vmatprep.subr.mxu0 0.0
    %2786 = vmatpush1.msra.mxu0 %v2751
    %2787 = vmatprep.subr.mxu0 0.0
    %2788 = vmatpush1.msra.mxu0 %v2750
    %2789 = vmatprep.subr.mxu0 0.0
    %2790 = vmatpush1.msra.mxu0 %v2749
    %2791 = vmatprep.subr.mxu0 0.0
    %2792 = vmatpush1.msra.mxu0 %v2748
    %2793 = vmatprep.subr.mxu0 0.0
    %2794 = vmatpush1.msra.mxu0 %v2747
    %2795 = vmatprep.subr.mxu0 0.0
    %2796 = vmatpush1.msra.mxu0 %v2746
    %2797 = vmatprep.subr.mxu0 0.0
    %2798 = vmatpush1.msra.mxu0 %v2745
    %2799 = vmatprep.subr.mxu0 0.0
    %2800 = vmatpush1.msra.mxu0 %v2744
    %2801 = vmatprep.subr.mxu0 0.0
    %2802 = vmatpush1.msra.mxu0 %v2743
    %2803 = vmatprep.subr.mxu0 0.0
    %2804 = vmatpush1.msra.mxu0 %v2742
    %2805 = vmatprep.subr.mxu0 0.0
    %2806 = vmatpush1.msra.mxu0 %v2741
    %2807 = vmatprep.subr.mxu0 0.0
    %2808 = vmatpush1.msra.mxu0 %v2740
    %2809 = vmatprep.subr.mxu0 0.0
    %2810 = vmatpush2.msra.mxu0 0.0
    %2811 = vmatprep.subr.mxu0 0.0
    %2812 = vmatpush2.msra.mxu0 0.0
    %2813 = vmatprep.subr.mxu0 0.0
    %2814 = vmatpush2.msra.mxu0 0.0
    %2815 = vmatprep.subr.mxu0 0.0
    %2816 = vmatpush2.msra.mxu0 0.0
    %2817 = vmatprep.subr.mxu0 0.0
    %2818 = vmatpush2.msra.mxu0 %v2767
    %2819 = vmatprep.subr.mxu0 0.0
    %2820 = vmatpush2.msra.mxu0 %v2766
    %2821 = vmatprep.subr.mxu0 0.0
    %2822 = vmatpush2.msra.mxu0 %v2765
    %2823 = vmatprep.subr.mxu0 0.0
    %2824 = vmatpush2.msra.mxu0 %v2764
    %2825 = vmatprep.subr.mxu0 0.0
    %2826 = vmatpush2.msra.mxu0 %v2763
    %2827 = vmatprep.subr.mxu0 0.0
    %2828 = vmatpush2.msra.mxu0 %v2762
    %2829 = vmatprep.subr.mxu0 0.0
    %2830 = vmatpush2.msra.mxu0 %v2761
    %2831 = vmatprep.subr.mxu0 0.0
    %2832 = vmatpush2.msra.mxu0 %v2760
    %2833 = vmatprep.subr.mxu0 0.0
    %2834 = vmatpush2.msra.mxu0 %v2759
    %2835 = vmatprep.subr.mxu0 0.0
    %2836 = vmatpush2.msra.mxu0 %v2758
    %2837 = vmatprep.subr.mxu0 0.0
    %2838 = vmatpush2.msra.mxu0 %v2757
    %2839 = vmatprep.subr.mxu0 0.0
    %2840 = vmatpush2.msra.mxu0 %v2756
    %2841 = vmatprep.mubr.f32.mxu0 %v2775
    %2842 = vmatmul.mubr.f32.gmra.mxu0 %v2770
    %v2843 = vpop.f32.mrf.mxu0
    %v2844 = vadd.f32 0.0, %v2843
    %v2845 = vpop.f32.mrf.mxu0
    %2846 = vdwg.mxu0
    %v2847 = vadd.f32 %v2738, %v2844
    %vm2848 = vcmask 74752
    %2849 = vst.msk [vmem:[#allocation2] sm:$0x3] %vm2848, %v2847
    // Predicated region
    $region34: #{testnet_forward.1} parent=1 // pred_check
      _
    $region35: #{testnet_forward.1} parent=1 // pred_check_branch
      %2851 = sbr.rel (0) target = $region37
    $region36: #{testnet_forward.1} parent=1 // pred_region
      %s2853 = ssub.s32 32, 32
      %2854 = vsyncadd [#allocation3], %s2853
      %s2856 = sshll.u32 [#allocation2], 4
      %s2857 = int_to_ptr.vmem [resolvable:$true] %s2856
      %2859 = dma.vmem_to_hbm [thread:$0]  %s2857, 32, %s8, [#allocation3]
    $region37: #{testnet_forward.1} parent=1 // pred_fallthru
      _
    // Predicated region
    $region38: #{testnet_forward.1} parent=1 // pred_check
      _
    $region39: #{testnet_forward.1} parent=1 // pred_check_branch
      %2861 = sbr.rel (0) target = $region41
    $region40: #{testnet_forward.1} parent=1 // pred_region
      %2862 = dma.done [#allocation3], 32
    $region41: #{testnet_forward.1} parent=1 // pred_fallthru
      _
    %2863 = vsyncpa [#allocation3], 1

</llo_original>
